<compile_context>
chip_gen: v5e
topology: v5e:2x2
jax: 0.10.0
libtpu: 0.0.40
codegen_flags: <defaults>
</compile_context>

<pallas_src>
import functools

import jax
import jax.numpy as jnp
from jax.experimental import pallas as pl
from jax.experimental.pallas import tpu as pltpu


def _resnet_block_kernel(x_ref, w_ref, b_ref, m_ref, o_ref, *,
                         H, W, C, K, res_num, dilation, n_conv):
    """Fused ResnetBlock forward for a block of `bb` batch elements.

    x_ref : (bb, C, L)             input activations, L = H*W (lane-dense)
    w_ref : (res_num*2, C, K*K*C)  weights; w[rj, co, (kh*K+kw)*C + ci]
    b_ref : (res_num*2, C, 1)      biases
    m_ref : (2, K*K, 1, L)         0/1 float boundary masks per conv and tap
    o_ref : (bb, C, L)             output activations
    """
    L = H * W
    KK = K * K
    x0 = x_ref[...].astype(jnp.float32)                     # (bb, C, L)

    # Hoist every parameter / mask load out of the res_num loop: each value is
    # pulled from VMEM exactly once and reused by all residual steps.
    w_all = [w_ref[i] for i in range(res_num * n_conv)]          # (C, K*K*C)
    b_all = [b_ref[i][None] for i in range(res_num * n_conv)]    # (1, C, 1)
    m_all = [[m_ref[j, t] for t in range(KK)]                    # (1, L)
             for j in range(n_conv)]

    def conv(a, rj, j, d):
        """'same' conv with dilation d on a (bb, C, L) slab -> f32 (bb, C, L)."""
        p = (K - 1) // 2 * d
        wmat = w_all[rj]                                     # (C, K*K*C)
        y = None
        for kh in range(K):
            for kw in range(K):
                t = kh * K + kw
                s = (kh * d - p) * W + (kw * d - p)
                if s == 0:
                    xs = a                                   # center tap, no mask
                else:
                    sp = s % L
                    # static lane rotation: xs[..., i] = a[..., (i + s) mod L]
                    xs = jnp.concatenate([a[..., sp:], a[..., :sp]], axis=-1)
                    # zero taps that fell off the H/W border (or wrapped)
                    xs = xs * m_all[j][t]                    # (bb,C,L)*(1,L)
                # channel mixing as VPU broadcast-FMA (C is tiny; skip the MXU)
                for ci in range(C):
                    c0 = t * C + ci
                    col = wmat[:, c0:c0 + 1][None]           # (1, C, 1)
                    term = col * xs[:, ci:ci + 1, :]         # (bb, C, L)
                    y = term if y is None else y + term
        return y + b_all[rj]                                 # + (1, C, 1)

    act = x0
    for r in range(res_num):
        h = conv(act, n_conv * r, 0, dilation[0])
        h = jnp.maximum(h, 0.1 * h)                          # LeakyReLU(0.1)
        h = conv(h, n_conv * r + 1, 1, dilation[1])
        act = act + h                                        # inner residual
    if res_num > 1:
        act = act + x0                                       # outer residual
    o_ref[...] = act.astype(o_ref.dtype)


def _build_masks(H, W, K, dilation):
    """0/1 float masks (n_conv, K*K, 1, H*W): valid (in-bounds) tap positions."""
    hh = jnp.arange(H, dtype=jnp.int32)[:, None]
    ww = jnp.arange(W, dtype=jnp.int32)[None, :]
    per_conv = []
    for d in dilation:
        p = (K - 1) // 2 * d
        taps = []
        for kh in range(K):
            for kw in range(K):
                dh = kh * d - p
                dw = kw * d - p
                m = ((hh + dh >= 0) & (hh + dh < H) &
                     (ww + dw >= 0) & (ww + dw < W))
                taps.append(m.reshape(1, H * W))
            # end kw
        per_conv.append(jnp.stack(taps))                     # (K*K, 1, L)
    return jnp.stack(per_conv).astype(jnp.float32)           # (n_conv, K*K, 1, L)


@functools.partial(jax.jit, static_argnums=(2, 3, 4, 5))
def resnet_block_forward(x_nchw, params, kernel_size, dilation, res_num,
                         batch_block):
    """Pallas TPU implementation of ResnetBlock.forward.

    x_nchw      : (N, C, H, W) float32
    params      : list of res_num tuples (w1, b1, w2, b2); w in PyTorch OIHW
                  layout (C, C, K, K), b of shape (C,).
    batch_block : images processed per grid step (must divide N).  Use N for
                  minimal overhead on v5e/v6e; use N//2 on v7x to shard the
                  batch across its 2 TensorCores.
    """
    N, C, H, W = x_nchw.shape
    K = kernel_size
    L = H * W
    n_conv = len(dilation)
    bb = batch_block
    assert N % bb == 0, "batch_block must divide N"

    # Pack weights lane-friendly: (res_num*2, C_out, K*K*C_in) with
    #   w_pack[rj, co, (kh*K + kw)*C + ci] = w[co, ci, kh, kw]
    w_list, b_list = [], []
    for (w1, b1, w2, b2) in params:
        for w, b in ((w1, b1), (w2, b2)):
            w_list.append(jnp.transpose(w, (0, 2, 3, 1)).reshape(C, K * K * C))
            b_list.append(jnp.reshape(b, (C, 1)))
    w_pack = jnp.stack(w_list).astype(jnp.float32)           # (res_num*2, C, K*K*C)
    b_pack = jnp.stack(b_list).astype(jnp.float32)           # (res_num*2, C, 1)
    masks = _build_masks(H, W, K, dilation)                   # (n_conv, K*K, 1, L)

    x_flat = x_nchw.reshape(N, C, L).astype(jnp.float32)      # free reshape, no pad

    kern = functools.partial(_resnet_block_kernel, H=H, W=W, C=C, K=K,
                             res_num=res_num, dilation=tuple(dilation),
                             n_conv=n_conv)
    out_flat = pl.pallas_call(
        kern,
        out_shape=jax.ShapeDtypeStruct((N, C, L), jnp.float32),
        grid_spec=pltpu.PrefetchScalarGridSpec(
            num_scalar_prefetch=0,
            grid=(N // bb,),
            in_specs=[
                pl.BlockSpec((bb, C, L), lambda n: (n, 0, 0)),
                pl.BlockSpec((res_num * n_conv, C, K * K * C),
                             lambda n: (0, 0, 0)),
                pl.BlockSpec((res_num * n_conv, C, 1), lambda n: (0, 0, 0)),
                pl.BlockSpec((n_conv, K * K, 1, L), lambda n: (0, 0, 0, 0)),
            ],
            out_specs=pl.BlockSpec((bb, C, L), lambda n: (n, 0, 0)),
        ),
        compiler_params=pltpu.CompilerParams(
            dimension_semantics=("parallel",)),
    )(x_flat, w_pack, b_pack, masks)
    return out_flat.reshape(N, C, H, W)


# ---------------------------------------------------------------------------
# Pure-JAX reference (correctness check only)
# ---------------------------------------------------------------------------
def _ref_forward(x_nchw, params, kernel_size, dilation, res_num):
    K = kernel_size
    x = x_nchw.astype(jnp.float32)

    def conv(x, w, b, d):
        p = (K - 1) // 2 * d
        y = jax.lax.conv_general_dilated(
            x, w, window_strides=(1, 1), padding=[(p, p), (p, p)],
            rhs_dilation=(d, d),
            dimension_numbers=("NCHW", "OIHW", "NCHW"))
        return y + b.reshape(1, -1, 1, 1)

    if res_num > 1:
        temp = x
    for i in range(res_num):
        w1, b1, w2, b2 = params[i]
        h = conv(x, w1, b1, dilation[0])
        h = jnp.where(h >= 0, h, 0.1 * h)
        h = conv(h, w2, b2, dilation[1])
        x = x + h
    if res_num > 1:
        x = x + temp
    return x


def _init_params(key, C, K, res_num):
    """Deterministic init mimicking nn.Conv2d default (uniform +-1/sqrt(fan_in))."""
    params = []
    bound = 1.0 / (C * K * K) ** 0.5
    for _ in range(res_num):
        k1, k2, k3, k4, key = jax.random.split(key, 5)
        w1 = jax.random.uniform(k1, (C, C, K, K), jnp.float32, -bound, bound)
        w2 = jax.random.uniform(k2, (C, C, K, K), jnp.float32, -bound, bound)
        b1 = jax.random.uniform(k3, (C,), jnp.float32, -bound, bound)
        b2 = jax.random.uniform(k4, (C,), jnp.float32, -bound, bound)
        params.append((w1, b1, w2, b2))
    return params


if __name__ == "__main__":
    # Module config: ResnetBlock(in_channels=4, kernel_size=3, dilation=(1, 2),
    #                            bias=True, res_num=2)
    N, C, H, W = 2, 4, 16, 16
    K = 3
    dilation = (1, 2)
    res_num = 2

    key = jax.random.PRNGKey(0)
    kx, kp = jax.random.split(key)
    x = jax.random.normal(kx, (N, C, H, W), jnp.float32)
    params = _init_params(kp, C, K, res_num)

    out = resnet_block_forward(x, params, K, dilation, res_num, N)
    out = jax.block_until_ready(out)

    ref = _ref_forward(x, params, K, dilation, res_num)
    assert out.shape == (N, C, H, W)
    assert jnp.allclose(out, ref, rtol=1e-4, atol=1e-4), "mismatch vs reference"

    print("KERNEL_OK")
</pallas_src>

<mosaic_0001>
module attributes {stable_mosaic.version = 11 : i64} {
  func.func @_resnet_block_kernel(%arg0: i32, %arg1: memref<2x4x256xf32, #tpu.memory_space<vmem>>, %arg2: memref<4x4x36xf32, #tpu.memory_space<vmem>>, %arg3: memref<4x4x1xf32, #tpu.memory_space<vmem>>, %arg4: memref<2x9x1x256xf32, #tpu.memory_space<vmem>>, %arg5: memref<2x4x256xf32, #tpu.memory_space<vmem>>) attributes {dimension_semantics = [#tpu.dimension_semantics<parallel>], iteration_bounds = array<i64: 1>, scalar_prefetch = 0 : i64, scratch_operands = 0 : i64, tpu.core_type = #tpu.core_type<tc>, window_params = [{transform_indices = @transform_0, window_bounds = array<i64: 2, 4, 256>}, {pipeline_mode = #tpu.pipeline_mode<synchronous>, transform_indices = @transform_1, window_bounds = array<i64: 4, 4, 36>}, {pipeline_mode = #tpu.pipeline_mode<synchronous>, transform_indices = @transform_2, window_bounds = array<i64: 4, 4, 1>}, {pipeline_mode = #tpu.pipeline_mode<synchronous>, transform_indices = @transform_3, window_bounds = array<i64: 2, 9, 1, 256>}, {transform_indices = @transform_4, window_bounds = array<i64: 2, 4, 256>}]} {
    %c0 = arith.constant 0 : index
    %c0_0 = arith.constant 0 : index
    %c0_1 = arith.constant 0 : index
    %0 = vector.load %arg1[%c0, %c0_0, %c0_1] : memref<2x4x256xf32, #tpu.memory_space<vmem>>, vector<2x4x256xf32>
    %c0_2 = arith.constant 0 : index
    %c0_3 = arith.constant 0 : index
    %c0_4 = arith.constant 0 : index
    %1 = vector.load %arg2[%c0_2, %c0_3, %c0_4] : memref<4x4x36xf32, #tpu.memory_space<vmem>>, vector<1x4x36xf32>
    %2 = vector.shape_cast %1 : vector<1x4x36xf32> to vector<4x36xf32>
    %c1 = arith.constant 1 : index
    %c0_5 = arith.constant 0 : index
    %c0_6 = arith.constant 0 : index
    %3 = vector.load %arg2[%c1, %c0_5, %c0_6] : memref<4x4x36xf32, #tpu.memory_space<vmem>>, vector<1x4x36xf32>
    %4 = vector.shape_cast %3 : vector<1x4x36xf32> to vector<4x36xf32>
    %c2 = arith.constant 2 : index
    %c0_7 = arith.constant 0 : index
    %c0_8 = arith.constant 0 : index
    %5 = vector.load %arg2[%c2, %c0_7, %c0_8] : memref<4x4x36xf32, #tpu.memory_space<vmem>>, vector<1x4x36xf32>
    %6 = vector.shape_cast %5 : vector<1x4x36xf32> to vector<4x36xf32>
    %c3 = arith.constant 3 : index
    %c0_9 = arith.constant 0 : index
    %c0_10 = arith.constant 0 : index
    %7 = vector.load %arg2[%c3, %c0_9, %c0_10] : memref<4x4x36xf32, #tpu.memory_space<vmem>>, vector<1x4x36xf32>
    %8 = vector.shape_cast %7 : vector<1x4x36xf32> to vector<4x36xf32>
    %c0_11 = arith.constant 0 : index
    %c0_12 = arith.constant 0 : index
    %c0_13 = arith.constant 0 : index
    %9 = vector.load %arg3[%c0_11, %c0_12, %c0_13] : memref<4x4x1xf32, #tpu.memory_space<vmem>>, vector<1x4x1xf32>
    %10 = vector.shape_cast %9 : vector<1x4x1xf32> to vector<4x1xf32>
    %11 = vector.shape_cast %10 : vector<4x1xf32> to vector<1x4x1xf32>
    %c1_14 = arith.constant 1 : index
    %c0_15 = arith.constant 0 : index
    %c0_16 = arith.constant 0 : index
    %12 = vector.load %arg3[%c1_14, %c0_15, %c0_16] : memref<4x4x1xf32, #tpu.memory_space<vmem>>, vector<1x4x1xf32>
    %13 = vector.shape_cast %12 : vector<1x4x1xf32> to vector<4x1xf32>
    %14 = vector.shape_cast %13 : vector<4x1xf32> to vector<1x4x1xf32>
    %c2_17 = arith.constant 2 : index
    %c0_18 = arith.constant 0 : index
    %c0_19 = arith.constant 0 : index
    %15 = vector.load %arg3[%c2_17, %c0_18, %c0_19] : memref<4x4x1xf32, #tpu.memory_space<vmem>>, vector<1x4x1xf32>
    %16 = vector.shape_cast %15 : vector<1x4x1xf32> to vector<4x1xf32>
    %17 = vector.shape_cast %16 : vector<4x1xf32> to vector<1x4x1xf32>
    %c3_20 = arith.constant 3 : index
    %c0_21 = arith.constant 0 : index
    %c0_22 = arith.constant 0 : index
    %18 = vector.load %arg3[%c3_20, %c0_21, %c0_22] : memref<4x4x1xf32, #tpu.memory_space<vmem>>, vector<1x4x1xf32>
    %19 = vector.shape_cast %18 : vector<1x4x1xf32> to vector<4x1xf32>
    %20 = vector.shape_cast %19 : vector<4x1xf32> to vector<1x4x1xf32>
    %c0_23 = arith.constant 0 : index
    %c0_24 = arith.constant 0 : index
    %c0_25 = arith.constant 0 : index
    %c0_26 = arith.constant 0 : index
    %21 = vector.load %arg4[%c0_23, %c0_24, %c0_25, %c0_26] : memref<2x9x1x256xf32, #tpu.memory_space<vmem>>, vector<1x1x1x256xf32>
    %22 = vector.shape_cast %21 : vector<1x1x1x256xf32> to vector<1x256xf32>
    %c0_27 = arith.constant 0 : index
    %c1_28 = arith.constant 1 : index
    %c0_29 = arith.constant 0 : index
    %c0_30 = arith.constant 0 : index
    %23 = vector.load %arg4[%c0_27, %c1_28, %c0_29, %c0_30] : memref<2x9x1x256xf32, #tpu.memory_space<vmem>>, vector<1x1x1x256xf32>
    %24 = vector.shape_cast %23 : vector<1x1x1x256xf32> to vector<1x256xf32>
    %c0_31 = arith.constant 0 : index
    %c2_32 = arith.constant 2 : index
    %c0_33 = arith.constant 0 : index
    %c0_34 = arith.constant 0 : index
    %25 = vector.load %arg4[%c0_31, %c2_32, %c0_33, %c0_34] : memref<2x9x1x256xf32, #tpu.memory_space<vmem>>, vector<1x1x1x256xf32>
    %26 = vector.shape_cast %25 : vector<1x1x1x256xf32> to vector<1x256xf32>
    %c0_35 = arith.constant 0 : index
    %c3_36 = arith.constant 3 : index
    %c0_37 = arith.constant 0 : index
    %c0_38 = arith.constant 0 : index
    %27 = vector.load %arg4[%c0_35, %c3_36, %c0_37, %c0_38] : memref<2x9x1x256xf32, #tpu.memory_space<vmem>>, vector<1x1x1x256xf32>
    %28 = vector.shape_cast %27 : vector<1x1x1x256xf32> to vector<1x256xf32>
    %c0_39 = arith.constant 0 : index
    %c5 = arith.constant 5 : index
    %c0_40 = arith.constant 0 : index
    %c0_41 = arith.constant 0 : index
    %29 = vector.load %arg4[%c0_39, %c5, %c0_40, %c0_41] : memref<2x9x1x256xf32, #tpu.memory_space<vmem>>, vector<1x1x1x256xf32>
    %30 = vector.shape_cast %29 : vector<1x1x1x256xf32> to vector<1x256xf32>
    %c0_42 = arith.constant 0 : index
    %c6 = arith.constant 6 : index
    %c0_43 = arith.constant 0 : index
    %c0_44 = arith.constant 0 : index
    %31 = vector.load %arg4[%c0_42, %c6, %c0_43, %c0_44] : memref<2x9x1x256xf32, #tpu.memory_space<vmem>>, vector<1x1x1x256xf32>
    %32 = vector.shape_cast %31 : vector<1x1x1x256xf32> to vector<1x256xf32>
    %c0_45 = arith.constant 0 : index
    %c7 = arith.constant 7 : index
    %c0_46 = arith.constant 0 : index
    %c0_47 = arith.constant 0 : index
    %33 = vector.load %arg4[%c0_45, %c7, %c0_46, %c0_47] : memref<2x9x1x256xf32, #tpu.memory_space<vmem>>, vector<1x1x1x256xf32>
    %34 = vector.shape_cast %33 : vector<1x1x1x256xf32> to vector<1x256xf32>
    %c0_48 = arith.constant 0 : index
    %c8 = arith.constant 8 : index
    %c0_49 = arith.constant 0 : index
    %c0_50 = arith.constant 0 : index
    %35 = vector.load %arg4[%c0_48, %c8, %c0_49, %c0_50] : memref<2x9x1x256xf32, #tpu.memory_space<vmem>>, vector<1x1x1x256xf32>
    %36 = vector.shape_cast %35 : vector<1x1x1x256xf32> to vector<1x256xf32>
    %c1_51 = arith.constant 1 : index
    %c0_52 = arith.constant 0 : index
    %c0_53 = arith.constant 0 : index
    %c0_54 = arith.constant 0 : index
    %37 = vector.load %arg4[%c1_51, %c0_52, %c0_53, %c0_54] : memref<2x9x1x256xf32, #tpu.memory_space<vmem>>, vector<1x1x1x256xf32>
    %38 = vector.shape_cast %37 : vector<1x1x1x256xf32> to vector<1x256xf32>
    %c1_55 = arith.constant 1 : index
    %c1_56 = arith.constant 1 : index
    %c0_57 = arith.constant 0 : index
    %c0_58 = arith.constant 0 : index
    %39 = vector.load %arg4[%c1_55, %c1_56, %c0_57, %c0_58] : memref<2x9x1x256xf32, #tpu.memory_space<vmem>>, vector<1x1x1x256xf32>
    %40 = vector.shape_cast %39 : vector<1x1x1x256xf32> to vector<1x256xf32>
    %c1_59 = arith.constant 1 : index
    %c2_60 = arith.constant 2 : index
    %c0_61 = arith.constant 0 : index
    %c0_62 = arith.constant 0 : index
    %41 = vector.load %arg4[%c1_59, %c2_60, %c0_61, %c0_62] : memref<2x9x1x256xf32, #tpu.memory_space<vmem>>, vector<1x1x1x256xf32>
    %42 = vector.shape_cast %41 : vector<1x1x1x256xf32> to vector<1x256xf32>
    %c1_63 = arith.constant 1 : index
    %c3_64 = arith.constant 3 : index
    %c0_65 = arith.constant 0 : index
    %c0_66 = arith.constant 0 : index
    %43 = vector.load %arg4[%c1_63, %c3_64, %c0_65, %c0_66] : memref<2x9x1x256xf32, #tpu.memory_space<vmem>>, vector<1x1x1x256xf32>
    %44 = vector.shape_cast %43 : vector<1x1x1x256xf32> to vector<1x256xf32>
    %c1_67 = arith.constant 1 : index
    %c5_68 = arith.constant 5 : index
    %c0_69 = arith.constant 0 : index
    %c0_70 = arith.constant 0 : index
    %45 = vector.load %arg4[%c1_67, %c5_68, %c0_69, %c0_70] : memref<2x9x1x256xf32, #tpu.memory_space<vmem>>, vector<1x1x1x256xf32>
    %46 = vector.shape_cast %45 : vector<1x1x1x256xf32> to vector<1x256xf32>
    %c1_71 = arith.constant 1 : index
    %c6_72 = arith.constant 6 : index
    %c0_73 = arith.constant 0 : index
    %c0_74 = arith.constant 0 : index
    %47 = vector.load %arg4[%c1_71, %c6_72, %c0_73, %c0_74] : memref<2x9x1x256xf32, #tpu.memory_space<vmem>>, vector<1x1x1x256xf32>
    %48 = vector.shape_cast %47 : vector<1x1x1x256xf32> to vector<1x256xf32>
    %c1_75 = arith.constant 1 : index
    %c7_76 = arith.constant 7 : index
    %c0_77 = arith.constant 0 : index
    %c0_78 = arith.constant 0 : index
    %49 = vector.load %arg4[%c1_75, %c7_76, %c0_77, %c0_78] : memref<2x9x1x256xf32, #tpu.memory_space<vmem>>, vector<1x1x1x256xf32>
    %50 = vector.shape_cast %49 : vector<1x1x1x256xf32> to vector<1x256xf32>
    %c1_79 = arith.constant 1 : index
    %c8_80 = arith.constant 8 : index
    %c0_81 = arith.constant 0 : index
    %c0_82 = arith.constant 0 : index
    %51 = vector.load %arg4[%c1_79, %c8_80, %c0_81, %c0_82] : memref<2x9x1x256xf32, #tpu.memory_space<vmem>>, vector<1x1x1x256xf32>
    %52 = vector.shape_cast %51 : vector<1x1x1x256xf32> to vector<1x256xf32>
    %53 = vector.extract_strided_slice %0 {offsets = [0, 0, 239], sizes = [2, 4, 17], strides = [1, 1, 1]} : vector<2x4x256xf32> to vector<2x4x17xf32>
    %54 = vector.extract_strided_slice %0 {offsets = [0, 0, 0], sizes = [2, 4, 239], strides = [1, 1, 1]} : vector<2x4x256xf32> to vector<2x4x239xf32>
    %55 = tpu.concatenate %53, %54 in 2 : vector<2x4x17xf32>, vector<2x4x239xf32> -> vector<2x4x256xf32>
    %56 = vector.shape_cast %22 : vector<1x256xf32> to vector<1x1x256xf32>
    %57 = vector.broadcast %56 : vector<1x1x256xf32> to vector<2x4x256xf32>
    %58 = arith.mulf %55, %57 : vector<2x4x256xf32>
    %59 = vector.extract_strided_slice %2 {offsets = [0, 0], sizes = [4, 1], strides = [1, 1]} : vector<4x36xf32> to vector<4x1xf32>
    %60 = vector.shape_cast %59 : vector<4x1xf32> to vector<1x4x1xf32>
    %61 = vector.extract_strided_slice %58 {offsets = [0, 0, 0], sizes = [2, 1, 256], strides = [1, 1, 1]} : vector<2x4x256xf32> to vector<2x1x256xf32>
    %62 = vector.broadcast %60 : vector<1x4x1xf32> to vector<2x4x256xf32>
    %63 = vector.broadcast %61 : vector<2x1x256xf32> to vector<2x4x256xf32>
    %64 = arith.mulf %62, %63 : vector<2x4x256xf32>
    %65 = vector.extract_strided_slice %2 {offsets = [0, 1], sizes = [4, 1], strides = [1, 1]} : vector<4x36xf32> to vector<4x1xf32>
    %66 = vector.shape_cast %65 : vector<4x1xf32> to vector<1x4x1xf32>
    %67 = vector.extract_strided_slice %58 {offsets = [0, 1, 0], sizes = [2, 1, 256], strides = [1, 1, 1]} : vector<2x4x256xf32> to vector<2x1x256xf32>
    %68 = vector.broadcast %66 : vector<1x4x1xf32> to vector<2x4x256xf32>
    %69 = vector.broadcast %67 : vector<2x1x256xf32> to vector<2x4x256xf32>
    %70 = arith.mulf %68, %69 : vector<2x4x256xf32>
    %71 = arith.addf %64, %70 : vector<2x4x256xf32>
    %72 = vector.extract_strided_slice %2 {offsets = [0, 2], sizes = [4, 1], strides = [1, 1]} : vector<4x36xf32> to vector<4x1xf32>
    %73 = vector.shape_cast %72 : vector<4x1xf32> to vector<1x4x1xf32>
    %74 = vector.extract_strided_slice %58 {offsets = [0, 2, 0], sizes = [2, 1, 256], strides = [1, 1, 1]} : vector<2x4x256xf32> to vector<2x1x256xf32>
    %75 = vector.broadcast %73 : vector<1x4x1xf32> to vector<2x4x256xf32>
    %76 = vector.broadcast %74 : vector<2x1x256xf32> to vector<2x4x256xf32>
    %77 = arith.mulf %75, %76 : vector<2x4x256xf32>
    %78 = arith.addf %71, %77 : vector<2x4x256xf32>
    %79 = vector.extract_strided_slice %2 {offsets = [0, 3], sizes = [4, 1], strides = [1, 1]} : vector<4x36xf32> to vector<4x1xf32>
    %80 = vector.shape_cast %79 : vector<4x1xf32> to vector<1x4x1xf32>
    %81 = vector.extract_strided_slice %58 {offsets = [0, 3, 0], sizes = [2, 1, 256], strides = [1, 1, 1]} : vector<2x4x256xf32> to vector<2x1x256xf32>
    %82 = vector.broadcast %80 : vector<1x4x1xf32> to vector<2x4x256xf32>
    %83 = vector.broadcast %81 : vector<2x1x256xf32> to vector<2x4x256xf32>
    %84 = arith.mulf %82, %83 : vector<2x4x256xf32>
    %85 = arith.addf %78, %84 : vector<2x4x256xf32>
    %86 = vector.extract_strided_slice %0 {offsets = [0, 0, 240], sizes = [2, 4, 16], strides = [1, 1, 1]} : vector<2x4x256xf32> to vector<2x4x16xf32>
    %87 = vector.extract_strided_slice %0 {offsets = [0, 0, 0], sizes = [2, 4, 240], strides = [1, 1, 1]} : vector<2x4x256xf32> to vector<2x4x240xf32>
    %88 = tpu.concatenate %86, %87 in 2 : vector<2x4x16xf32>, vector<2x4x240xf32> -> vector<2x4x256xf32>
    %89 = vector.shape_cast %24 : vector<1x256xf32> to vector<1x1x256xf32>
    %90 = vector.broadcast %89 : vector<1x1x256xf32> to vector<2x4x256xf32>
    %91 = arith.mulf %88, %90 : vector<2x4x256xf32>
    %92 = vector.extract_strided_slice %2 {offsets = [0, 4], sizes = [4, 1], strides = [1, 1]} : vector<4x36xf32> to vector<4x1xf32>
    %93 = vector.shape_cast %92 : vector<4x1xf32> to vector<1x4x1xf32>
    %94 = vector.extract_strided_slice %91 {offsets = [0, 0, 0], sizes = [2, 1, 256], strides = [1, 1, 1]} : vector<2x4x256xf32> to vector<2x1x256xf32>
    %95 = vector.broadcast %93 : vector<1x4x1xf32> to vector<2x4x256xf32>
    %96 = vector.broadcast %94 : vector<2x1x256xf32> to vector<2x4x256xf32>
    %97 = arith.mulf %95, %96 : vector<2x4x256xf32>
    %98 = arith.addf %85, %97 : vector<2x4x256xf32>
    %99 = vector.extract_strided_slice %2 {offsets = [0, 5], sizes = [4, 1], strides = [1, 1]} : vector<4x36xf32> to vector<4x1xf32>
    %100 = vector.shape_cast %99 : vector<4x1xf32> to vector<1x4x1xf32>
    %101 = vector.extract_strided_slice %91 {offsets = [0, 1, 0], sizes = [2, 1, 256], strides = [1, 1, 1]} : vector<2x4x256xf32> to vector<2x1x256xf32>
    %102 = vector.broadcast %100 : vector<1x4x1xf32> to vector<2x4x256xf32>
    %103 = vector.broadcast %101 : vector<2x1x256xf32> to vector<2x4x256xf32>
    %104 = arith.mulf %102, %103 : vector<2x4x256xf32>
    %105 = arith.addf %98, %104 : vector<2x4x256xf32>
    %106 = vector.extract_strided_slice %2 {offsets = [0, 6], sizes = [4, 1], strides = [1, 1]} : vector<4x36xf32> to vector<4x1xf32>
    %107 = vector.shape_cast %106 : vector<4x1xf32> to vector<1x4x1xf32>
    %108 = vector.extract_strided_slice %91 {offsets = [0, 2, 0], sizes = [2, 1, 256], strides = [1, 1, 1]} : vector<2x4x256xf32> to vector<2x1x256xf32>
    %109 = vector.broadcast %107 : vector<1x4x1xf32> to vector<2x4x256xf32>
    %110 = vector.broadcast %108 : vector<2x1x256xf32> to vector<2x4x256xf32>
    %111 = arith.mulf %109, %110 : vector<2x4x256xf32>
    %112 = arith.addf %105, %111 : vector<2x4x256xf32>
    %113 = vector.extract_strided_slice %2 {offsets = [0, 7], sizes = [4, 1], strides = [1, 1]} : vector<4x36xf32> to vector<4x1xf32>
    %114 = vector.shape_cast %113 : vector<4x1xf32> to vector<1x4x1xf32>
    %115 = vector.extract_strided_slice %91 {offsets = [0, 3, 0], sizes = [2, 1, 256], strides = [1, 1, 1]} : vector<2x4x256xf32> to vector<2x1x256xf32>
    %116 = vector.broadcast %114 : vector<1x4x1xf32> to vector<2x4x256xf32>
    %117 = vector.broadcast %115 : vector<2x1x256xf32> to vector<2x4x256xf32>
    %118 = arith.mulf %116, %117 : vector<2x4x256xf32>
    %119 = arith.addf %112, %118 : vector<2x4x256xf32>
    %120 = vector.extract_strided_slice %0 {offsets = [0, 0, 241], sizes = [2, 4, 15], strides = [1, 1, 1]} : vector<2x4x256xf32> to vector<2x4x15xf32>
    %121 = vector.extract_strided_slice %0 {offsets = [0, 0, 0], sizes = [2, 4, 241], strides = [1, 1, 1]} : vector<2x4x256xf32> to vector<2x4x241xf32>
    %122 = tpu.concatenate %120, %121 in 2 : vector<2x4x15xf32>, vector<2x4x241xf32> -> vector<2x4x256xf32>
    %123 = vector.shape_cast %26 : vector<1x256xf32> to vector<1x1x256xf32>
    %124 = vector.broadcast %123 : vector<1x1x256xf32> to vector<2x4x256xf32>
    %125 = arith.mulf %122, %124 : vector<2x4x256xf32>
    %126 = vector.extract_strided_slice %2 {offsets = [0, 8], sizes = [4, 1], strides = [1, 1]} : vector<4x36xf32> to vector<4x1xf32>
    %127 = vector.shape_cast %126 : vector<4x1xf32> to vector<1x4x1xf32>
    %128 = vector.extract_strided_slice %125 {offsets = [0, 0, 0], sizes = [2, 1, 256], strides = [1, 1, 1]} : vector<2x4x256xf32> to vector<2x1x256xf32>
    %129 = vector.broadcast %127 : vector<1x4x1xf32> to vector<2x4x256xf32>
    %130 = vector.broadcast %128 : vector<2x1x256xf32> to vector<2x4x256xf32>
    %131 = arith.mulf %129, %130 : vector<2x4x256xf32>
    %132 = arith.addf %119, %131 : vector<2x4x256xf32>
    %133 = vector.extract_strided_slice %2 {offsets = [0, 9], sizes = [4, 1], strides = [1, 1]} : vector<4x36xf32> to vector<4x1xf32>
    %134 = vector.shape_cast %133 : vector<4x1xf32> to vector<1x4x1xf32>
    %135 = vector.extract_strided_slice %125 {offsets = [0, 1, 0], sizes = [2, 1, 256], strides = [1, 1, 1]} : vector<2x4x256xf32> to vector<2x1x256xf32>
    %136 = vector.broadcast %134 : vector<1x4x1xf32> to vector<2x4x256xf32>
    %137 = vector.broadcast %135 : vector<2x1x256xf32> to vector<2x4x256xf32>
    %138 = arith.mulf %136, %137 : vector<2x4x256xf32>
    %139 = arith.addf %132, %138 : vector<2x4x256xf32>
    %140 = vector.extract_strided_slice %2 {offsets = [0, 10], sizes = [4, 1], strides = [1, 1]} : vector<4x36xf32> to vector<4x1xf32>
    %141 = vector.shape_cast %140 : vector<4x1xf32> to vector<1x4x1xf32>
    %142 = vector.extract_strided_slice %125 {offsets = [0, 2, 0], sizes = [2, 1, 256], strides = [1, 1, 1]} : vector<2x4x256xf32> to vector<2x1x256xf32>
    %143 = vector.broadcast %141 : vector<1x4x1xf32> to vector<2x4x256xf32>
    %144 = vector.broadcast %142 : vector<2x1x256xf32> to vector<2x4x256xf32>
    %145 = arith.mulf %143, %144 : vector<2x4x256xf32>
    %146 = arith.addf %139, %145 : vector<2x4x256xf32>
    %147 = vector.extract_strided_slice %2 {offsets = [0, 11], sizes = [4, 1], strides = [1, 1]} : vector<4x36xf32> to vector<4x1xf32>
    %148 = vector.shape_cast %147 : vector<4x1xf32> to vector<1x4x1xf32>
    %149 = vector.extract_strided_slice %125 {offsets = [0, 3, 0], sizes = [2, 1, 256], strides = [1, 1, 1]} : vector<2x4x256xf32> to vector<2x1x256xf32>
    %150 = vector.broadcast %148 : vector<1x4x1xf32> to vector<2x4x256xf32>
    %151 = vector.broadcast %149 : vector<2x1x256xf32> to vector<2x4x256xf32>
    %152 = arith.mulf %150, %151 : vector<2x4x256xf32>
    %153 = arith.addf %146, %152 : vector<2x4x256xf32>
    %154 = vector.extract_strided_slice %0 {offsets = [0, 0, 255], sizes = [2, 4, 1], strides = [1, 1, 1]} : vector<2x4x256xf32> to vector<2x4x1xf32>
    %155 = vector.extract_strided_slice %0 {offsets = [0, 0, 0], sizes = [2, 4, 255], strides = [1, 1, 1]} : vector<2x4x256xf32> to vector<2x4x255xf32>
    %156 = tpu.concatenate %154, %155 in 2 : vector<2x4x1xf32>, vector<2x4x255xf32> -> vector<2x4x256xf32>
    %157 = vector.shape_cast %28 : vector<1x256xf32> to vector<1x1x256xf32>
    %158 = vector.broadcast %157 : vector<1x1x256xf32> to vector<2x4x256xf32>
    %159 = arith.mulf %156, %158 : vector<2x4x256xf32>
    %160 = vector.extract_strided_slice %2 {offsets = [0, 12], sizes = [4, 1], strides = [1, 1]} : vector<4x36xf32> to vector<4x1xf32>
    %161 = vector.shape_cast %160 : vector<4x1xf32> to vector<1x4x1xf32>
    %162 = vector.extract_strided_slice %159 {offsets = [0, 0, 0], sizes = [2, 1, 256], strides = [1, 1, 1]} : vector<2x4x256xf32> to vector<2x1x256xf32>
    %163 = vector.broadcast %161 : vector<1x4x1xf32> to vector<2x4x256xf32>
    %164 = vector.broadcast %162 : vector<2x1x256xf32> to vector<2x4x256xf32>
    %165 = arith.mulf %163, %164 : vector<2x4x256xf32>
    %166 = arith.addf %153, %165 : vector<2x4x256xf32>
    %167 = vector.extract_strided_slice %2 {offsets = [0, 13], sizes = [4, 1], strides = [1, 1]} : vector<4x36xf32> to vector<4x1xf32>
    %168 = vector.shape_cast %167 : vector<4x1xf32> to vector<1x4x1xf32>
    %169 = vector.extract_strided_slice %159 {offsets = [0, 1, 0], sizes = [2, 1, 256], strides = [1, 1, 1]} : vector<2x4x256xf32> to vector<2x1x256xf32>
    %170 = vector.broadcast %168 : vector<1x4x1xf32> to vector<2x4x256xf32>
    %171 = vector.broadcast %169 : vector<2x1x256xf32> to vector<2x4x256xf32>
    %172 = arith.mulf %170, %171 : vector<2x4x256xf32>
    %173 = arith.addf %166, %172 : vector<2x4x256xf32>
    %174 = vector.extract_strided_slice %2 {offsets = [0, 14], sizes = [4, 1], strides = [1, 1]} : vector<4x36xf32> to vector<4x1xf32>
    %175 = vector.shape_cast %174 : vector<4x1xf32> to vector<1x4x1xf32>
    %176 = vector.extract_strided_slice %159 {offsets = [0, 2, 0], sizes = [2, 1, 256], strides = [1, 1, 1]} : vector<2x4x256xf32> to vector<2x1x256xf32>
    %177 = vector.broadcast %175 : vector<1x4x1xf32> to vector<2x4x256xf32>
    %178 = vector.broadcast %176 : vector<2x1x256xf32> to vector<2x4x256xf32>
    %179 = arith.mulf %177, %178 : vector<2x4x256xf32>
    %180 = arith.addf %173, %179 : vector<2x4x256xf32>
    %181 = vector.extract_strided_slice %2 {offsets = [0, 15], sizes = [4, 1], strides = [1, 1]} : vector<4x36xf32> to vector<4x1xf32>
    %182 = vector.shape_cast %181 : vector<4x1xf32> to vector<1x4x1xf32>
    %183 = vector.extract_strided_slice %159 {offsets = [0, 3, 0], sizes = [2, 1, 256], strides = [1, 1, 1]} : vector<2x4x256xf32> to vector<2x1x256xf32>
    %184 = vector.broadcast %182 : vector<1x4x1xf32> to vector<2x4x256xf32>
    %185 = vector.broadcast %183 : vector<2x1x256xf32> to vector<2x4x256xf32>
    %186 = arith.mulf %184, %185 : vector<2x4x256xf32>
    %187 = arith.addf %180, %186 : vector<2x4x256xf32>
    %188 = vector.extract_strided_slice %2 {offsets = [0, 16], sizes = [4, 1], strides = [1, 1]} : vector<4x36xf32> to vector<4x1xf32>
    %189 = vector.shape_cast %188 : vector<4x1xf32> to vector<1x4x1xf32>
    %190 = vector.extract_strided_slice %0 {offsets = [0, 0, 0], sizes = [2, 1, 256], strides = [1, 1, 1]} : vector<2x4x256xf32> to vector<2x1x256xf32>
    %191 = vector.broadcast %189 : vector<1x4x1xf32> to vector<2x4x256xf32>
    %192 = vector.broadcast %190 : vector<2x1x256xf32> to vector<2x4x256xf32>
    %193 = arith.mulf %191, %192 : vector<2x4x256xf32>
    %194 = arith.addf %187, %193 : vector<2x4x256xf32>
    %195 = vector.extract_strided_slice %2 {offsets = [0, 17], sizes = [4, 1], strides = [1, 1]} : vector<4x36xf32> to vector<4x1xf32>
    %196 = vector.shape_cast %195 : vector<4x1xf32> to vector<1x4x1xf32>
    %197 = vector.extract_strided_slice %0 {offsets = [0, 1, 0], sizes = [2, 1, 256], strides = [1, 1, 1]} : vector<2x4x256xf32> to vector<2x1x256xf32>
    %198 = vector.broadcast %196 : vector<1x4x1xf32> to vector<2x4x256xf32>
    %199 = vector.broadcast %197 : vector<2x1x256xf32> to vector<2x4x256xf32>
    %200 = arith.mulf %198, %199 : vector<2x4x256xf32>
    %201 = arith.addf %194, %200 : vector<2x4x256xf32>
    %202 = vector.extract_strided_slice %2 {offsets = [0, 18], sizes = [4, 1], strides = [1, 1]} : vector<4x36xf32> to vector<4x1xf32>
    %203 = vector.shape_cast %202 : vector<4x1xf32> to vector<1x4x1xf32>
    %204 = vector.extract_strided_slice %0 {offsets = [0, 2, 0], sizes = [2, 1, 256], strides = [1, 1, 1]} : vector<2x4x256xf32> to vector<2x1x256xf32>
    %205 = vector.broadcast %203 : vector<1x4x1xf32> to vector<2x4x256xf32>
    %206 = vector.broadcast %204 : vector<2x1x256xf32> to vector<2x4x256xf32>
    %207 = arith.mulf %205, %206 : vector<2x4x256xf32>
    %208 = arith.addf %201, %207 : vector<2x4x256xf32>
    %209 = vector.extract_strided_slice %2 {offsets = [0, 19], sizes = [4, 1], strides = [1, 1]} : vector<4x36xf32> to vector<4x1xf32>
    %210 = vector.shape_cast %209 : vector<4x1xf32> to vector<1x4x1xf32>
    %211 = vector.extract_strided_slice %0 {offsets = [0, 3, 0], sizes = [2, 1, 256], strides = [1, 1, 1]} : vector<2x4x256xf32> to vector<2x1x256xf32>
    %212 = vector.broadcast %210 : vector<1x4x1xf32> to vector<2x4x256xf32>
    %213 = vector.broadcast %211 : vector<2x1x256xf32> to vector<2x4x256xf32>
    %214 = arith.mulf %212, %213 : vector<2x4x256xf32>
    %215 = arith.addf %208, %214 : vector<2x4x256xf32>
    %216 = vector.extract_strided_slice %0 {offsets = [0, 0, 1], sizes = [2, 4, 255], strides = [1, 1, 1]} : vector<2x4x256xf32> to vector<2x4x255xf32>
    %217 = vector.extract_strided_slice %0 {offsets = [0, 0, 0], sizes = [2, 4, 1], strides = [1, 1, 1]} : vector<2x4x256xf32> to vector<2x4x1xf32>
    %218 = tpu.concatenate %216, %217 in 2 : vector<2x4x255xf32>, vector<2x4x1xf32> -> vector<2x4x256xf32>
    %219 = vector.shape_cast %30 : vector<1x256xf32> to vector<1x1x256xf32>
    %220 = vector.broadcast %219 : vector<1x1x256xf32> to vector<2x4x256xf32>
    %221 = arith.mulf %218, %220 : vector<2x4x256xf32>
    %222 = vector.extract_strided_slice %2 {offsets = [0, 20], sizes = [4, 1], strides = [1, 1]} : vector<4x36xf32> to vector<4x1xf32>
    %223 = vector.shape_cast %222 : vector<4x1xf32> to vector<1x4x1xf32>
    %224 = vector.extract_strided_slice %221 {offsets = [0, 0, 0], sizes = [2, 1, 256], strides = [1, 1, 1]} : vector<2x4x256xf32> to vector<2x1x256xf32>
    %225 = vector.broadcast %223 : vector<1x4x1xf32> to vector<2x4x256xf32>
    %226 = vector.broadcast %224 : vector<2x1x256xf32> to vector<2x4x256xf32>
    %227 = arith.mulf %225, %226 : vector<2x4x256xf32>
    %228 = arith.addf %215, %227 : vector<2x4x256xf32>
    %229 = vector.extract_strided_slice %2 {offsets = [0, 21], sizes = [4, 1], strides = [1, 1]} : vector<4x36xf32> to vector<4x1xf32>
    %230 = vector.shape_cast %229 : vector<4x1xf32> to vector<1x4x1xf32>
    %231 = vector.extract_strided_slice %221 {offsets = [0, 1, 0], sizes = [2, 1, 256], strides = [1, 1, 1]} : vector<2x4x256xf32> to vector<2x1x256xf32>
    %232 = vector.broadcast %230 : vector<1x4x1xf32> to vector<2x4x256xf32>
    %233 = vector.broadcast %231 : vector<2x1x256xf32> to vector<2x4x256xf32>
    %234 = arith.mulf %232, %233 : vector<2x4x256xf32>
    %235 = arith.addf %228, %234 : vector<2x4x256xf32>
    %236 = vector.extract_strided_slice %2 {offsets = [0, 22], sizes = [4, 1], strides = [1, 1]} : vector<4x36xf32> to vector<4x1xf32>
    %237 = vector.shape_cast %236 : vector<4x1xf32> to vector<1x4x1xf32>
    %238 = vector.extract_strided_slice %221 {offsets = [0, 2, 0], sizes = [2, 1, 256], strides = [1, 1, 1]} : vector<2x4x256xf32> to vector<2x1x256xf32>
    %239 = vector.broadcast %237 : vector<1x4x1xf32> to vector<2x4x256xf32>
    %240 = vector.broadcast %238 : vector<2x1x256xf32> to vector<2x4x256xf32>
    %241 = arith.mulf %239, %240 : vector<2x4x256xf32>
    %242 = arith.addf %235, %241 : vector<2x4x256xf32>
    %243 = vector.extract_strided_slice %2 {offsets = [0, 23], sizes = [4, 1], strides = [1, 1]} : vector<4x36xf32> to vector<4x1xf32>
    %244 = vector.shape_cast %243 : vector<4x1xf32> to vector<1x4x1xf32>
    %245 = vector.extract_strided_slice %221 {offsets = [0, 3, 0], sizes = [2, 1, 256], strides = [1, 1, 1]} : vector<2x4x256xf32> to vector<2x1x256xf32>
    %246 = vector.broadcast %244 : vector<1x4x1xf32> to vector<2x4x256xf32>
    %247 = vector.broadcast %245 : vector<2x1x256xf32> to vector<2x4x256xf32>
    %248 = arith.mulf %246, %247 : vector<2x4x256xf32>
    %249 = arith.addf %242, %248 : vector<2x4x256xf32>
    %250 = vector.extract_strided_slice %0 {offsets = [0, 0, 15], sizes = [2, 4, 241], strides = [1, 1, 1]} : vector<2x4x256xf32> to vector<2x4x241xf32>
    %251 = vector.extract_strided_slice %0 {offsets = [0, 0, 0], sizes = [2, 4, 15], strides = [1, 1, 1]} : vector<2x4x256xf32> to vector<2x4x15xf32>
    %252 = tpu.concatenate %250, %251 in 2 : vector<2x4x241xf32>, vector<2x4x15xf32> -> vector<2x4x256xf32>
    %253 = vector.shape_cast %32 : vector<1x256xf32> to vector<1x1x256xf32>
    %254 = vector.broadcast %253 : vector<1x1x256xf32> to vector<2x4x256xf32>
    %255 = arith.mulf %252, %254 : vector<2x4x256xf32>
    %256 = vector.extract_strided_slice %2 {offsets = [0, 24], sizes = [4, 1], strides = [1, 1]} : vector<4x36xf32> to vector<4x1xf32>
    %257 = vector.shape_cast %256 : vector<4x1xf32> to vector<1x4x1xf32>
    %258 = vector.extract_strided_slice %255 {offsets = [0, 0, 0], sizes = [2, 1, 256], strides = [1, 1, 1]} : vector<2x4x256xf32> to vector<2x1x256xf32>
    %259 = vector.broadcast %257 : vector<1x4x1xf32> to vector<2x4x256xf32>
    %260 = vector.broadcast %258 : vector<2x1x256xf32> to vector<2x4x256xf32>
    %261 = arith.mulf %259, %260 : vector<2x4x256xf32>
    %262 = arith.addf %249, %261 : vector<2x4x256xf32>
    %263 = vector.extract_strided_slice %2 {offsets = [0, 25], sizes = [4, 1], strides = [1, 1]} : vector<4x36xf32> to vector<4x1xf32>
    %264 = vector.shape_cast %263 : vector<4x1xf32> to vector<1x4x1xf32>
    %265 = vector.extract_strided_slice %255 {offsets = [0, 1, 0], sizes = [2, 1, 256], strides = [1, 1, 1]} : vector<2x4x256xf32> to vector<2x1x256xf32>
    %266 = vector.broadcast %264 : vector<1x4x1xf32> to vector<2x4x256xf32>
    %267 = vector.broadcast %265 : vector<2x1x256xf32> to vector<2x4x256xf32>
    %268 = arith.mulf %266, %267 : vector<2x4x256xf32>
    %269 = arith.addf %262, %268 : vector<2x4x256xf32>
    %270 = vector.extract_strided_slice %2 {offsets = [0, 26], sizes = [4, 1], strides = [1, 1]} : vector<4x36xf32> to vector<4x1xf32>
    %271 = vector.shape_cast %270 : vector<4x1xf32> to vector<1x4x1xf32>
    %272 = vector.extract_strided_slice %255 {offsets = [0, 2, 0], sizes = [2, 1, 256], strides = [1, 1, 1]} : vector<2x4x256xf32> to vector<2x1x256xf32>
    %273 = vector.broadcast %271 : vector<1x4x1xf32> to vector<2x4x256xf32>
    %274 = vector.broadcast %272 : vector<2x1x256xf32> to vector<2x4x256xf32>
    %275 = arith.mulf %273, %274 : vector<2x4x256xf32>
    %276 = arith.addf %269, %275 : vector<2x4x256xf32>
    %277 = vector.extract_strided_slice %2 {offsets = [0, 27], sizes = [4, 1], strides = [1, 1]} : vector<4x36xf32> to vector<4x1xf32>
    %278 = vector.shape_cast %277 : vector<4x1xf32> to vector<1x4x1xf32>
    %279 = vector.extract_strided_slice %255 {offsets = [0, 3, 0], sizes = [2, 1, 256], strides = [1, 1, 1]} : vector<2x4x256xf32> to vector<2x1x256xf32>
    %280 = vector.broadcast %278 : vector<1x4x1xf32> to vector<2x4x256xf32>
    %281 = vector.broadcast %279 : vector<2x1x256xf32> to vector<2x4x256xf32>
    %282 = arith.mulf %280, %281 : vector<2x4x256xf32>
    %283 = arith.addf %276, %282 : vector<2x4x256xf32>
    %284 = vector.extract_strided_slice %0 {offsets = [0, 0, 16], sizes = [2, 4, 240], strides = [1, 1, 1]} : vector<2x4x256xf32> to vector<2x4x240xf32>
    %285 = vector.extract_strided_slice %0 {offsets = [0, 0, 0], sizes = [2, 4, 16], strides = [1, 1, 1]} : vector<2x4x256xf32> to vector<2x4x16xf32>
    %286 = tpu.concatenate %284, %285 in 2 : vector<2x4x240xf32>, vector<2x4x16xf32> -> vector<2x4x256xf32>
    %287 = vector.shape_cast %34 : vector<1x256xf32> to vector<1x1x256xf32>
    %288 = vector.broadcast %287 : vector<1x1x256xf32> to vector<2x4x256xf32>
    %289 = arith.mulf %286, %288 : vector<2x4x256xf32>
    %290 = vector.extract_strided_slice %2 {offsets = [0, 28], sizes = [4, 1], strides = [1, 1]} : vector<4x36xf32> to vector<4x1xf32>
    %291 = vector.shape_cast %290 : vector<4x1xf32> to vector<1x4x1xf32>
    %292 = vector.extract_strided_slice %289 {offsets = [0, 0, 0], sizes = [2, 1, 256], strides = [1, 1, 1]} : vector<2x4x256xf32> to vector<2x1x256xf32>
    %293 = vector.broadcast %291 : vector<1x4x1xf32> to vector<2x4x256xf32>
    %294 = vector.broadcast %292 : vector<2x1x256xf32> to vector<2x4x256xf32>
    %295 = arith.mulf %293, %294 : vector<2x4x256xf32>
    %296 = arith.addf %283, %295 : vector<2x4x256xf32>
    %297 = vector.extract_strided_slice %2 {offsets = [0, 29], sizes = [4, 1], strides = [1, 1]} : vector<4x36xf32> to vector<4x1xf32>
    %298 = vector.shape_cast %297 : vector<4x1xf32> to vector<1x4x1xf32>
    %299 = vector.extract_strided_slice %289 {offsets = [0, 1, 0], sizes = [2, 1, 256], strides = [1, 1, 1]} : vector<2x4x256xf32> to vector<2x1x256xf32>
    %300 = vector.broadcast %298 : vector<1x4x1xf32> to vector<2x4x256xf32>
    %301 = vector.broadcast %299 : vector<2x1x256xf32> to vector<2x4x256xf32>
    %302 = arith.mulf %300, %301 : vector<2x4x256xf32>
    %303 = arith.addf %296, %302 : vector<2x4x256xf32>
    %304 = vector.extract_strided_slice %2 {offsets = [0, 30], sizes = [4, 1], strides = [1, 1]} : vector<4x36xf32> to vector<4x1xf32>
    %305 = vector.shape_cast %304 : vector<4x1xf32> to vector<1x4x1xf32>
    %306 = vector.extract_strided_slice %289 {offsets = [0, 2, 0], sizes = [2, 1, 256], strides = [1, 1, 1]} : vector<2x4x256xf32> to vector<2x1x256xf32>
    %307 = vector.broadcast %305 : vector<1x4x1xf32> to vector<2x4x256xf32>
    %308 = vector.broadcast %306 : vector<2x1x256xf32> to vector<2x4x256xf32>
    %309 = arith.mulf %307, %308 : vector<2x4x256xf32>
    %310 = arith.addf %303, %309 : vector<2x4x256xf32>
    %311 = vector.extract_strided_slice %2 {offsets = [0, 31], sizes = [4, 1], strides = [1, 1]} : vector<4x36xf32> to vector<4x1xf32>
    %312 = vector.shape_cast %311 : vector<4x1xf32> to vector<1x4x1xf32>
    %313 = vector.extract_strided_slice %289 {offsets = [0, 3, 0], sizes = [2, 1, 256], strides = [1, 1, 1]} : vector<2x4x256xf32> to vector<2x1x256xf32>
    %314 = vector.broadcast %312 : vector<1x4x1xf32> to vector<2x4x256xf32>
    %315 = vector.broadcast %313 : vector<2x1x256xf32> to vector<2x4x256xf32>
    %316 = arith.mulf %314, %315 : vector<2x4x256xf32>
    %317 = arith.addf %310, %316 : vector<2x4x256xf32>
    %318 = vector.extract_strided_slice %0 {offsets = [0, 0, 17], sizes = [2, 4, 239], strides = [1, 1, 1]} : vector<2x4x256xf32> to vector<2x4x239xf32>
    %319 = vector.extract_strided_slice %0 {offsets = [0, 0, 0], sizes = [2, 4, 17], strides = [1, 1, 1]} : vector<2x4x256xf32> to vector<2x4x17xf32>
    %320 = tpu.concatenate %318, %319 in 2 : vector<2x4x239xf32>, vector<2x4x17xf32> -> vector<2x4x256xf32>
    %321 = vector.shape_cast %36 : vector<1x256xf32> to vector<1x1x256xf32>
    %322 = vector.broadcast %321 : vector<1x1x256xf32> to vector<2x4x256xf32>
    %323 = arith.mulf %320, %322 : vector<2x4x256xf32>
    %324 = vector.extract_strided_slice %2 {offsets = [0, 32], sizes = [4, 1], strides = [1, 1]} : vector<4x36xf32> to vector<4x1xf32>
    %325 = vector.shape_cast %324 : vector<4x1xf32> to vector<1x4x1xf32>
    %326 = vector.extract_strided_slice %323 {offsets = [0, 0, 0], sizes = [2, 1, 256], strides = [1, 1, 1]} : vector<2x4x256xf32> to vector<2x1x256xf32>
    %327 = vector.broadcast %325 : vector<1x4x1xf32> to vector<2x4x256xf32>
    %328 = vector.broadcast %326 : vector<2x1x256xf32> to vector<2x4x256xf32>
    %329 = arith.mulf %327, %328 : vector<2x4x256xf32>
    %330 = arith.addf %317, %329 : vector<2x4x256xf32>
    %331 = vector.extract_strided_slice %2 {offsets = [0, 33], sizes = [4, 1], strides = [1, 1]} : vector<4x36xf32> to vector<4x1xf32>
    %332 = vector.shape_cast %331 : vector<4x1xf32> to vector<1x4x1xf32>
    %333 = vector.extract_strided_slice %323 {offsets = [0, 1, 0], sizes = [2, 1, 256], strides = [1, 1, 1]} : vector<2x4x256xf32> to vector<2x1x256xf32>
    %334 = vector.broadcast %332 : vector<1x4x1xf32> to vector<2x4x256xf32>
    %335 = vector.broadcast %333 : vector<2x1x256xf32> to vector<2x4x256xf32>
    %336 = arith.mulf %334, %335 : vector<2x4x256xf32>
    %337 = arith.addf %330, %336 : vector<2x4x256xf32>
    %338 = vector.extract_strided_slice %2 {offsets = [0, 34], sizes = [4, 1], strides = [1, 1]} : vector<4x36xf32> to vector<4x1xf32>
    %339 = vector.shape_cast %338 : vector<4x1xf32> to vector<1x4x1xf32>
    %340 = vector.extract_strided_slice %323 {offsets = [0, 2, 0], sizes = [2, 1, 256], strides = [1, 1, 1]} : vector<2x4x256xf32> to vector<2x1x256xf32>
    %341 = vector.broadcast %339 : vector<1x4x1xf32> to vector<2x4x256xf32>
    %342 = vector.broadcast %340 : vector<2x1x256xf32> to vector<2x4x256xf32>
    %343 = arith.mulf %341, %342 : vector<2x4x256xf32>
    %344 = arith.addf %337, %343 : vector<2x4x256xf32>
    %345 = vector.extract_strided_slice %2 {offsets = [0, 35], sizes = [4, 1], strides = [1, 1]} : vector<4x36xf32> to vector<4x1xf32>
    %346 = vector.shape_cast %345 : vector<4x1xf32> to vector<1x4x1xf32>
    %347 = vector.extract_strided_slice %323 {offsets = [0, 3, 0], sizes = [2, 1, 256], strides = [1, 1, 1]} : vector<2x4x256xf32> to vector<2x1x256xf32>
    %348 = vector.broadcast %346 : vector<1x4x1xf32> to vector<2x4x256xf32>
    %349 = vector.broadcast %347 : vector<2x1x256xf32> to vector<2x4x256xf32>
    %350 = arith.mulf %348, %349 : vector<2x4x256xf32>
    %351 = arith.addf %344, %350 : vector<2x4x256xf32>
    %352 = vector.broadcast %11 : vector<1x4x1xf32> to vector<2x4x256xf32>
    %353 = arith.addf %351, %352 : vector<2x4x256xf32>
    %cst = arith.constant 1.000000e-01 : f32
    %354 = vector.broadcast %cst : f32 to vector<2x4x256xf32>
    %355 = arith.mulf %354, %353 : vector<2x4x256xf32>
    %356 = arith.maximumf %353, %355 : vector<2x4x256xf32>
    %357 = vector.extract_strided_slice %356 {offsets = [0, 0, 222], sizes = [2, 4, 34], strides = [1, 1, 1]} : vector<2x4x256xf32> to vector<2x4x34xf32>
    %358 = vector.extract_strided_slice %356 {offsets = [0, 0, 0], sizes = [2, 4, 222], strides = [1, 1, 1]} : vector<2x4x256xf32> to vector<2x4x222xf32>
    %359 = tpu.concatenate %357, %358 in 2 : vector<2x4x34xf32>, vector<2x4x222xf32> -> vector<2x4x256xf32>
    %360 = vector.shape_cast %38 : vector<1x256xf32> to vector<1x1x256xf32>
    %361 = vector.broadcast %360 : vector<1x1x256xf32> to vector<2x4x256xf32>
    %362 = arith.mulf %359, %361 : vector<2x4x256xf32>
    %363 = vector.extract_strided_slice %4 {offsets = [0, 0], sizes = [4, 1], strides = [1, 1]} : vector<4x36xf32> to vector<4x1xf32>
    %364 = vector.shape_cast %363 : vector<4x1xf32> to vector<1x4x1xf32>
    %365 = vector.extract_strided_slice %362 {offsets = [0, 0, 0], sizes = [2, 1, 256], strides = [1, 1, 1]} : vector<2x4x256xf32> to vector<2x1x256xf32>
    %366 = vector.broadcast %364 : vector<1x4x1xf32> to vector<2x4x256xf32>
    %367 = vector.broadcast %365 : vector<2x1x256xf32> to vector<2x4x256xf32>
    %368 = arith.mulf %366, %367 : vector<2x4x256xf32>
    %369 = vector.extract_strided_slice %4 {offsets = [0, 1], sizes = [4, 1], strides = [1, 1]} : vector<4x36xf32> to vector<4x1xf32>
    %370 = vector.shape_cast %369 : vector<4x1xf32> to vector<1x4x1xf32>
    %371 = vector.extract_strided_slice %362 {offsets = [0, 1, 0], sizes = [2, 1, 256], strides = [1, 1, 1]} : vector<2x4x256xf32> to vector<2x1x256xf32>
    %372 = vector.broadcast %370 : vector<1x4x1xf32> to vector<2x4x256xf32>
    %373 = vector.broadcast %371 : vector<2x1x256xf32> to vector<2x4x256xf32>
    %374 = arith.mulf %372, %373 : vector<2x4x256xf32>
    %375 = arith.addf %368, %374 : vector<2x4x256xf32>
    %376 = vector.extract_strided_slice %4 {offsets = [0, 2], sizes = [4, 1], strides = [1, 1]} : vector<4x36xf32> to vector<4x1xf32>
    %377 = vector.shape_cast %376 : vector<4x1xf32> to vector<1x4x1xf32>
    %378 = vector.extract_strided_slice %362 {offsets = [0, 2, 0], sizes = [2, 1, 256], strides = [1, 1, 1]} : vector<2x4x256xf32> to vector<2x1x256xf32>
    %379 = vector.broadcast %377 : vector<1x4x1xf32> to vector<2x4x256xf32>
    %380 = vector.broadcast %378 : vector<2x1x256xf32> to vector<2x4x256xf32>
    %381 = arith.mulf %379, %380 : vector<2x4x256xf32>
    %382 = arith.addf %375, %381 : vector<2x4x256xf32>
    %383 = vector.extract_strided_slice %4 {offsets = [0, 3], sizes = [4, 1], strides = [1, 1]} : vector<4x36xf32> to vector<4x1xf32>
    %384 = vector.shape_cast %383 : vector<4x1xf32> to vector<1x4x1xf32>
    %385 = vector.extract_strided_slice %362 {offsets = [0, 3, 0], sizes = [2, 1, 256], strides = [1, 1, 1]} : vector<2x4x256xf32> to vector<2x1x256xf32>
    %386 = vector.broadcast %384 : vector<1x4x1xf32> to vector<2x4x256xf32>
    %387 = vector.broadcast %385 : vector<2x1x256xf32> to vector<2x4x256xf32>
    %388 = arith.mulf %386, %387 : vector<2x4x256xf32>
    %389 = arith.addf %382, %388 : vector<2x4x256xf32>
    %390 = vector.extract_strided_slice %356 {offsets = [0, 0, 224], sizes = [2, 4, 32], strides = [1, 1, 1]} : vector<2x4x256xf32> to vector<2x4x32xf32>
    %391 = vector.extract_strided_slice %356 {offsets = [0, 0, 0], sizes = [2, 4, 224], strides = [1, 1, 1]} : vector<2x4x256xf32> to vector<2x4x224xf32>
    %392 = tpu.concatenate %390, %391 in 2 : vector<2x4x32xf32>, vector<2x4x224xf32> -> vector<2x4x256xf32>
    %393 = vector.shape_cast %40 : vector<1x256xf32> to vector<1x1x256xf32>
    %394 = vector.broadcast %393 : vector<1x1x256xf32> to vector<2x4x256xf32>
    %395 = arith.mulf %392, %394 : vector<2x4x256xf32>
    %396 = vector.extract_strided_slice %4 {offsets = [0, 4], sizes = [4, 1], strides = [1, 1]} : vector<4x36xf32> to vector<4x1xf32>
    %397 = vector.shape_cast %396 : vector<4x1xf32> to vector<1x4x1xf32>
    %398 = vector.extract_strided_slice %395 {offsets = [0, 0, 0], sizes = [2, 1, 256], strides = [1, 1, 1]} : vector<2x4x256xf32> to vector<2x1x256xf32>
    %399 = vector.broadcast %397 : vector<1x4x1xf32> to vector<2x4x256xf32>
    %400 = vector.broadcast %398 : vector<2x1x256xf32> to vector<2x4x256xf32>
    %401 = arith.mulf %399, %400 : vector<2x4x256xf32>
    %402 = arith.addf %389, %401 : vector<2x4x256xf32>
    %403 = vector.extract_strided_slice %4 {offsets = [0, 5], sizes = [4, 1], strides = [1, 1]} : vector<4x36xf32> to vector<4x1xf32>
    %404 = vector.shape_cast %403 : vector<4x1xf32> to vector<1x4x1xf32>
    %405 = vector.extract_strided_slice %395 {offsets = [0, 1, 0], sizes = [2, 1, 256], strides = [1, 1, 1]} : vector<2x4x256xf32> to vector<2x1x256xf32>
    %406 = vector.broadcast %404 : vector<1x4x1xf32> to vector<2x4x256xf32>
    %407 = vector.broadcast %405 : vector<2x1x256xf32> to vector<2x4x256xf32>
    %408 = arith.mulf %406, %407 : vector<2x4x256xf32>
    %409 = arith.addf %402, %408 : vector<2x4x256xf32>
    %410 = vector.extract_strided_slice %4 {offsets = [0, 6], sizes = [4, 1], strides = [1, 1]} : vector<4x36xf32> to vector<4x1xf32>
    %411 = vector.shape_cast %410 : vector<4x1xf32> to vector<1x4x1xf32>
    %412 = vector.extract_strided_slice %395 {offsets = [0, 2, 0], sizes = [2, 1, 256], strides = [1, 1, 1]} : vector<2x4x256xf32> to vector<2x1x256xf32>
    %413 = vector.broadcast %411 : vector<1x4x1xf32> to vector<2x4x256xf32>
    %414 = vector.broadcast %412 : vector<2x1x256xf32> to vector<2x4x256xf32>
    %415 = arith.mulf %413, %414 : vector<2x4x256xf32>
    %416 = arith.addf %409, %415 : vector<2x4x256xf32>
    %417 = vector.extract_strided_slice %4 {offsets = [0, 7], sizes = [4, 1], strides = [1, 1]} : vector<4x36xf32> to vector<4x1xf32>
    %418 = vector.shape_cast %417 : vector<4x1xf32> to vector<1x4x1xf32>
    %419 = vector.extract_strided_slice %395 {offsets = [0, 3, 0], sizes = [2, 1, 256], strides = [1, 1, 1]} : vector<2x4x256xf32> to vector<2x1x256xf32>
    %420 = vector.broadcast %418 : vector<1x4x1xf32> to vector<2x4x256xf32>
    %421 = vector.broadcast %419 : vector<2x1x256xf32> to vector<2x4x256xf32>
    %422 = arith.mulf %420, %421 : vector<2x4x256xf32>
    %423 = arith.addf %416, %422 : vector<2x4x256xf32>
    %424 = vector.extract_strided_slice %356 {offsets = [0, 0, 226], sizes = [2, 4, 30], strides = [1, 1, 1]} : vector<2x4x256xf32> to vector<2x4x30xf32>
    %425 = vector.extract_strided_slice %356 {offsets = [0, 0, 0], sizes = [2, 4, 226], strides = [1, 1, 1]} : vector<2x4x256xf32> to vector<2x4x226xf32>
    %426 = tpu.concatenate %424, %425 in 2 : vector<2x4x30xf32>, vector<2x4x226xf32> -> vector<2x4x256xf32>
    %427 = vector.shape_cast %42 : vector<1x256xf32> to vector<1x1x256xf32>
    %428 = vector.broadcast %427 : vector<1x1x256xf32> to vector<2x4x256xf32>
    %429 = arith.mulf %426, %428 : vector<2x4x256xf32>
    %430 = vector.extract_strided_slice %4 {offsets = [0, 8], sizes = [4, 1], strides = [1, 1]} : vector<4x36xf32> to vector<4x1xf32>
    %431 = vector.shape_cast %430 : vector<4x1xf32> to vector<1x4x1xf32>
    %432 = vector.extract_strided_slice %429 {offsets = [0, 0, 0], sizes = [2, 1, 256], strides = [1, 1, 1]} : vector<2x4x256xf32> to vector<2x1x256xf32>
    %433 = vector.broadcast %431 : vector<1x4x1xf32> to vector<2x4x256xf32>
    %434 = vector.broadcast %432 : vector<2x1x256xf32> to vector<2x4x256xf32>
    %435 = arith.mulf %433, %434 : vector<2x4x256xf32>
    %436 = arith.addf %423, %435 : vector<2x4x256xf32>
    %437 = vector.extract_strided_slice %4 {offsets = [0, 9], sizes = [4, 1], strides = [1, 1]} : vector<4x36xf32> to vector<4x1xf32>
    %438 = vector.shape_cast %437 : vector<4x1xf32> to vector<1x4x1xf32>
    %439 = vector.extract_strided_slice %429 {offsets = [0, 1, 0], sizes = [2, 1, 256], strides = [1, 1, 1]} : vector<2x4x256xf32> to vector<2x1x256xf32>
    %440 = vector.broadcast %438 : vector<1x4x1xf32> to vector<2x4x256xf32>
    %441 = vector.broadcast %439 : vector<2x1x256xf32> to vector<2x4x256xf32>
    %442 = arith.mulf %440, %441 : vector<2x4x256xf32>
    %443 = arith.addf %436, %442 : vector<2x4x256xf32>
    %444 = vector.extract_strided_slice %4 {offsets = [0, 10], sizes = [4, 1], strides = [1, 1]} : vector<4x36xf32> to vector<4x1xf32>
    %445 = vector.shape_cast %444 : vector<4x1xf32> to vector<1x4x1xf32>
    %446 = vector.extract_strided_slice %429 {offsets = [0, 2, 0], sizes = [2, 1, 256], strides = [1, 1, 1]} : vector<2x4x256xf32> to vector<2x1x256xf32>
    %447 = vector.broadcast %445 : vector<1x4x1xf32> to vector<2x4x256xf32>
    %448 = vector.broadcast %446 : vector<2x1x256xf32> to vector<2x4x256xf32>
    %449 = arith.mulf %447, %448 : vector<2x4x256xf32>
    %450 = arith.addf %443, %449 : vector<2x4x256xf32>
    %451 = vector.extract_strided_slice %4 {offsets = [0, 11], sizes = [4, 1], strides = [1, 1]} : vector<4x36xf32> to vector<4x1xf32>
    %452 = vector.shape_cast %451 : vector<4x1xf32> to vector<1x4x1xf32>
    %453 = vector.extract_strided_slice %429 {offsets = [0, 3, 0], sizes = [2, 1, 256], strides = [1, 1, 1]} : vector<2x4x256xf32> to vector<2x1x256xf32>
    %454 = vector.broadcast %452 : vector<1x4x1xf32> to vector<2x4x256xf32>
    %455 = vector.broadcast %453 : vector<2x1x256xf32> to vector<2x4x256xf32>
    %456 = arith.mulf %454, %455 : vector<2x4x256xf32>
    %457 = arith.addf %450, %456 : vector<2x4x256xf32>
    %458 = vector.extract_strided_slice %356 {offsets = [0, 0, 254], sizes = [2, 4, 2], strides = [1, 1, 1]} : vector<2x4x256xf32> to vector<2x4x2xf32>
    %459 = vector.extract_strided_slice %356 {offsets = [0, 0, 0], sizes = [2, 4, 254], strides = [1, 1, 1]} : vector<2x4x256xf32> to vector<2x4x254xf32>
    %460 = tpu.concatenate %458, %459 in 2 : vector<2x4x2xf32>, vector<2x4x254xf32> -> vector<2x4x256xf32>
    %461 = vector.shape_cast %44 : vector<1x256xf32> to vector<1x1x256xf32>
    %462 = vector.broadcast %461 : vector<1x1x256xf32> to vector<2x4x256xf32>
    %463 = arith.mulf %460, %462 : vector<2x4x256xf32>
    %464 = vector.extract_strided_slice %4 {offsets = [0, 12], sizes = [4, 1], strides = [1, 1]} : vector<4x36xf32> to vector<4x1xf32>
    %465 = vector.shape_cast %464 : vector<4x1xf32> to vector<1x4x1xf32>
    %466 = vector.extract_strided_slice %463 {offsets = [0, 0, 0], sizes = [2, 1, 256], strides = [1, 1, 1]} : vector<2x4x256xf32> to vector<2x1x256xf32>
    %467 = vector.broadcast %465 : vector<1x4x1xf32> to vector<2x4x256xf32>
    %468 = vector.broadcast %466 : vector<2x1x256xf32> to vector<2x4x256xf32>
    %469 = arith.mulf %467, %468 : vector<2x4x256xf32>
    %470 = arith.addf %457, %469 : vector<2x4x256xf32>
    %471 = vector.extract_strided_slice %4 {offsets = [0, 13], sizes = [4, 1], strides = [1, 1]} : vector<4x36xf32> to vector<4x1xf32>
    %472 = vector.shape_cast %471 : vector<4x1xf32> to vector<1x4x1xf32>
    %473 = vector.extract_strided_slice %463 {offsets = [0, 1, 0], sizes = [2, 1, 256], strides = [1, 1, 1]} : vector<2x4x256xf32> to vector<2x1x256xf32>
    %474 = vector.broadcast %472 : vector<1x4x1xf32> to vector<2x4x256xf32>
    %475 = vector.broadcast %473 : vector<2x1x256xf32> to vector<2x4x256xf32>
    %476 = arith.mulf %474, %475 : vector<2x4x256xf32>
    %477 = arith.addf %470, %476 : vector<2x4x256xf32>
    %478 = vector.extract_strided_slice %4 {offsets = [0, 14], sizes = [4, 1], strides = [1, 1]} : vector<4x36xf32> to vector<4x1xf32>
    %479 = vector.shape_cast %478 : vector<4x1xf32> to vector<1x4x1xf32>
    %480 = vector.extract_strided_slice %463 {offsets = [0, 2, 0], sizes = [2, 1, 256], strides = [1, 1, 1]} : vector<2x4x256xf32> to vector<2x1x256xf32>
    %481 = vector.broadcast %479 : vector<1x4x1xf32> to vector<2x4x256xf32>
    %482 = vector.broadcast %480 : vector<2x1x256xf32> to vector<2x4x256xf32>
    %483 = arith.mulf %481, %482 : vector<2x4x256xf32>
    %484 = arith.addf %477, %483 : vector<2x4x256xf32>
    %485 = vector.extract_strided_slice %4 {offsets = [0, 15], sizes = [4, 1], strides = [1, 1]} : vector<4x36xf32> to vector<4x1xf32>
    %486 = vector.shape_cast %485 : vector<4x1xf32> to vector<1x4x1xf32>
    %487 = vector.extract_strided_slice %463 {offsets = [0, 3, 0], sizes = [2, 1, 256], strides = [1, 1, 1]} : vector<2x4x256xf32> to vector<2x1x256xf32>
    %488 = vector.broadcast %486 : vector<1x4x1xf32> to vector<2x4x256xf32>
    %489 = vector.broadcast %487 : vector<2x1x256xf32> to vector<2x4x256xf32>
    %490 = arith.mulf %488, %489 : vector<2x4x256xf32>
    %491 = arith.addf %484, %490 : vector<2x4x256xf32>
    %492 = vector.extract_strided_slice %4 {offsets = [0, 16], sizes = [4, 1], strides = [1, 1]} : vector<4x36xf32> to vector<4x1xf32>
    %493 = vector.shape_cast %492 : vector<4x1xf32> to vector<1x4x1xf32>
    %494 = vector.extract_strided_slice %356 {offsets = [0, 0, 0], sizes = [2, 1, 256], strides = [1, 1, 1]} : vector<2x4x256xf32> to vector<2x1x256xf32>
    %495 = vector.broadcast %493 : vector<1x4x1xf32> to vector<2x4x256xf32>
    %496 = vector.broadcast %494 : vector<2x1x256xf32> to vector<2x4x256xf32>
    %497 = arith.mulf %495, %496 : vector<2x4x256xf32>
    %498 = arith.addf %491, %497 : vector<2x4x256xf32>
    %499 = vector.extract_strided_slice %4 {offsets = [0, 17], sizes = [4, 1], strides = [1, 1]} : vector<4x36xf32> to vector<4x1xf32>
    %500 = vector.shape_cast %499 : vector<4x1xf32> to vector<1x4x1xf32>
    %501 = vector.extract_strided_slice %356 {offsets = [0, 1, 0], sizes = [2, 1, 256], strides = [1, 1, 1]} : vector<2x4x256xf32> to vector<2x1x256xf32>
    %502 = vector.broadcast %500 : vector<1x4x1xf32> to vector<2x4x256xf32>
    %503 = vector.broadcast %501 : vector<2x1x256xf32> to vector<2x4x256xf32>
    %504 = arith.mulf %502, %503 : vector<2x4x256xf32>
    %505 = arith.addf %498, %504 : vector<2x4x256xf32>
    %506 = vector.extract_strided_slice %4 {offsets = [0, 18], sizes = [4, 1], strides = [1, 1]} : vector<4x36xf32> to vector<4x1xf32>
    %507 = vector.shape_cast %506 : vector<4x1xf32> to vector<1x4x1xf32>
    %508 = vector.extract_strided_slice %356 {offsets = [0, 2, 0], sizes = [2, 1, 256], strides = [1, 1, 1]} : vector<2x4x256xf32> to vector<2x1x256xf32>
    %509 = vector.broadcast %507 : vector<1x4x1xf32> to vector<2x4x256xf32>
    %510 = vector.broadcast %508 : vector<2x1x256xf32> to vector<2x4x256xf32>
    %511 = arith.mulf %509, %510 : vector<2x4x256xf32>
    %512 = arith.addf %505, %511 : vector<2x4x256xf32>
    %513 = vector.extract_strided_slice %4 {offsets = [0, 19], sizes = [4, 1], strides = [1, 1]} : vector<4x36xf32> to vector<4x1xf32>
    %514 = vector.shape_cast %513 : vector<4x1xf32> to vector<1x4x1xf32>
    %515 = vector.extract_strided_slice %356 {offsets = [0, 3, 0], sizes = [2, 1, 256], strides = [1, 1, 1]} : vector<2x4x256xf32> to vector<2x1x256xf32>
    %516 = vector.broadcast %514 : vector<1x4x1xf32> to vector<2x4x256xf32>
    %517 = vector.broadcast %515 : vector<2x1x256xf32> to vector<2x4x256xf32>
    %518 = arith.mulf %516, %517 : vector<2x4x256xf32>
    %519 = arith.addf %512, %518 : vector<2x4x256xf32>
    %520 = vector.extract_strided_slice %356 {offsets = [0, 0, 2], sizes = [2, 4, 254], strides = [1, 1, 1]} : vector<2x4x256xf32> to vector<2x4x254xf32>
    %521 = vector.extract_strided_slice %356 {offsets = [0, 0, 0], sizes = [2, 4, 2], strides = [1, 1, 1]} : vector<2x4x256xf32> to vector<2x4x2xf32>
    %522 = tpu.concatenate %520, %521 in 2 : vector<2x4x254xf32>, vector<2x4x2xf32> -> vector<2x4x256xf32>
    %523 = vector.shape_cast %46 : vector<1x256xf32> to vector<1x1x256xf32>
    %524 = vector.broadcast %523 : vector<1x1x256xf32> to vector<2x4x256xf32>
    %525 = arith.mulf %522, %524 : vector<2x4x256xf32>
    %526 = vector.extract_strided_slice %4 {offsets = [0, 20], sizes = [4, 1], strides = [1, 1]} : vector<4x36xf32> to vector<4x1xf32>
    %527 = vector.shape_cast %526 : vector<4x1xf32> to vector<1x4x1xf32>
    %528 = vector.extract_strided_slice %525 {offsets = [0, 0, 0], sizes = [2, 1, 256], strides = [1, 1, 1]} : vector<2x4x256xf32> to vector<2x1x256xf32>
    %529 = vector.broadcast %527 : vector<1x4x1xf32> to vector<2x4x256xf32>
    %530 = vector.broadcast %528 : vector<2x1x256xf32> to vector<2x4x256xf32>
    %531 = arith.mulf %529, %530 : vector<2x4x256xf32>
    %532 = arith.addf %519, %531 : vector<2x4x256xf32>
    %533 = vector.extract_strided_slice %4 {offsets = [0, 21], sizes = [4, 1], strides = [1, 1]} : vector<4x36xf32> to vector<4x1xf32>
    %534 = vector.shape_cast %533 : vector<4x1xf32> to vector<1x4x1xf32>
    %535 = vector.extract_strided_slice %525 {offsets = [0, 1, 0], sizes = [2, 1, 256], strides = [1, 1, 1]} : vector<2x4x256xf32> to vector<2x1x256xf32>
    %536 = vector.broadcast %534 : vector<1x4x1xf32> to vector<2x4x256xf32>
    %537 = vector.broadcast %535 : vector<2x1x256xf32> to vector<2x4x256xf32>
    %538 = arith.mulf %536, %537 : vector<2x4x256xf32>
    %539 = arith.addf %532, %538 : vector<2x4x256xf32>
    %540 = vector.extract_strided_slice %4 {offsets = [0, 22], sizes = [4, 1], strides = [1, 1]} : vector<4x36xf32> to vector<4x1xf32>
    %541 = vector.shape_cast %540 : vector<4x1xf32> to vector<1x4x1xf32>
    %542 = vector.extract_strided_slice %525 {offsets = [0, 2, 0], sizes = [2, 1, 256], strides = [1, 1, 1]} : vector<2x4x256xf32> to vector<2x1x256xf32>
    %543 = vector.broadcast %541 : vector<1x4x1xf32> to vector<2x4x256xf32>
    %544 = vector.broadcast %542 : vector<2x1x256xf32> to vector<2x4x256xf32>
    %545 = arith.mulf %543, %544 : vector<2x4x256xf32>
    %546 = arith.addf %539, %545 : vector<2x4x256xf32>
    %547 = vector.extract_strided_slice %4 {offsets = [0, 23], sizes = [4, 1], strides = [1, 1]} : vector<4x36xf32> to vector<4x1xf32>
    %548 = vector.shape_cast %547 : vector<4x1xf32> to vector<1x4x1xf32>
    %549 = vector.extract_strided_slice %525 {offsets = [0, 3, 0], sizes = [2, 1, 256], strides = [1, 1, 1]} : vector<2x4x256xf32> to vector<2x1x256xf32>
    %550 = vector.broadcast %548 : vector<1x4x1xf32> to vector<2x4x256xf32>
    %551 = vector.broadcast %549 : vector<2x1x256xf32> to vector<2x4x256xf32>
    %552 = arith.mulf %550, %551 : vector<2x4x256xf32>
    %553 = arith.addf %546, %552 : vector<2x4x256xf32>
    %554 = vector.extract_strided_slice %356 {offsets = [0, 0, 30], sizes = [2, 4, 226], strides = [1, 1, 1]} : vector<2x4x256xf32> to vector<2x4x226xf32>
    %555 = vector.extract_strided_slice %356 {offsets = [0, 0, 0], sizes = [2, 4, 30], strides = [1, 1, 1]} : vector<2x4x256xf32> to vector<2x4x30xf32>
    %556 = tpu.concatenate %554, %555 in 2 : vector<2x4x226xf32>, vector<2x4x30xf32> -> vector<2x4x256xf32>
    %557 = vector.shape_cast %48 : vector<1x256xf32> to vector<1x1x256xf32>
    %558 = vector.broadcast %557 : vector<1x1x256xf32> to vector<2x4x256xf32>
    %559 = arith.mulf %556, %558 : vector<2x4x256xf32>
    %560 = vector.extract_strided_slice %4 {offsets = [0, 24], sizes = [4, 1], strides = [1, 1]} : vector<4x36xf32> to vector<4x1xf32>
    %561 = vector.shape_cast %560 : vector<4x1xf32> to vector<1x4x1xf32>
    %562 = vector.extract_strided_slice %559 {offsets = [0, 0, 0], sizes = [2, 1, 256], strides = [1, 1, 1]} : vector<2x4x256xf32> to vector<2x1x256xf32>
    %563 = vector.broadcast %561 : vector<1x4x1xf32> to vector<2x4x256xf32>
    %564 = vector.broadcast %562 : vector<2x1x256xf32> to vector<2x4x256xf32>
    %565 = arith.mulf %563, %564 : vector<2x4x256xf32>
    %566 = arith.addf %553, %565 : vector<2x4x256xf32>
    %567 = vector.extract_strided_slice %4 {offsets = [0, 25], sizes = [4, 1], strides = [1, 1]} : vector<4x36xf32> to vector<4x1xf32>
    %568 = vector.shape_cast %567 : vector<4x1xf32> to vector<1x4x1xf32>
    %569 = vector.extract_strided_slice %559 {offsets = [0, 1, 0], sizes = [2, 1, 256], strides = [1, 1, 1]} : vector<2x4x256xf32> to vector<2x1x256xf32>
    %570 = vector.broadcast %568 : vector<1x4x1xf32> to vector<2x4x256xf32>
    %571 = vector.broadcast %569 : vector<2x1x256xf32> to vector<2x4x256xf32>
    %572 = arith.mulf %570, %571 : vector<2x4x256xf32>
    %573 = arith.addf %566, %572 : vector<2x4x256xf32>
    %574 = vector.extract_strided_slice %4 {offsets = [0, 26], sizes = [4, 1], strides = [1, 1]} : vector<4x36xf32> to vector<4x1xf32>
    %575 = vector.shape_cast %574 : vector<4x1xf32> to vector<1x4x1xf32>
    %576 = vector.extract_strided_slice %559 {offsets = [0, 2, 0], sizes = [2, 1, 256], strides = [1, 1, 1]} : vector<2x4x256xf32> to vector<2x1x256xf32>
    %577 = vector.broadcast %575 : vector<1x4x1xf32> to vector<2x4x256xf32>
    %578 = vector.broadcast %576 : vector<2x1x256xf32> to vector<2x4x256xf32>
    %579 = arith.mulf %577, %578 : vector<2x4x256xf32>
    %580 = arith.addf %573, %579 : vector<2x4x256xf32>
    %581 = vector.extract_strided_slice %4 {offsets = [0, 27], sizes = [4, 1], strides = [1, 1]} : vector<4x36xf32> to vector<4x1xf32>
    %582 = vector.shape_cast %581 : vector<4x1xf32> to vector<1x4x1xf32>
    %583 = vector.extract_strided_slice %559 {offsets = [0, 3, 0], sizes = [2, 1, 256], strides = [1, 1, 1]} : vector<2x4x256xf32> to vector<2x1x256xf32>
    %584 = vector.broadcast %582 : vector<1x4x1xf32> to vector<2x4x256xf32>
    %585 = vector.broadcast %583 : vector<2x1x256xf32> to vector<2x4x256xf32>
    %586 = arith.mulf %584, %585 : vector<2x4x256xf32>
    %587 = arith.addf %580, %586 : vector<2x4x256xf32>
    %588 = vector.extract_strided_slice %356 {offsets = [0, 0, 32], sizes = [2, 4, 224], strides = [1, 1, 1]} : vector<2x4x256xf32> to vector<2x4x224xf32>
    %589 = vector.extract_strided_slice %356 {offsets = [0, 0, 0], sizes = [2, 4, 32], strides = [1, 1, 1]} : vector<2x4x256xf32> to vector<2x4x32xf32>
    %590 = tpu.concatenate %588, %589 in 2 : vector<2x4x224xf32>, vector<2x4x32xf32> -> vector<2x4x256xf32>
    %591 = vector.shape_cast %50 : vector<1x256xf32> to vector<1x1x256xf32>
    %592 = vector.broadcast %591 : vector<1x1x256xf32> to vector<2x4x256xf32>
    %593 = arith.mulf %590, %592 : vector<2x4x256xf32>
    %594 = vector.extract_strided_slice %4 {offsets = [0, 28], sizes = [4, 1], strides = [1, 1]} : vector<4x36xf32> to vector<4x1xf32>
    %595 = vector.shape_cast %594 : vector<4x1xf32> to vector<1x4x1xf32>
    %596 = vector.extract_strided_slice %593 {offsets = [0, 0, 0], sizes = [2, 1, 256], strides = [1, 1, 1]} : vector<2x4x256xf32> to vector<2x1x256xf32>
    %597 = vector.broadcast %595 : vector<1x4x1xf32> to vector<2x4x256xf32>
    %598 = vector.broadcast %596 : vector<2x1x256xf32> to vector<2x4x256xf32>
    %599 = arith.mulf %597, %598 : vector<2x4x256xf32>
    %600 = arith.addf %587, %599 : vector<2x4x256xf32>
    %601 = vector.extract_strided_slice %4 {offsets = [0, 29], sizes = [4, 1], strides = [1, 1]} : vector<4x36xf32> to vector<4x1xf32>
    %602 = vector.shape_cast %601 : vector<4x1xf32> to vector<1x4x1xf32>
    %603 = vector.extract_strided_slice %593 {offsets = [0, 1, 0], sizes = [2, 1, 256], strides = [1, 1, 1]} : vector<2x4x256xf32> to vector<2x1x256xf32>
    %604 = vector.broadcast %602 : vector<1x4x1xf32> to vector<2x4x256xf32>
    %605 = vector.broadcast %603 : vector<2x1x256xf32> to vector<2x4x256xf32>
    %606 = arith.mulf %604, %605 : vector<2x4x256xf32>
    %607 = arith.addf %600, %606 : vector<2x4x256xf32>
    %608 = vector.extract_strided_slice %4 {offsets = [0, 30], sizes = [4, 1], strides = [1, 1]} : vector<4x36xf32> to vector<4x1xf32>
    %609 = vector.shape_cast %608 : vector<4x1xf32> to vector<1x4x1xf32>
    %610 = vector.extract_strided_slice %593 {offsets = [0, 2, 0], sizes = [2, 1, 256], strides = [1, 1, 1]} : vector<2x4x256xf32> to vector<2x1x256xf32>
    %611 = vector.broadcast %609 : vector<1x4x1xf32> to vector<2x4x256xf32>
    %612 = vector.broadcast %610 : vector<2x1x256xf32> to vector<2x4x256xf32>
    %613 = arith.mulf %611, %612 : vector<2x4x256xf32>
    %614 = arith.addf %607, %613 : vector<2x4x256xf32>
    %615 = vector.extract_strided_slice %4 {offsets = [0, 31], sizes = [4, 1], strides = [1, 1]} : vector<4x36xf32> to vector<4x1xf32>
    %616 = vector.shape_cast %615 : vector<4x1xf32> to vector<1x4x1xf32>
    %617 = vector.extract_strided_slice %593 {offsets = [0, 3, 0], sizes = [2, 1, 256], strides = [1, 1, 1]} : vector<2x4x256xf32> to vector<2x1x256xf32>
    %618 = vector.broadcast %616 : vector<1x4x1xf32> to vector<2x4x256xf32>
    %619 = vector.broadcast %617 : vector<2x1x256xf32> to vector<2x4x256xf32>
    %620 = arith.mulf %618, %619 : vector<2x4x256xf32>
    %621 = arith.addf %614, %620 : vector<2x4x256xf32>
    %622 = vector.extract_strided_slice %356 {offsets = [0, 0, 34], sizes = [2, 4, 222], strides = [1, 1, 1]} : vector<2x4x256xf32> to vector<2x4x222xf32>
    %623 = vector.extract_strided_slice %356 {offsets = [0, 0, 0], sizes = [2, 4, 34], strides = [1, 1, 1]} : vector<2x4x256xf32> to vector<2x4x34xf32>
    %624 = tpu.concatenate %622, %623 in 2 : vector<2x4x222xf32>, vector<2x4x34xf32> -> vector<2x4x256xf32>
    %625 = vector.shape_cast %52 : vector<1x256xf32> to vector<1x1x256xf32>
    %626 = vector.broadcast %625 : vector<1x1x256xf32> to vector<2x4x256xf32>
    %627 = arith.mulf %624, %626 : vector<2x4x256xf32>
    %628 = vector.extract_strided_slice %4 {offsets = [0, 32], sizes = [4, 1], strides = [1, 1]} : vector<4x36xf32> to vector<4x1xf32>
    %629 = vector.shape_cast %628 : vector<4x1xf32> to vector<1x4x1xf32>
    %630 = vector.extract_strided_slice %627 {offsets = [0, 0, 0], sizes = [2, 1, 256], strides = [1, 1, 1]} : vector<2x4x256xf32> to vector<2x1x256xf32>
    %631 = vector.broadcast %629 : vector<1x4x1xf32> to vector<2x4x256xf32>
    %632 = vector.broadcast %630 : vector<2x1x256xf32> to vector<2x4x256xf32>
    %633 = arith.mulf %631, %632 : vector<2x4x256xf32>
    %634 = arith.addf %621, %633 : vector<2x4x256xf32>
    %635 = vector.extract_strided_slice %4 {offsets = [0, 33], sizes = [4, 1], strides = [1, 1]} : vector<4x36xf32> to vector<4x1xf32>
    %636 = vector.shape_cast %635 : vector<4x1xf32> to vector<1x4x1xf32>
    %637 = vector.extract_strided_slice %627 {offsets = [0, 1, 0], sizes = [2, 1, 256], strides = [1, 1, 1]} : vector<2x4x256xf32> to vector<2x1x256xf32>
    %638 = vector.broadcast %636 : vector<1x4x1xf32> to vector<2x4x256xf32>
    %639 = vector.broadcast %637 : vector<2x1x256xf32> to vector<2x4x256xf32>
    %640 = arith.mulf %638, %639 : vector<2x4x256xf32>
    %641 = arith.addf %634, %640 : vector<2x4x256xf32>
    %642 = vector.extract_strided_slice %4 {offsets = [0, 34], sizes = [4, 1], strides = [1, 1]} : vector<4x36xf32> to vector<4x1xf32>
    %643 = vector.shape_cast %642 : vector<4x1xf32> to vector<1x4x1xf32>
    %644 = vector.extract_strided_slice %627 {offsets = [0, 2, 0], sizes = [2, 1, 256], strides = [1, 1, 1]} : vector<2x4x256xf32> to vector<2x1x256xf32>
    %645 = vector.broadcast %643 : vector<1x4x1xf32> to vector<2x4x256xf32>
    %646 = vector.broadcast %644 : vector<2x1x256xf32> to vector<2x4x256xf32>
    %647 = arith.mulf %645, %646 : vector<2x4x256xf32>
    %648 = arith.addf %641, %647 : vector<2x4x256xf32>
    %649 = vector.extract_strided_slice %4 {offsets = [0, 35], sizes = [4, 1], strides = [1, 1]} : vector<4x36xf32> to vector<4x1xf32>
    %650 = vector.shape_cast %649 : vector<4x1xf32> to vector<1x4x1xf32>
    %651 = vector.extract_strided_slice %627 {offsets = [0, 3, 0], sizes = [2, 1, 256], strides = [1, 1, 1]} : vector<2x4x256xf32> to vector<2x1x256xf32>
    %652 = vector.broadcast %650 : vector<1x4x1xf32> to vector<2x4x256xf32>
    %653 = vector.broadcast %651 : vector<2x1x256xf32> to vector<2x4x256xf32>
    %654 = arith.mulf %652, %653 : vector<2x4x256xf32>
    %655 = arith.addf %648, %654 : vector<2x4x256xf32>
    %656 = vector.broadcast %14 : vector<1x4x1xf32> to vector<2x4x256xf32>
    %657 = arith.addf %655, %656 : vector<2x4x256xf32>
    %658 = arith.addf %0, %657 : vector<2x4x256xf32>
    %659 = vector.extract_strided_slice %658 {offsets = [0, 0, 239], sizes = [2, 4, 17], strides = [1, 1, 1]} : vector<2x4x256xf32> to vector<2x4x17xf32>
    %660 = vector.extract_strided_slice %658 {offsets = [0, 0, 0], sizes = [2, 4, 239], strides = [1, 1, 1]} : vector<2x4x256xf32> to vector<2x4x239xf32>
    %661 = tpu.concatenate %659, %660 in 2 : vector<2x4x17xf32>, vector<2x4x239xf32> -> vector<2x4x256xf32>
    %662 = vector.shape_cast %22 : vector<1x256xf32> to vector<1x1x256xf32>
    %663 = vector.broadcast %662 : vector<1x1x256xf32> to vector<2x4x256xf32>
    %664 = arith.mulf %661, %663 : vector<2x4x256xf32>
    %665 = vector.extract_strided_slice %6 {offsets = [0, 0], sizes = [4, 1], strides = [1, 1]} : vector<4x36xf32> to vector<4x1xf32>
    %666 = vector.shape_cast %665 : vector<4x1xf32> to vector<1x4x1xf32>
    %667 = vector.extract_strided_slice %664 {offsets = [0, 0, 0], sizes = [2, 1, 256], strides = [1, 1, 1]} : vector<2x4x256xf32> to vector<2x1x256xf32>
    %668 = vector.broadcast %666 : vector<1x4x1xf32> to vector<2x4x256xf32>
    %669 = vector.broadcast %667 : vector<2x1x256xf32> to vector<2x4x256xf32>
    %670 = arith.mulf %668, %669 : vector<2x4x256xf32>
    %671 = vector.extract_strided_slice %6 {offsets = [0, 1], sizes = [4, 1], strides = [1, 1]} : vector<4x36xf32> to vector<4x1xf32>
    %672 = vector.shape_cast %671 : vector<4x1xf32> to vector<1x4x1xf32>
    %673 = vector.extract_strided_slice %664 {offsets = [0, 1, 0], sizes = [2, 1, 256], strides = [1, 1, 1]} : vector<2x4x256xf32> to vector<2x1x256xf32>
    %674 = vector.broadcast %672 : vector<1x4x1xf32> to vector<2x4x256xf32>
    %675 = vector.broadcast %673 : vector<2x1x256xf32> to vector<2x4x256xf32>
    %676 = arith.mulf %674, %675 : vector<2x4x256xf32>
    %677 = arith.addf %670, %676 : vector<2x4x256xf32>
    %678 = vector.extract_strided_slice %6 {offsets = [0, 2], sizes = [4, 1], strides = [1, 1]} : vector<4x36xf32> to vector<4x1xf32>
    %679 = vector.shape_cast %678 : vector<4x1xf32> to vector<1x4x1xf32>
    %680 = vector.extract_strided_slice %664 {offsets = [0, 2, 0], sizes = [2, 1, 256], strides = [1, 1, 1]} : vector<2x4x256xf32> to vector<2x1x256xf32>
    %681 = vector.broadcast %679 : vector<1x4x1xf32> to vector<2x4x256xf32>
    %682 = vector.broadcast %680 : vector<2x1x256xf32> to vector<2x4x256xf32>
    %683 = arith.mulf %681, %682 : vector<2x4x256xf32>
    %684 = arith.addf %677, %683 : vector<2x4x256xf32>
    %685 = vector.extract_strided_slice %6 {offsets = [0, 3], sizes = [4, 1], strides = [1, 1]} : vector<4x36xf32> to vector<4x1xf32>
    %686 = vector.shape_cast %685 : vector<4x1xf32> to vector<1x4x1xf32>
    %687 = vector.extract_strided_slice %664 {offsets = [0, 3, 0], sizes = [2, 1, 256], strides = [1, 1, 1]} : vector<2x4x256xf32> to vector<2x1x256xf32>
    %688 = vector.broadcast %686 : vector<1x4x1xf32> to vector<2x4x256xf32>
    %689 = vector.broadcast %687 : vector<2x1x256xf32> to vector<2x4x256xf32>
    %690 = arith.mulf %688, %689 : vector<2x4x256xf32>
    %691 = arith.addf %684, %690 : vector<2x4x256xf32>
    %692 = vector.extract_strided_slice %658 {offsets = [0, 0, 240], sizes = [2, 4, 16], strides = [1, 1, 1]} : vector<2x4x256xf32> to vector<2x4x16xf32>
    %693 = vector.extract_strided_slice %658 {offsets = [0, 0, 0], sizes = [2, 4, 240], strides = [1, 1, 1]} : vector<2x4x256xf32> to vector<2x4x240xf32>
    %694 = tpu.concatenate %692, %693 in 2 : vector<2x4x16xf32>, vector<2x4x240xf32> -> vector<2x4x256xf32>
    %695 = vector.shape_cast %24 : vector<1x256xf32> to vector<1x1x256xf32>
    %696 = vector.broadcast %695 : vector<1x1x256xf32> to vector<2x4x256xf32>
    %697 = arith.mulf %694, %696 : vector<2x4x256xf32>
    %698 = vector.extract_strided_slice %6 {offsets = [0, 4], sizes = [4, 1], strides = [1, 1]} : vector<4x36xf32> to vector<4x1xf32>
    %699 = vector.shape_cast %698 : vector<4x1xf32> to vector<1x4x1xf32>
    %700 = vector.extract_strided_slice %697 {offsets = [0, 0, 0], sizes = [2, 1, 256], strides = [1, 1, 1]} : vector<2x4x256xf32> to vector<2x1x256xf32>
    %701 = vector.broadcast %699 : vector<1x4x1xf32> to vector<2x4x256xf32>
    %702 = vector.broadcast %700 : vector<2x1x256xf32> to vector<2x4x256xf32>
    %703 = arith.mulf %701, %702 : vector<2x4x256xf32>
    %704 = arith.addf %691, %703 : vector<2x4x256xf32>
    %705 = vector.extract_strided_slice %6 {offsets = [0, 5], sizes = [4, 1], strides = [1, 1]} : vector<4x36xf32> to vector<4x1xf32>
    %706 = vector.shape_cast %705 : vector<4x1xf32> to vector<1x4x1xf32>
    %707 = vector.extract_strided_slice %697 {offsets = [0, 1, 0], sizes = [2, 1, 256], strides = [1, 1, 1]} : vector<2x4x256xf32> to vector<2x1x256xf32>
    %708 = vector.broadcast %706 : vector<1x4x1xf32> to vector<2x4x256xf32>
    %709 = vector.broadcast %707 : vector<2x1x256xf32> to vector<2x4x256xf32>
    %710 = arith.mulf %708, %709 : vector<2x4x256xf32>
    %711 = arith.addf %704, %710 : vector<2x4x256xf32>
    %712 = vector.extract_strided_slice %6 {offsets = [0, 6], sizes = [4, 1], strides = [1, 1]} : vector<4x36xf32> to vector<4x1xf32>
    %713 = vector.shape_cast %712 : vector<4x1xf32> to vector<1x4x1xf32>
    %714 = vector.extract_strided_slice %697 {offsets = [0, 2, 0], sizes = [2, 1, 256], strides = [1, 1, 1]} : vector<2x4x256xf32> to vector<2x1x256xf32>
    %715 = vector.broadcast %713 : vector<1x4x1xf32> to vector<2x4x256xf32>
    %716 = vector.broadcast %714 : vector<2x1x256xf32> to vector<2x4x256xf32>
    %717 = arith.mulf %715, %716 : vector<2x4x256xf32>
    %718 = arith.addf %711, %717 : vector<2x4x256xf32>
    %719 = vector.extract_strided_slice %6 {offsets = [0, 7], sizes = [4, 1], strides = [1, 1]} : vector<4x36xf32> to vector<4x1xf32>
    %720 = vector.shape_cast %719 : vector<4x1xf32> to vector<1x4x1xf32>
    %721 = vector.extract_strided_slice %697 {offsets = [0, 3, 0], sizes = [2, 1, 256], strides = [1, 1, 1]} : vector<2x4x256xf32> to vector<2x1x256xf32>
    %722 = vector.broadcast %720 : vector<1x4x1xf32> to vector<2x4x256xf32>
    %723 = vector.broadcast %721 : vector<2x1x256xf32> to vector<2x4x256xf32>
    %724 = arith.mulf %722, %723 : vector<2x4x256xf32>
    %725 = arith.addf %718, %724 : vector<2x4x256xf32>
    %726 = vector.extract_strided_slice %658 {offsets = [0, 0, 241], sizes = [2, 4, 15], strides = [1, 1, 1]} : vector<2x4x256xf32> to vector<2x4x15xf32>
    %727 = vector.extract_strided_slice %658 {offsets = [0, 0, 0], sizes = [2, 4, 241], strides = [1, 1, 1]} : vector<2x4x256xf32> to vector<2x4x241xf32>
    %728 = tpu.concatenate %726, %727 in 2 : vector<2x4x15xf32>, vector<2x4x241xf32> -> vector<2x4x256xf32>
    %729 = vector.shape_cast %26 : vector<1x256xf32> to vector<1x1x256xf32>
    %730 = vector.broadcast %729 : vector<1x1x256xf32> to vector<2x4x256xf32>
    %731 = arith.mulf %728, %730 : vector<2x4x256xf32>
    %732 = vector.extract_strided_slice %6 {offsets = [0, 8], sizes = [4, 1], strides = [1, 1]} : vector<4x36xf32> to vector<4x1xf32>
    %733 = vector.shape_cast %732 : vector<4x1xf32> to vector<1x4x1xf32>
    %734 = vector.extract_strided_slice %731 {offsets = [0, 0, 0], sizes = [2, 1, 256], strides = [1, 1, 1]} : vector<2x4x256xf32> to vector<2x1x256xf32>
    %735 = vector.broadcast %733 : vector<1x4x1xf32> to vector<2x4x256xf32>
    %736 = vector.broadcast %734 : vector<2x1x256xf32> to vector<2x4x256xf32>
    %737 = arith.mulf %735, %736 : vector<2x4x256xf32>
    %738 = arith.addf %725, %737 : vector<2x4x256xf32>
    %739 = vector.extract_strided_slice %6 {offsets = [0, 9], sizes = [4, 1], strides = [1, 1]} : vector<4x36xf32> to vector<4x1xf32>
    %740 = vector.shape_cast %739 : vector<4x1xf32> to vector<1x4x1xf32>
    %741 = vector.extract_strided_slice %731 {offsets = [0, 1, 0], sizes = [2, 1, 256], strides = [1, 1, 1]} : vector<2x4x256xf32> to vector<2x1x256xf32>
    %742 = vector.broadcast %740 : vector<1x4x1xf32> to vector<2x4x256xf32>
    %743 = vector.broadcast %741 : vector<2x1x256xf32> to vector<2x4x256xf32>
    %744 = arith.mulf %742, %743 : vector<2x4x256xf32>
    %745 = arith.addf %738, %744 : vector<2x4x256xf32>
    %746 = vector.extract_strided_slice %6 {offsets = [0, 10], sizes = [4, 1], strides = [1, 1]} : vector<4x36xf32> to vector<4x1xf32>
    %747 = vector.shape_cast %746 : vector<4x1xf32> to vector<1x4x1xf32>
    %748 = vector.extract_strided_slice %731 {offsets = [0, 2, 0], sizes = [2, 1, 256], strides = [1, 1, 1]} : vector<2x4x256xf32> to vector<2x1x256xf32>
    %749 = vector.broadcast %747 : vector<1x4x1xf32> to vector<2x4x256xf32>
    %750 = vector.broadcast %748 : vector<2x1x256xf32> to vector<2x4x256xf32>
    %751 = arith.mulf %749, %750 : vector<2x4x256xf32>
    %752 = arith.addf %745, %751 : vector<2x4x256xf32>
    %753 = vector.extract_strided_slice %6 {offsets = [0, 11], sizes = [4, 1], strides = [1, 1]} : vector<4x36xf32> to vector<4x1xf32>
    %754 = vector.shape_cast %753 : vector<4x1xf32> to vector<1x4x1xf32>
    %755 = vector.extract_strided_slice %731 {offsets = [0, 3, 0], sizes = [2, 1, 256], strides = [1, 1, 1]} : vector<2x4x256xf32> to vector<2x1x256xf32>
    %756 = vector.broadcast %754 : vector<1x4x1xf32> to vector<2x4x256xf32>
    %757 = vector.broadcast %755 : vector<2x1x256xf32> to vector<2x4x256xf32>
    %758 = arith.mulf %756, %757 : vector<2x4x256xf32>
    %759 = arith.addf %752, %758 : vector<2x4x256xf32>
    %760 = vector.extract_strided_slice %658 {offsets = [0, 0, 255], sizes = [2, 4, 1], strides = [1, 1, 1]} : vector<2x4x256xf32> to vector<2x4x1xf32>
    %761 = vector.extract_strided_slice %658 {offsets = [0, 0, 0], sizes = [2, 4, 255], strides = [1, 1, 1]} : vector<2x4x256xf32> to vector<2x4x255xf32>
    %762 = tpu.concatenate %760, %761 in 2 : vector<2x4x1xf32>, vector<2x4x255xf32> -> vector<2x4x256xf32>
    %763 = vector.shape_cast %28 : vector<1x256xf32> to vector<1x1x256xf32>
    %764 = vector.broadcast %763 : vector<1x1x256xf32> to vector<2x4x256xf32>
    %765 = arith.mulf %762, %764 : vector<2x4x256xf32>
    %766 = vector.extract_strided_slice %6 {offsets = [0, 12], sizes = [4, 1], strides = [1, 1]} : vector<4x36xf32> to vector<4x1xf32>
    %767 = vector.shape_cast %766 : vector<4x1xf32> to vector<1x4x1xf32>
    %768 = vector.extract_strided_slice %765 {offsets = [0, 0, 0], sizes = [2, 1, 256], strides = [1, 1, 1]} : vector<2x4x256xf32> to vector<2x1x256xf32>
    %769 = vector.broadcast %767 : vector<1x4x1xf32> to vector<2x4x256xf32>
    %770 = vector.broadcast %768 : vector<2x1x256xf32> to vector<2x4x256xf32>
    %771 = arith.mulf %769, %770 : vector<2x4x256xf32>
    %772 = arith.addf %759, %771 : vector<2x4x256xf32>
    %773 = vector.extract_strided_slice %6 {offsets = [0, 13], sizes = [4, 1], strides = [1, 1]} : vector<4x36xf32> to vector<4x1xf32>
    %774 = vector.shape_cast %773 : vector<4x1xf32> to vector<1x4x1xf32>
    %775 = vector.extract_strided_slice %765 {offsets = [0, 1, 0], sizes = [2, 1, 256], strides = [1, 1, 1]} : vector<2x4x256xf32> to vector<2x1x256xf32>
    %776 = vector.broadcast %774 : vector<1x4x1xf32> to vector<2x4x256xf32>
    %777 = vector.broadcast %775 : vector<2x1x256xf32> to vector<2x4x256xf32>
    %778 = arith.mulf %776, %777 : vector<2x4x256xf32>
    %779 = arith.addf %772, %778 : vector<2x4x256xf32>
    %780 = vector.extract_strided_slice %6 {offsets = [0, 14], sizes = [4, 1], strides = [1, 1]} : vector<4x36xf32> to vector<4x1xf32>
    %781 = vector.shape_cast %780 : vector<4x1xf32> to vector<1x4x1xf32>
    %782 = vector.extract_strided_slice %765 {offsets = [0, 2, 0], sizes = [2, 1, 256], strides = [1, 1, 1]} : vector<2x4x256xf32> to vector<2x1x256xf32>
    %783 = vector.broadcast %781 : vector<1x4x1xf32> to vector<2x4x256xf32>
    %784 = vector.broadcast %782 : vector<2x1x256xf32> to vector<2x4x256xf32>
    %785 = arith.mulf %783, %784 : vector<2x4x256xf32>
    %786 = arith.addf %779, %785 : vector<2x4x256xf32>
    %787 = vector.extract_strided_slice %6 {offsets = [0, 15], sizes = [4, 1], strides = [1, 1]} : vector<4x36xf32> to vector<4x1xf32>
    %788 = vector.shape_cast %787 : vector<4x1xf32> to vector<1x4x1xf32>
    %789 = vector.extract_strided_slice %765 {offsets = [0, 3, 0], sizes = [2, 1, 256], strides = [1, 1, 1]} : vector<2x4x256xf32> to vector<2x1x256xf32>
    %790 = vector.broadcast %788 : vector<1x4x1xf32> to vector<2x4x256xf32>
    %791 = vector.broadcast %789 : vector<2x1x256xf32> to vector<2x4x256xf32>
    %792 = arith.mulf %790, %791 : vector<2x4x256xf32>
    %793 = arith.addf %786, %792 : vector<2x4x256xf32>
    %794 = vector.extract_strided_slice %6 {offsets = [0, 16], sizes = [4, 1], strides = [1, 1]} : vector<4x36xf32> to vector<4x1xf32>
    %795 = vector.shape_cast %794 : vector<4x1xf32> to vector<1x4x1xf32>
    %796 = vector.extract_strided_slice %658 {offsets = [0, 0, 0], sizes = [2, 1, 256], strides = [1, 1, 1]} : vector<2x4x256xf32> to vector<2x1x256xf32>
    %797 = vector.broadcast %795 : vector<1x4x1xf32> to vector<2x4x256xf32>
    %798 = vector.broadcast %796 : vector<2x1x256xf32> to vector<2x4x256xf32>
    %799 = arith.mulf %797, %798 : vector<2x4x256xf32>
    %800 = arith.addf %793, %799 : vector<2x4x256xf32>
    %801 = vector.extract_strided_slice %6 {offsets = [0, 17], sizes = [4, 1], strides = [1, 1]} : vector<4x36xf32> to vector<4x1xf32>
    %802 = vector.shape_cast %801 : vector<4x1xf32> to vector<1x4x1xf32>
    %803 = vector.extract_strided_slice %658 {offsets = [0, 1, 0], sizes = [2, 1, 256], strides = [1, 1, 1]} : vector<2x4x256xf32> to vector<2x1x256xf32>
    %804 = vector.broadcast %802 : vector<1x4x1xf32> to vector<2x4x256xf32>
    %805 = vector.broadcast %803 : vector<2x1x256xf32> to vector<2x4x256xf32>
    %806 = arith.mulf %804, %805 : vector<2x4x256xf32>
    %807 = arith.addf %800, %806 : vector<2x4x256xf32>
    %808 = vector.extract_strided_slice %6 {offsets = [0, 18], sizes = [4, 1], strides = [1, 1]} : vector<4x36xf32> to vector<4x1xf32>
    %809 = vector.shape_cast %808 : vector<4x1xf32> to vector<1x4x1xf32>
    %810 = vector.extract_strided_slice %658 {offsets = [0, 2, 0], sizes = [2, 1, 256], strides = [1, 1, 1]} : vector<2x4x256xf32> to vector<2x1x256xf32>
    %811 = vector.broadcast %809 : vector<1x4x1xf32> to vector<2x4x256xf32>
    %812 = vector.broadcast %810 : vector<2x1x256xf32> to vector<2x4x256xf32>
    %813 = arith.mulf %811, %812 : vector<2x4x256xf32>
    %814 = arith.addf %807, %813 : vector<2x4x256xf32>
    %815 = vector.extract_strided_slice %6 {offsets = [0, 19], sizes = [4, 1], strides = [1, 1]} : vector<4x36xf32> to vector<4x1xf32>
    %816 = vector.shape_cast %815 : vector<4x1xf32> to vector<1x4x1xf32>
    %817 = vector.extract_strided_slice %658 {offsets = [0, 3, 0], sizes = [2, 1, 256], strides = [1, 1, 1]} : vector<2x4x256xf32> to vector<2x1x256xf32>
    %818 = vector.broadcast %816 : vector<1x4x1xf32> to vector<2x4x256xf32>
    %819 = vector.broadcast %817 : vector<2x1x256xf32> to vector<2x4x256xf32>
    %820 = arith.mulf %818, %819 : vector<2x4x256xf32>
    %821 = arith.addf %814, %820 : vector<2x4x256xf32>
    %822 = vector.extract_strided_slice %658 {offsets = [0, 0, 1], sizes = [2, 4, 255], strides = [1, 1, 1]} : vector<2x4x256xf32> to vector<2x4x255xf32>
    %823 = vector.extract_strided_slice %658 {offsets = [0, 0, 0], sizes = [2, 4, 1], strides = [1, 1, 1]} : vector<2x4x256xf32> to vector<2x4x1xf32>
    %824 = tpu.concatenate %822, %823 in 2 : vector<2x4x255xf32>, vector<2x4x1xf32> -> vector<2x4x256xf32>
    %825 = vector.shape_cast %30 : vector<1x256xf32> to vector<1x1x256xf32>
    %826 = vector.broadcast %825 : vector<1x1x256xf32> to vector<2x4x256xf32>
    %827 = arith.mulf %824, %826 : vector<2x4x256xf32>
    %828 = vector.extract_strided_slice %6 {offsets = [0, 20], sizes = [4, 1], strides = [1, 1]} : vector<4x36xf32> to vector<4x1xf32>
    %829 = vector.shape_cast %828 : vector<4x1xf32> to vector<1x4x1xf32>
    %830 = vector.extract_strided_slice %827 {offsets = [0, 0, 0], sizes = [2, 1, 256], strides = [1, 1, 1]} : vector<2x4x256xf32> to vector<2x1x256xf32>
    %831 = vector.broadcast %829 : vector<1x4x1xf32> to vector<2x4x256xf32>
    %832 = vector.broadcast %830 : vector<2x1x256xf32> to vector<2x4x256xf32>
    %833 = arith.mulf %831, %832 : vector<2x4x256xf32>
    %834 = arith.addf %821, %833 : vector<2x4x256xf32>
    %835 = vector.extract_strided_slice %6 {offsets = [0, 21], sizes = [4, 1], strides = [1, 1]} : vector<4x36xf32> to vector<4x1xf32>
    %836 = vector.shape_cast %835 : vector<4x1xf32> to vector<1x4x1xf32>
    %837 = vector.extract_strided_slice %827 {offsets = [0, 1, 0], sizes = [2, 1, 256], strides = [1, 1, 1]} : vector<2x4x256xf32> to vector<2x1x256xf32>
    %838 = vector.broadcast %836 : vector<1x4x1xf32> to vector<2x4x256xf32>
    %839 = vector.broadcast %837 : vector<2x1x256xf32> to vector<2x4x256xf32>
    %840 = arith.mulf %838, %839 : vector<2x4x256xf32>
    %841 = arith.addf %834, %840 : vector<2x4x256xf32>
    %842 = vector.extract_strided_slice %6 {offsets = [0, 22], sizes = [4, 1], strides = [1, 1]} : vector<4x36xf32> to vector<4x1xf32>
    %843 = vector.shape_cast %842 : vector<4x1xf32> to vector<1x4x1xf32>
    %844 = vector.extract_strided_slice %827 {offsets = [0, 2, 0], sizes = [2, 1, 256], strides = [1, 1, 1]} : vector<2x4x256xf32> to vector<2x1x256xf32>
    %845 = vector.broadcast %843 : vector<1x4x1xf32> to vector<2x4x256xf32>
    %846 = vector.broadcast %844 : vector<2x1x256xf32> to vector<2x4x256xf32>
    %847 = arith.mulf %845, %846 : vector<2x4x256xf32>
    %848 = arith.addf %841, %847 : vector<2x4x256xf32>
    %849 = vector.extract_strided_slice %6 {offsets = [0, 23], sizes = [4, 1], strides = [1, 1]} : vector<4x36xf32> to vector<4x1xf32>
    %850 = vector.shape_cast %849 : vector<4x1xf32> to vector<1x4x1xf32>
    %851 = vector.extract_strided_slice %827 {offsets = [0, 3, 0], sizes = [2, 1, 256], strides = [1, 1, 1]} : vector<2x4x256xf32> to vector<2x1x256xf32>
    %852 = vector.broadcast %850 : vector<1x4x1xf32> to vector<2x4x256xf32>
    %853 = vector.broadcast %851 : vector<2x1x256xf32> to vector<2x4x256xf32>
    %854 = arith.mulf %852, %853 : vector<2x4x256xf32>
    %855 = arith.addf %848, %854 : vector<2x4x256xf32>
    %856 = vector.extract_strided_slice %658 {offsets = [0, 0, 15], sizes = [2, 4, 241], strides = [1, 1, 1]} : vector<2x4x256xf32> to vector<2x4x241xf32>
    %857 = vector.extract_strided_slice %658 {offsets = [0, 0, 0], sizes = [2, 4, 15], strides = [1, 1, 1]} : vector<2x4x256xf32> to vector<2x4x15xf32>
    %858 = tpu.concatenate %856, %857 in 2 : vector<2x4x241xf32>, vector<2x4x15xf32> -> vector<2x4x256xf32>
    %859 = vector.shape_cast %32 : vector<1x256xf32> to vector<1x1x256xf32>
    %860 = vector.broadcast %859 : vector<1x1x256xf32> to vector<2x4x256xf32>
    %861 = arith.mulf %858, %860 : vector<2x4x256xf32>
    %862 = vector.extract_strided_slice %6 {offsets = [0, 24], sizes = [4, 1], strides = [1, 1]} : vector<4x36xf32> to vector<4x1xf32>
    %863 = vector.shape_cast %862 : vector<4x1xf32> to vector<1x4x1xf32>
    %864 = vector.extract_strided_slice %861 {offsets = [0, 0, 0], sizes = [2, 1, 256], strides = [1, 1, 1]} : vector<2x4x256xf32> to vector<2x1x256xf32>
    %865 = vector.broadcast %863 : vector<1x4x1xf32> to vector<2x4x256xf32>
    %866 = vector.broadcast %864 : vector<2x1x256xf32> to vector<2x4x256xf32>
    %867 = arith.mulf %865, %866 : vector<2x4x256xf32>
    %868 = arith.addf %855, %867 : vector<2x4x256xf32>
    %869 = vector.extract_strided_slice %6 {offsets = [0, 25], sizes = [4, 1], strides = [1, 1]} : vector<4x36xf32> to vector<4x1xf32>
    %870 = vector.shape_cast %869 : vector<4x1xf32> to vector<1x4x1xf32>
    %871 = vector.extract_strided_slice %861 {offsets = [0, 1, 0], sizes = [2, 1, 256], strides = [1, 1, 1]} : vector<2x4x256xf32> to vector<2x1x256xf32>
    %872 = vector.broadcast %870 : vector<1x4x1xf32> to vector<2x4x256xf32>
    %873 = vector.broadcast %871 : vector<2x1x256xf32> to vector<2x4x256xf32>
    %874 = arith.mulf %872, %873 : vector<2x4x256xf32>
    %875 = arith.addf %868, %874 : vector<2x4x256xf32>
    %876 = vector.extract_strided_slice %6 {offsets = [0, 26], sizes = [4, 1], strides = [1, 1]} : vector<4x36xf32> to vector<4x1xf32>
    %877 = vector.shape_cast %876 : vector<4x1xf32> to vector<1x4x1xf32>
    %878 = vector.extract_strided_slice %861 {offsets = [0, 2, 0], sizes = [2, 1, 256], strides = [1, 1, 1]} : vector<2x4x256xf32> to vector<2x1x256xf32>
    %879 = vector.broadcast %877 : vector<1x4x1xf32> to vector<2x4x256xf32>
    %880 = vector.broadcast %878 : vector<2x1x256xf32> to vector<2x4x256xf32>
    %881 = arith.mulf %879, %880 : vector<2x4x256xf32>
    %882 = arith.addf %875, %881 : vector<2x4x256xf32>
    %883 = vector.extract_strided_slice %6 {offsets = [0, 27], sizes = [4, 1], strides = [1, 1]} : vector<4x36xf32> to vector<4x1xf32>
    %884 = vector.shape_cast %883 : vector<4x1xf32> to vector<1x4x1xf32>
    %885 = vector.extract_strided_slice %861 {offsets = [0, 3, 0], sizes = [2, 1, 256], strides = [1, 1, 1]} : vector<2x4x256xf32> to vector<2x1x256xf32>
    %886 = vector.broadcast %884 : vector<1x4x1xf32> to vector<2x4x256xf32>
    %887 = vector.broadcast %885 : vector<2x1x256xf32> to vector<2x4x256xf32>
    %888 = arith.mulf %886, %887 : vector<2x4x256xf32>
    %889 = arith.addf %882, %888 : vector<2x4x256xf32>
    %890 = vector.extract_strided_slice %658 {offsets = [0, 0, 16], sizes = [2, 4, 240], strides = [1, 1, 1]} : vector<2x4x256xf32> to vector<2x4x240xf32>
    %891 = vector.extract_strided_slice %658 {offsets = [0, 0, 0], sizes = [2, 4, 16], strides = [1, 1, 1]} : vector<2x4x256xf32> to vector<2x4x16xf32>
    %892 = tpu.concatenate %890, %891 in 2 : vector<2x4x240xf32>, vector<2x4x16xf32> -> vector<2x4x256xf32>
    %893 = vector.shape_cast %34 : vector<1x256xf32> to vector<1x1x256xf32>
    %894 = vector.broadcast %893 : vector<1x1x256xf32> to vector<2x4x256xf32>
    %895 = arith.mulf %892, %894 : vector<2x4x256xf32>
    %896 = vector.extract_strided_slice %6 {offsets = [0, 28], sizes = [4, 1], strides = [1, 1]} : vector<4x36xf32> to vector<4x1xf32>
    %897 = vector.shape_cast %896 : vector<4x1xf32> to vector<1x4x1xf32>
    %898 = vector.extract_strided_slice %895 {offsets = [0, 0, 0], sizes = [2, 1, 256], strides = [1, 1, 1]} : vector<2x4x256xf32> to vector<2x1x256xf32>
    %899 = vector.broadcast %897 : vector<1x4x1xf32> to vector<2x4x256xf32>
    %900 = vector.broadcast %898 : vector<2x1x256xf32> to vector<2x4x256xf32>
    %901 = arith.mulf %899, %900 : vector<2x4x256xf32>
    %902 = arith.addf %889, %901 : vector<2x4x256xf32>
    %903 = vector.extract_strided_slice %6 {offsets = [0, 29], sizes = [4, 1], strides = [1, 1]} : vector<4x36xf32> to vector<4x1xf32>
    %904 = vector.shape_cast %903 : vector<4x1xf32> to vector<1x4x1xf32>
    %905 = vector.extract_strided_slice %895 {offsets = [0, 1, 0], sizes = [2, 1, 256], strides = [1, 1, 1]} : vector<2x4x256xf32> to vector<2x1x256xf32>
    %906 = vector.broadcast %904 : vector<1x4x1xf32> to vector<2x4x256xf32>
    %907 = vector.broadcast %905 : vector<2x1x256xf32> to vector<2x4x256xf32>
    %908 = arith.mulf %906, %907 : vector<2x4x256xf32>
    %909 = arith.addf %902, %908 : vector<2x4x256xf32>
    %910 = vector.extract_strided_slice %6 {offsets = [0, 30], sizes = [4, 1], strides = [1, 1]} : vector<4x36xf32> to vector<4x1xf32>
    %911 = vector.shape_cast %910 : vector<4x1xf32> to vector<1x4x1xf32>
    %912 = vector.extract_strided_slice %895 {offsets = [0, 2, 0], sizes = [2, 1, 256], strides = [1, 1, 1]} : vector<2x4x256xf32> to vector<2x1x256xf32>
    %913 = vector.broadcast %911 : vector<1x4x1xf32> to vector<2x4x256xf32>
    %914 = vector.broadcast %912 : vector<2x1x256xf32> to vector<2x4x256xf32>
    %915 = arith.mulf %913, %914 : vector<2x4x256xf32>
    %916 = arith.addf %909, %915 : vector<2x4x256xf32>
    %917 = vector.extract_strided_slice %6 {offsets = [0, 31], sizes = [4, 1], strides = [1, 1]} : vector<4x36xf32> to vector<4x1xf32>
    %918 = vector.shape_cast %917 : vector<4x1xf32> to vector<1x4x1xf32>
    %919 = vector.extract_strided_slice %895 {offsets = [0, 3, 0], sizes = [2, 1, 256], strides = [1, 1, 1]} : vector<2x4x256xf32> to vector<2x1x256xf32>
    %920 = vector.broadcast %918 : vector<1x4x1xf32> to vector<2x4x256xf32>
    %921 = vector.broadcast %919 : vector<2x1x256xf32> to vector<2x4x256xf32>
    %922 = arith.mulf %920, %921 : vector<2x4x256xf32>
    %923 = arith.addf %916, %922 : vector<2x4x256xf32>
    %924 = vector.extract_strided_slice %658 {offsets = [0, 0, 17], sizes = [2, 4, 239], strides = [1, 1, 1]} : vector<2x4x256xf32> to vector<2x4x239xf32>
    %925 = vector.extract_strided_slice %658 {offsets = [0, 0, 0], sizes = [2, 4, 17], strides = [1, 1, 1]} : vector<2x4x256xf32> to vector<2x4x17xf32>
    %926 = tpu.concatenate %924, %925 in 2 : vector<2x4x239xf32>, vector<2x4x17xf32> -> vector<2x4x256xf32>
    %927 = vector.shape_cast %36 : vector<1x256xf32> to vector<1x1x256xf32>
    %928 = vector.broadcast %927 : vector<1x1x256xf32> to vector<2x4x256xf32>
    %929 = arith.mulf %926, %928 : vector<2x4x256xf32>
    %930 = vector.extract_strided_slice %6 {offsets = [0, 32], sizes = [4, 1], strides = [1, 1]} : vector<4x36xf32> to vector<4x1xf32>
    %931 = vector.shape_cast %930 : vector<4x1xf32> to vector<1x4x1xf32>
    %932 = vector.extract_strided_slice %929 {offsets = [0, 0, 0], sizes = [2, 1, 256], strides = [1, 1, 1]} : vector<2x4x256xf32> to vector<2x1x256xf32>
    %933 = vector.broadcast %931 : vector<1x4x1xf32> to vector<2x4x256xf32>
    %934 = vector.broadcast %932 : vector<2x1x256xf32> to vector<2x4x256xf32>
    %935 = arith.mulf %933, %934 : vector<2x4x256xf32>
    %936 = arith.addf %923, %935 : vector<2x4x256xf32>
    %937 = vector.extract_strided_slice %6 {offsets = [0, 33], sizes = [4, 1], strides = [1, 1]} : vector<4x36xf32> to vector<4x1xf32>
    %938 = vector.shape_cast %937 : vector<4x1xf32> to vector<1x4x1xf32>
    %939 = vector.extract_strided_slice %929 {offsets = [0, 1, 0], sizes = [2, 1, 256], strides = [1, 1, 1]} : vector<2x4x256xf32> to vector<2x1x256xf32>
    %940 = vector.broadcast %938 : vector<1x4x1xf32> to vector<2x4x256xf32>
    %941 = vector.broadcast %939 : vector<2x1x256xf32> to vector<2x4x256xf32>
    %942 = arith.mulf %940, %941 : vector<2x4x256xf32>
    %943 = arith.addf %936, %942 : vector<2x4x256xf32>
    %944 = vector.extract_strided_slice %6 {offsets = [0, 34], sizes = [4, 1], strides = [1, 1]} : vector<4x36xf32> to vector<4x1xf32>
    %945 = vector.shape_cast %944 : vector<4x1xf32> to vector<1x4x1xf32>
    %946 = vector.extract_strided_slice %929 {offsets = [0, 2, 0], sizes = [2, 1, 256], strides = [1, 1, 1]} : vector<2x4x256xf32> to vector<2x1x256xf32>
    %947 = vector.broadcast %945 : vector<1x4x1xf32> to vector<2x4x256xf32>
    %948 = vector.broadcast %946 : vector<2x1x256xf32> to vector<2x4x256xf32>
    %949 = arith.mulf %947, %948 : vector<2x4x256xf32>
    %950 = arith.addf %943, %949 : vector<2x4x256xf32>
    %951 = vector.extract_strided_slice %6 {offsets = [0, 35], sizes = [4, 1], strides = [1, 1]} : vector<4x36xf32> to vector<4x1xf32>
    %952 = vector.shape_cast %951 : vector<4x1xf32> to vector<1x4x1xf32>
    %953 = vector.extract_strided_slice %929 {offsets = [0, 3, 0], sizes = [2, 1, 256], strides = [1, 1, 1]} : vector<2x4x256xf32> to vector<2x1x256xf32>
    %954 = vector.broadcast %952 : vector<1x4x1xf32> to vector<2x4x256xf32>
    %955 = vector.broadcast %953 : vector<2x1x256xf32> to vector<2x4x256xf32>
    %956 = arith.mulf %954, %955 : vector<2x4x256xf32>
    %957 = arith.addf %950, %956 : vector<2x4x256xf32>
    %958 = vector.broadcast %17 : vector<1x4x1xf32> to vector<2x4x256xf32>
    %959 = arith.addf %957, %958 : vector<2x4x256xf32>
    %cst_83 = arith.constant 1.000000e-01 : f32
    %960 = vector.broadcast %cst_83 : f32 to vector<2x4x256xf32>
    %961 = arith.mulf %960, %959 : vector<2x4x256xf32>
    %962 = arith.maximumf %959, %961 : vector<2x4x256xf32>
    %963 = vector.extract_strided_slice %962 {offsets = [0, 0, 222], sizes = [2, 4, 34], strides = [1, 1, 1]} : vector<2x4x256xf32> to vector<2x4x34xf32>
    %964 = vector.extract_strided_slice %962 {offsets = [0, 0, 0], sizes = [2, 4, 222], strides = [1, 1, 1]} : vector<2x4x256xf32> to vector<2x4x222xf32>
    %965 = tpu.concatenate %963, %964 in 2 : vector<2x4x34xf32>, vector<2x4x222xf32> -> vector<2x4x256xf32>
    %966 = vector.shape_cast %38 : vector<1x256xf32> to vector<1x1x256xf32>
    %967 = vector.broadcast %966 : vector<1x1x256xf32> to vector<2x4x256xf32>
    %968 = arith.mulf %965, %967 : vector<2x4x256xf32>
    %969 = vector.extract_strided_slice %8 {offsets = [0, 0], sizes = [4, 1], strides = [1, 1]} : vector<4x36xf32> to vector<4x1xf32>
    %970 = vector.shape_cast %969 : vector<4x1xf32> to vector<1x4x1xf32>
    %971 = vector.extract_strided_slice %968 {offsets = [0, 0, 0], sizes = [2, 1, 256], strides = [1, 1, 1]} : vector<2x4x256xf32> to vector<2x1x256xf32>
    %972 = vector.broadcast %970 : vector<1x4x1xf32> to vector<2x4x256xf32>
    %973 = vector.broadcast %971 : vector<2x1x256xf32> to vector<2x4x256xf32>
    %974 = arith.mulf %972, %973 : vector<2x4x256xf32>
    %975 = vector.extract_strided_slice %8 {offsets = [0, 1], sizes = [4, 1], strides = [1, 1]} : vector<4x36xf32> to vector<4x1xf32>
    %976 = vector.shape_cast %975 : vector<4x1xf32> to vector<1x4x1xf32>
    %977 = vector.extract_strided_slice %968 {offsets = [0, 1, 0], sizes = [2, 1, 256], strides = [1, 1, 1]} : vector<2x4x256xf32> to vector<2x1x256xf32>
    %978 = vector.broadcast %976 : vector<1x4x1xf32> to vector<2x4x256xf32>
    %979 = vector.broadcast %977 : vector<2x1x256xf32> to vector<2x4x256xf32>
    %980 = arith.mulf %978, %979 : vector<2x4x256xf32>
    %981 = arith.addf %974, %980 : vector<2x4x256xf32>
    %982 = vector.extract_strided_slice %8 {offsets = [0, 2], sizes = [4, 1], strides = [1, 1]} : vector<4x36xf32> to vector<4x1xf32>
    %983 = vector.shape_cast %982 : vector<4x1xf32> to vector<1x4x1xf32>
    %984 = vector.extract_strided_slice %968 {offsets = [0, 2, 0], sizes = [2, 1, 256], strides = [1, 1, 1]} : vector<2x4x256xf32> to vector<2x1x256xf32>
    %985 = vector.broadcast %983 : vector<1x4x1xf32> to vector<2x4x256xf32>
    %986 = vector.broadcast %984 : vector<2x1x256xf32> to vector<2x4x256xf32>
    %987 = arith.mulf %985, %986 : vector<2x4x256xf32>
    %988 = arith.addf %981, %987 : vector<2x4x256xf32>
    %989 = vector.extract_strided_slice %8 {offsets = [0, 3], sizes = [4, 1], strides = [1, 1]} : vector<4x36xf32> to vector<4x1xf32>
    %990 = vector.shape_cast %989 : vector<4x1xf32> to vector<1x4x1xf32>
    %991 = vector.extract_strided_slice %968 {offsets = [0, 3, 0], sizes = [2, 1, 256], strides = [1, 1, 1]} : vector<2x4x256xf32> to vector<2x1x256xf32>
    %992 = vector.broadcast %990 : vector<1x4x1xf32> to vector<2x4x256xf32>
    %993 = vector.broadcast %991 : vector<2x1x256xf32> to vector<2x4x256xf32>
    %994 = arith.mulf %992, %993 : vector<2x4x256xf32>
    %995 = arith.addf %988, %994 : vector<2x4x256xf32>
    %996 = vector.extract_strided_slice %962 {offsets = [0, 0, 224], sizes = [2, 4, 32], strides = [1, 1, 1]} : vector<2x4x256xf32> to vector<2x4x32xf32>
    %997 = vector.extract_strided_slice %962 {offsets = [0, 0, 0], sizes = [2, 4, 224], strides = [1, 1, 1]} : vector<2x4x256xf32> to vector<2x4x224xf32>
    %998 = tpu.concatenate %996, %997 in 2 : vector<2x4x32xf32>, vector<2x4x224xf32> -> vector<2x4x256xf32>
    %999 = vector.shape_cast %40 : vector<1x256xf32> to vector<1x1x256xf32>
    %1000 = vector.broadcast %999 : vector<1x1x256xf32> to vector<2x4x256xf32>
    %1001 = arith.mulf %998, %1000 : vector<2x4x256xf32>
    %1002 = vector.extract_strided_slice %8 {offsets = [0, 4], sizes = [4, 1], strides = [1, 1]} : vector<4x36xf32> to vector<4x1xf32>
    %1003 = vector.shape_cast %1002 : vector<4x1xf32> to vector<1x4x1xf32>
    %1004 = vector.extract_strided_slice %1001 {offsets = [0, 0, 0], sizes = [2, 1, 256], strides = [1, 1, 1]} : vector<2x4x256xf32> to vector<2x1x256xf32>
    %1005 = vector.broadcast %1003 : vector<1x4x1xf32> to vector<2x4x256xf32>
    %1006 = vector.broadcast %1004 : vector<2x1x256xf32> to vector<2x4x256xf32>
    %1007 = arith.mulf %1005, %1006 : vector<2x4x256xf32>
    %1008 = arith.addf %995, %1007 : vector<2x4x256xf32>
    %1009 = vector.extract_strided_slice %8 {offsets = [0, 5], sizes = [4, 1], strides = [1, 1]} : vector<4x36xf32> to vector<4x1xf32>
    %1010 = vector.shape_cast %1009 : vector<4x1xf32> to vector<1x4x1xf32>
    %1011 = vector.extract_strided_slice %1001 {offsets = [0, 1, 0], sizes = [2, 1, 256], strides = [1, 1, 1]} : vector<2x4x256xf32> to vector<2x1x256xf32>
    %1012 = vector.broadcast %1010 : vector<1x4x1xf32> to vector<2x4x256xf32>
    %1013 = vector.broadcast %1011 : vector<2x1x256xf32> to vector<2x4x256xf32>
    %1014 = arith.mulf %1012, %1013 : vector<2x4x256xf32>
    %1015 = arith.addf %1008, %1014 : vector<2x4x256xf32>
    %1016 = vector.extract_strided_slice %8 {offsets = [0, 6], sizes = [4, 1], strides = [1, 1]} : vector<4x36xf32> to vector<4x1xf32>
    %1017 = vector.shape_cast %1016 : vector<4x1xf32> to vector<1x4x1xf32>
    %1018 = vector.extract_strided_slice %1001 {offsets = [0, 2, 0], sizes = [2, 1, 256], strides = [1, 1, 1]} : vector<2x4x256xf32> to vector<2x1x256xf32>
    %1019 = vector.broadcast %1017 : vector<1x4x1xf32> to vector<2x4x256xf32>
    %1020 = vector.broadcast %1018 : vector<2x1x256xf32> to vector<2x4x256xf32>
    %1021 = arith.mulf %1019, %1020 : vector<2x4x256xf32>
    %1022 = arith.addf %1015, %1021 : vector<2x4x256xf32>
    %1023 = vector.extract_strided_slice %8 {offsets = [0, 7], sizes = [4, 1], strides = [1, 1]} : vector<4x36xf32> to vector<4x1xf32>
    %1024 = vector.shape_cast %1023 : vector<4x1xf32> to vector<1x4x1xf32>
    %1025 = vector.extract_strided_slice %1001 {offsets = [0, 3, 0], sizes = [2, 1, 256], strides = [1, 1, 1]} : vector<2x4x256xf32> to vector<2x1x256xf32>
    %1026 = vector.broadcast %1024 : vector<1x4x1xf32> to vector<2x4x256xf32>
    %1027 = vector.broadcast %1025 : vector<2x1x256xf32> to vector<2x4x256xf32>
    %1028 = arith.mulf %1026, %1027 : vector<2x4x256xf32>
    %1029 = arith.addf %1022, %1028 : vector<2x4x256xf32>
    %1030 = vector.extract_strided_slice %962 {offsets = [0, 0, 226], sizes = [2, 4, 30], strides = [1, 1, 1]} : vector<2x4x256xf32> to vector<2x4x30xf32>
    %1031 = vector.extract_strided_slice %962 {offsets = [0, 0, 0], sizes = [2, 4, 226], strides = [1, 1, 1]} : vector<2x4x256xf32> to vector<2x4x226xf32>
    %1032 = tpu.concatenate %1030, %1031 in 2 : vector<2x4x30xf32>, vector<2x4x226xf32> -> vector<2x4x256xf32>
    %1033 = vector.shape_cast %42 : vector<1x256xf32> to vector<1x1x256xf32>
    %1034 = vector.broadcast %1033 : vector<1x1x256xf32> to vector<2x4x256xf32>
    %1035 = arith.mulf %1032, %1034 : vector<2x4x256xf32>
    %1036 = vector.extract_strided_slice %8 {offsets = [0, 8], sizes = [4, 1], strides = [1, 1]} : vector<4x36xf32> to vector<4x1xf32>
    %1037 = vector.shape_cast %1036 : vector<4x1xf32> to vector<1x4x1xf32>
    %1038 = vector.extract_strided_slice %1035 {offsets = [0, 0, 0], sizes = [2, 1, 256], strides = [1, 1, 1]} : vector<2x4x256xf32> to vector<2x1x256xf32>
    %1039 = vector.broadcast %1037 : vector<1x4x1xf32> to vector<2x4x256xf32>
    %1040 = vector.broadcast %1038 : vector<2x1x256xf32> to vector<2x4x256xf32>
    %1041 = arith.mulf %1039, %1040 : vector<2x4x256xf32>
    %1042 = arith.addf %1029, %1041 : vector<2x4x256xf32>
    %1043 = vector.extract_strided_slice %8 {offsets = [0, 9], sizes = [4, 1], strides = [1, 1]} : vector<4x36xf32> to vector<4x1xf32>
    %1044 = vector.shape_cast %1043 : vector<4x1xf32> to vector<1x4x1xf32>
    %1045 = vector.extract_strided_slice %1035 {offsets = [0, 1, 0], sizes = [2, 1, 256], strides = [1, 1, 1]} : vector<2x4x256xf32> to vector<2x1x256xf32>
    %1046 = vector.broadcast %1044 : vector<1x4x1xf32> to vector<2x4x256xf32>
    %1047 = vector.broadcast %1045 : vector<2x1x256xf32> to vector<2x4x256xf32>
    %1048 = arith.mulf %1046, %1047 : vector<2x4x256xf32>
    %1049 = arith.addf %1042, %1048 : vector<2x4x256xf32>
    %1050 = vector.extract_strided_slice %8 {offsets = [0, 10], sizes = [4, 1], strides = [1, 1]} : vector<4x36xf32> to vector<4x1xf32>
    %1051 = vector.shape_cast %1050 : vector<4x1xf32> to vector<1x4x1xf32>
    %1052 = vector.extract_strided_slice %1035 {offsets = [0, 2, 0], sizes = [2, 1, 256], strides = [1, 1, 1]} : vector<2x4x256xf32> to vector<2x1x256xf32>
    %1053 = vector.broadcast %1051 : vector<1x4x1xf32> to vector<2x4x256xf32>
    %1054 = vector.broadcast %1052 : vector<2x1x256xf32> to vector<2x4x256xf32>
    %1055 = arith.mulf %1053, %1054 : vector<2x4x256xf32>
    %1056 = arith.addf %1049, %1055 : vector<2x4x256xf32>
    %1057 = vector.extract_strided_slice %8 {offsets = [0, 11], sizes = [4, 1], strides = [1, 1]} : vector<4x36xf32> to vector<4x1xf32>
    %1058 = vector.shape_cast %1057 : vector<4x1xf32> to vector<1x4x1xf32>
    %1059 = vector.extract_strided_slice %1035 {offsets = [0, 3, 0], sizes = [2, 1, 256], strides = [1, 1, 1]} : vector<2x4x256xf32> to vector<2x1x256xf32>
    %1060 = vector.broadcast %1058 : vector<1x4x1xf32> to vector<2x4x256xf32>
    %1061 = vector.broadcast %1059 : vector<2x1x256xf32> to vector<2x4x256xf32>
    %1062 = arith.mulf %1060, %1061 : vector<2x4x256xf32>
    %1063 = arith.addf %1056, %1062 : vector<2x4x256xf32>
    %1064 = vector.extract_strided_slice %962 {offsets = [0, 0, 254], sizes = [2, 4, 2], strides = [1, 1, 1]} : vector<2x4x256xf32> to vector<2x4x2xf32>
    %1065 = vector.extract_strided_slice %962 {offsets = [0, 0, 0], sizes = [2, 4, 254], strides = [1, 1, 1]} : vector<2x4x256xf32> to vector<2x4x254xf32>
    %1066 = tpu.concatenate %1064, %1065 in 2 : vector<2x4x2xf32>, vector<2x4x254xf32> -> vector<2x4x256xf32>
    %1067 = vector.shape_cast %44 : vector<1x256xf32> to vector<1x1x256xf32>
    %1068 = vector.broadcast %1067 : vector<1x1x256xf32> to vector<2x4x256xf32>
    %1069 = arith.mulf %1066, %1068 : vector<2x4x256xf32>
    %1070 = vector.extract_strided_slice %8 {offsets = [0, 12], sizes = [4, 1], strides = [1, 1]} : vector<4x36xf32> to vector<4x1xf32>
    %1071 = vector.shape_cast %1070 : vector<4x1xf32> to vector<1x4x1xf32>
    %1072 = vector.extract_strided_slice %1069 {offsets = [0, 0, 0], sizes = [2, 1, 256], strides = [1, 1, 1]} : vector<2x4x256xf32> to vector<2x1x256xf32>
    %1073 = vector.broadcast %1071 : vector<1x4x1xf32> to vector<2x4x256xf32>
    %1074 = vector.broadcast %1072 : vector<2x1x256xf32> to vector<2x4x256xf32>
    %1075 = arith.mulf %1073, %1074 : vector<2x4x256xf32>
    %1076 = arith.addf %1063, %1075 : vector<2x4x256xf32>
    %1077 = vector.extract_strided_slice %8 {offsets = [0, 13], sizes = [4, 1], strides = [1, 1]} : vector<4x36xf32> to vector<4x1xf32>
    %1078 = vector.shape_cast %1077 : vector<4x1xf32> to vector<1x4x1xf32>
    %1079 = vector.extract_strided_slice %1069 {offsets = [0, 1, 0], sizes = [2, 1, 256], strides = [1, 1, 1]} : vector<2x4x256xf32> to vector<2x1x256xf32>
    %1080 = vector.broadcast %1078 : vector<1x4x1xf32> to vector<2x4x256xf32>
    %1081 = vector.broadcast %1079 : vector<2x1x256xf32> to vector<2x4x256xf32>
    %1082 = arith.mulf %1080, %1081 : vector<2x4x256xf32>
    %1083 = arith.addf %1076, %1082 : vector<2x4x256xf32>
    %1084 = vector.extract_strided_slice %8 {offsets = [0, 14], sizes = [4, 1], strides = [1, 1]} : vector<4x36xf32> to vector<4x1xf32>
    %1085 = vector.shape_cast %1084 : vector<4x1xf32> to vector<1x4x1xf32>
    %1086 = vector.extract_strided_slice %1069 {offsets = [0, 2, 0], sizes = [2, 1, 256], strides = [1, 1, 1]} : vector<2x4x256xf32> to vector<2x1x256xf32>
    %1087 = vector.broadcast %1085 : vector<1x4x1xf32> to vector<2x4x256xf32>
    %1088 = vector.broadcast %1086 : vector<2x1x256xf32> to vector<2x4x256xf32>
    %1089 = arith.mulf %1087, %1088 : vector<2x4x256xf32>
    %1090 = arith.addf %1083, %1089 : vector<2x4x256xf32>
    %1091 = vector.extract_strided_slice %8 {offsets = [0, 15], sizes = [4, 1], strides = [1, 1]} : vector<4x36xf32> to vector<4x1xf32>
    %1092 = vector.shape_cast %1091 : vector<4x1xf32> to vector<1x4x1xf32>
    %1093 = vector.extract_strided_slice %1069 {offsets = [0, 3, 0], sizes = [2, 1, 256], strides = [1, 1, 1]} : vector<2x4x256xf32> to vector<2x1x256xf32>
    %1094 = vector.broadcast %1092 : vector<1x4x1xf32> to vector<2x4x256xf32>
    %1095 = vector.broadcast %1093 : vector<2x1x256xf32> to vector<2x4x256xf32>
    %1096 = arith.mulf %1094, %1095 : vector<2x4x256xf32>
    %1097 = arith.addf %1090, %1096 : vector<2x4x256xf32>
    %1098 = vector.extract_strided_slice %8 {offsets = [0, 16], sizes = [4, 1], strides = [1, 1]} : vector<4x36xf32> to vector<4x1xf32>
    %1099 = vector.shape_cast %1098 : vector<4x1xf32> to vector<1x4x1xf32>
    %1100 = vector.extract_strided_slice %962 {offsets = [0, 0, 0], sizes = [2, 1, 256], strides = [1, 1, 1]} : vector<2x4x256xf32> to vector<2x1x256xf32>
    %1101 = vector.broadcast %1099 : vector<1x4x1xf32> to vector<2x4x256xf32>
    %1102 = vector.broadcast %1100 : vector<2x1x256xf32> to vector<2x4x256xf32>
    %1103 = arith.mulf %1101, %1102 : vector<2x4x256xf32>
    %1104 = arith.addf %1097, %1103 : vector<2x4x256xf32>
    %1105 = vector.extract_strided_slice %8 {offsets = [0, 17], sizes = [4, 1], strides = [1, 1]} : vector<4x36xf32> to vector<4x1xf32>
    %1106 = vector.shape_cast %1105 : vector<4x1xf32> to vector<1x4x1xf32>
    %1107 = vector.extract_strided_slice %962 {offsets = [0, 1, 0], sizes = [2, 1, 256], strides = [1, 1, 1]} : vector<2x4x256xf32> to vector<2x1x256xf32>
    %1108 = vector.broadcast %1106 : vector<1x4x1xf32> to vector<2x4x256xf32>
    %1109 = vector.broadcast %1107 : vector<2x1x256xf32> to vector<2x4x256xf32>
    %1110 = arith.mulf %1108, %1109 : vector<2x4x256xf32>
    %1111 = arith.addf %1104, %1110 : vector<2x4x256xf32>
    %1112 = vector.extract_strided_slice %8 {offsets = [0, 18], sizes = [4, 1], strides = [1, 1]} : vector<4x36xf32> to vector<4x1xf32>
    %1113 = vector.shape_cast %1112 : vector<4x1xf32> to vector<1x4x1xf32>
    %1114 = vector.extract_strided_slice %962 {offsets = [0, 2, 0], sizes = [2, 1, 256], strides = [1, 1, 1]} : vector<2x4x256xf32> to vector<2x1x256xf32>
    %1115 = vector.broadcast %1113 : vector<1x4x1xf32> to vector<2x4x256xf32>
    %1116 = vector.broadcast %1114 : vector<2x1x256xf32> to vector<2x4x256xf32>
    %1117 = arith.mulf %1115, %1116 : vector<2x4x256xf32>
    %1118 = arith.addf %1111, %1117 : vector<2x4x256xf32>
    %1119 = vector.extract_strided_slice %8 {offsets = [0, 19], sizes = [4, 1], strides = [1, 1]} : vector<4x36xf32> to vector<4x1xf32>
    %1120 = vector.shape_cast %1119 : vector<4x1xf32> to vector<1x4x1xf32>
    %1121 = vector.extract_strided_slice %962 {offsets = [0, 3, 0], sizes = [2, 1, 256], strides = [1, 1, 1]} : vector<2x4x256xf32> to vector<2x1x256xf32>
    %1122 = vector.broadcast %1120 : vector<1x4x1xf32> to vector<2x4x256xf32>
    %1123 = vector.broadcast %1121 : vector<2x1x256xf32> to vector<2x4x256xf32>
    %1124 = arith.mulf %1122, %1123 : vector<2x4x256xf32>
    %1125 = arith.addf %1118, %1124 : vector<2x4x256xf32>
    %1126 = vector.extract_strided_slice %962 {offsets = [0, 0, 2], sizes = [2, 4, 254], strides = [1, 1, 1]} : vector<2x4x256xf32> to vector<2x4x254xf32>
    %1127 = vector.extract_strided_slice %962 {offsets = [0, 0, 0], sizes = [2, 4, 2], strides = [1, 1, 1]} : vector<2x4x256xf32> to vector<2x4x2xf32>
    %1128 = tpu.concatenate %1126, %1127 in 2 : vector<2x4x254xf32>, vector<2x4x2xf32> -> vector<2x4x256xf32>
    %1129 = vector.shape_cast %46 : vector<1x256xf32> to vector<1x1x256xf32>
    %1130 = vector.broadcast %1129 : vector<1x1x256xf32> to vector<2x4x256xf32>
    %1131 = arith.mulf %1128, %1130 : vector<2x4x256xf32>
    %1132 = vector.extract_strided_slice %8 {offsets = [0, 20], sizes = [4, 1], strides = [1, 1]} : vector<4x36xf32> to vector<4x1xf32>
    %1133 = vector.shape_cast %1132 : vector<4x1xf32> to vector<1x4x1xf32>
    %1134 = vector.extract_strided_slice %1131 {offsets = [0, 0, 0], sizes = [2, 1, 256], strides = [1, 1, 1]} : vector<2x4x256xf32> to vector<2x1x256xf32>
    %1135 = vector.broadcast %1133 : vector<1x4x1xf32> to vector<2x4x256xf32>
    %1136 = vector.broadcast %1134 : vector<2x1x256xf32> to vector<2x4x256xf32>
    %1137 = arith.mulf %1135, %1136 : vector<2x4x256xf32>
    %1138 = arith.addf %1125, %1137 : vector<2x4x256xf32>
    %1139 = vector.extract_strided_slice %8 {offsets = [0, 21], sizes = [4, 1], strides = [1, 1]} : vector<4x36xf32> to vector<4x1xf32>
    %1140 = vector.shape_cast %1139 : vector<4x1xf32> to vector<1x4x1xf32>
    %1141 = vector.extract_strided_slice %1131 {offsets = [0, 1, 0], sizes = [2, 1, 256], strides = [1, 1, 1]} : vector<2x4x256xf32> to vector<2x1x256xf32>
    %1142 = vector.broadcast %1140 : vector<1x4x1xf32> to vector<2x4x256xf32>
    %1143 = vector.broadcast %1141 : vector<2x1x256xf32> to vector<2x4x256xf32>
    %1144 = arith.mulf %1142, %1143 : vector<2x4x256xf32>
    %1145 = arith.addf %1138, %1144 : vector<2x4x256xf32>
    %1146 = vector.extract_strided_slice %8 {offsets = [0, 22], sizes = [4, 1], strides = [1, 1]} : vector<4x36xf32> to vector<4x1xf32>
    %1147 = vector.shape_cast %1146 : vector<4x1xf32> to vector<1x4x1xf32>
    %1148 = vector.extract_strided_slice %1131 {offsets = [0, 2, 0], sizes = [2, 1, 256], strides = [1, 1, 1]} : vector<2x4x256xf32> to vector<2x1x256xf32>
    %1149 = vector.broadcast %1147 : vector<1x4x1xf32> to vector<2x4x256xf32>
    %1150 = vector.broadcast %1148 : vector<2x1x256xf32> to vector<2x4x256xf32>
    %1151 = arith.mulf %1149, %1150 : vector<2x4x256xf32>
    %1152 = arith.addf %1145, %1151 : vector<2x4x256xf32>
    %1153 = vector.extract_strided_slice %8 {offsets = [0, 23], sizes = [4, 1], strides = [1, 1]} : vector<4x36xf32> to vector<4x1xf32>
    %1154 = vector.shape_cast %1153 : vector<4x1xf32> to vector<1x4x1xf32>
    %1155 = vector.extract_strided_slice %1131 {offsets = [0, 3, 0], sizes = [2, 1, 256], strides = [1, 1, 1]} : vector<2x4x256xf32> to vector<2x1x256xf32>
    %1156 = vector.broadcast %1154 : vector<1x4x1xf32> to vector<2x4x256xf32>
    %1157 = vector.broadcast %1155 : vector<2x1x256xf32> to vector<2x4x256xf32>
    %1158 = arith.mulf %1156, %1157 : vector<2x4x256xf32>
    %1159 = arith.addf %1152, %1158 : vector<2x4x256xf32>
    %1160 = vector.extract_strided_slice %962 {offsets = [0, 0, 30], sizes = [2, 4, 226], strides = [1, 1, 1]} : vector<2x4x256xf32> to vector<2x4x226xf32>
    %1161 = vector.extract_strided_slice %962 {offsets = [0, 0, 0], sizes = [2, 4, 30], strides = [1, 1, 1]} : vector<2x4x256xf32> to vector<2x4x30xf32>
    %1162 = tpu.concatenate %1160, %1161 in 2 : vector<2x4x226xf32>, vector<2x4x30xf32> -> vector<2x4x256xf32>
    %1163 = vector.shape_cast %48 : vector<1x256xf32> to vector<1x1x256xf32>
    %1164 = vector.broadcast %1163 : vector<1x1x256xf32> to vector<2x4x256xf32>
    %1165 = arith.mulf %1162, %1164 : vector<2x4x256xf32>
    %1166 = vector.extract_strided_slice %8 {offsets = [0, 24], sizes = [4, 1], strides = [1, 1]} : vector<4x36xf32> to vector<4x1xf32>
    %1167 = vector.shape_cast %1166 : vector<4x1xf32> to vector<1x4x1xf32>
    %1168 = vector.extract_strided_slice %1165 {offsets = [0, 0, 0], sizes = [2, 1, 256], strides = [1, 1, 1]} : vector<2x4x256xf32> to vector<2x1x256xf32>
    %1169 = vector.broadcast %1167 : vector<1x4x1xf32> to vector<2x4x256xf32>
    %1170 = vector.broadcast %1168 : vector<2x1x256xf32> to vector<2x4x256xf32>
    %1171 = arith.mulf %1169, %1170 : vector<2x4x256xf32>
    %1172 = arith.addf %1159, %1171 : vector<2x4x256xf32>
    %1173 = vector.extract_strided_slice %8 {offsets = [0, 25], sizes = [4, 1], strides = [1, 1]} : vector<4x36xf32> to vector<4x1xf32>
    %1174 = vector.shape_cast %1173 : vector<4x1xf32> to vector<1x4x1xf32>
    %1175 = vector.extract_strided_slice %1165 {offsets = [0, 1, 0], sizes = [2, 1, 256], strides = [1, 1, 1]} : vector<2x4x256xf32> to vector<2x1x256xf32>
    %1176 = vector.broadcast %1174 : vector<1x4x1xf32> to vector<2x4x256xf32>
    %1177 = vector.broadcast %1175 : vector<2x1x256xf32> to vector<2x4x256xf32>
    %1178 = arith.mulf %1176, %1177 : vector<2x4x256xf32>
    %1179 = arith.addf %1172, %1178 : vector<2x4x256xf32>
    %1180 = vector.extract_strided_slice %8 {offsets = [0, 26], sizes = [4, 1], strides = [1, 1]} : vector<4x36xf32> to vector<4x1xf32>
    %1181 = vector.shape_cast %1180 : vector<4x1xf32> to vector<1x4x1xf32>
    %1182 = vector.extract_strided_slice %1165 {offsets = [0, 2, 0], sizes = [2, 1, 256], strides = [1, 1, 1]} : vector<2x4x256xf32> to vector<2x1x256xf32>
    %1183 = vector.broadcast %1181 : vector<1x4x1xf32> to vector<2x4x256xf32>
    %1184 = vector.broadcast %1182 : vector<2x1x256xf32> to vector<2x4x256xf32>
    %1185 = arith.mulf %1183, %1184 : vector<2x4x256xf32>
    %1186 = arith.addf %1179, %1185 : vector<2x4x256xf32>
    %1187 = vector.extract_strided_slice %8 {offsets = [0, 27], sizes = [4, 1], strides = [1, 1]} : vector<4x36xf32> to vector<4x1xf32>
    %1188 = vector.shape_cast %1187 : vector<4x1xf32> to vector<1x4x1xf32>
    %1189 = vector.extract_strided_slice %1165 {offsets = [0, 3, 0], sizes = [2, 1, 256], strides = [1, 1, 1]} : vector<2x4x256xf32> to vector<2x1x256xf32>
    %1190 = vector.broadcast %1188 : vector<1x4x1xf32> to vector<2x4x256xf32>
    %1191 = vector.broadcast %1189 : vector<2x1x256xf32> to vector<2x4x256xf32>
    %1192 = arith.mulf %1190, %1191 : vector<2x4x256xf32>
    %1193 = arith.addf %1186, %1192 : vector<2x4x256xf32>
    %1194 = vector.extract_strided_slice %962 {offsets = [0, 0, 32], sizes = [2, 4, 224], strides = [1, 1, 1]} : vector<2x4x256xf32> to vector<2x4x224xf32>
    %1195 = vector.extract_strided_slice %962 {offsets = [0, 0, 0], sizes = [2, 4, 32], strides = [1, 1, 1]} : vector<2x4x256xf32> to vector<2x4x32xf32>
    %1196 = tpu.concatenate %1194, %1195 in 2 : vector<2x4x224xf32>, vector<2x4x32xf32> -> vector<2x4x256xf32>
    %1197 = vector.shape_cast %50 : vector<1x256xf32> to vector<1x1x256xf32>
    %1198 = vector.broadcast %1197 : vector<1x1x256xf32> to vector<2x4x256xf32>
    %1199 = arith.mulf %1196, %1198 : vector<2x4x256xf32>
    %1200 = vector.extract_strided_slice %8 {offsets = [0, 28], sizes = [4, 1], strides = [1, 1]} : vector<4x36xf32> to vector<4x1xf32>
    %1201 = vector.shape_cast %1200 : vector<4x1xf32> to vector<1x4x1xf32>
    %1202 = vector.extract_strided_slice %1199 {offsets = [0, 0, 0], sizes = [2, 1, 256], strides = [1, 1, 1]} : vector<2x4x256xf32> to vector<2x1x256xf32>
    %1203 = vector.broadcast %1201 : vector<1x4x1xf32> to vector<2x4x256xf32>
    %1204 = vector.broadcast %1202 : vector<2x1x256xf32> to vector<2x4x256xf32>
    %1205 = arith.mulf %1203, %1204 : vector<2x4x256xf32>
    %1206 = arith.addf %1193, %1205 : vector<2x4x256xf32>
    %1207 = vector.extract_strided_slice %8 {offsets = [0, 29], sizes = [4, 1], strides = [1, 1]} : vector<4x36xf32> to vector<4x1xf32>
    %1208 = vector.shape_cast %1207 : vector<4x1xf32> to vector<1x4x1xf32>
    %1209 = vector.extract_strided_slice %1199 {offsets = [0, 1, 0], sizes = [2, 1, 256], strides = [1, 1, 1]} : vector<2x4x256xf32> to vector<2x1x256xf32>
    %1210 = vector.broadcast %1208 : vector<1x4x1xf32> to vector<2x4x256xf32>
    %1211 = vector.broadcast %1209 : vector<2x1x256xf32> to vector<2x4x256xf32>
    %1212 = arith.mulf %1210, %1211 : vector<2x4x256xf32>
    %1213 = arith.addf %1206, %1212 : vector<2x4x256xf32>
    %1214 = vector.extract_strided_slice %8 {offsets = [0, 30], sizes = [4, 1], strides = [1, 1]} : vector<4x36xf32> to vector<4x1xf32>
    %1215 = vector.shape_cast %1214 : vector<4x1xf32> to vector<1x4x1xf32>
    %1216 = vector.extract_strided_slice %1199 {offsets = [0, 2, 0], sizes = [2, 1, 256], strides = [1, 1, 1]} : vector<2x4x256xf32> to vector<2x1x256xf32>
    %1217 = vector.broadcast %1215 : vector<1x4x1xf32> to vector<2x4x256xf32>
    %1218 = vector.broadcast %1216 : vector<2x1x256xf32> to vector<2x4x256xf32>
    %1219 = arith.mulf %1217, %1218 : vector<2x4x256xf32>
    %1220 = arith.addf %1213, %1219 : vector<2x4x256xf32>
    %1221 = vector.extract_strided_slice %8 {offsets = [0, 31], sizes = [4, 1], strides = [1, 1]} : vector<4x36xf32> to vector<4x1xf32>
    %1222 = vector.shape_cast %1221 : vector<4x1xf32> to vector<1x4x1xf32>
    %1223 = vector.extract_strided_slice %1199 {offsets = [0, 3, 0], sizes = [2, 1, 256], strides = [1, 1, 1]} : vector<2x4x256xf32> to vector<2x1x256xf32>
    %1224 = vector.broadcast %1222 : vector<1x4x1xf32> to vector<2x4x256xf32>
    %1225 = vector.broadcast %1223 : vector<2x1x256xf32> to vector<2x4x256xf32>
    %1226 = arith.mulf %1224, %1225 : vector<2x4x256xf32>
    %1227 = arith.addf %1220, %1226 : vector<2x4x256xf32>
    %1228 = vector.extract_strided_slice %962 {offsets = [0, 0, 34], sizes = [2, 4, 222], strides = [1, 1, 1]} : vector<2x4x256xf32> to vector<2x4x222xf32>
    %1229 = vector.extract_strided_slice %962 {offsets = [0, 0, 0], sizes = [2, 4, 34], strides = [1, 1, 1]} : vector<2x4x256xf32> to vector<2x4x34xf32>
    %1230 = tpu.concatenate %1228, %1229 in 2 : vector<2x4x222xf32>, vector<2x4x34xf32> -> vector<2x4x256xf32>
    %1231 = vector.shape_cast %52 : vector<1x256xf32> to vector<1x1x256xf32>
    %1232 = vector.broadcast %1231 : vector<1x1x256xf32> to vector<2x4x256xf32>
    %1233 = arith.mulf %1230, %1232 : vector<2x4x256xf32>
    %1234 = vector.extract_strided_slice %8 {offsets = [0, 32], sizes = [4, 1], strides = [1, 1]} : vector<4x36xf32> to vector<4x1xf32>
    %1235 = vector.shape_cast %1234 : vector<4x1xf32> to vector<1x4x1xf32>
    %1236 = vector.extract_strided_slice %1233 {offsets = [0, 0, 0], sizes = [2, 1, 256], strides = [1, 1, 1]} : vector<2x4x256xf32> to vector<2x1x256xf32>
    %1237 = vector.broadcast %1235 : vector<1x4x1xf32> to vector<2x4x256xf32>
    %1238 = vector.broadcast %1236 : vector<2x1x256xf32> to vector<2x4x256xf32>
    %1239 = arith.mulf %1237, %1238 : vector<2x4x256xf32>
    %1240 = arith.addf %1227, %1239 : vector<2x4x256xf32>
    %1241 = vector.extract_strided_slice %8 {offsets = [0, 33], sizes = [4, 1], strides = [1, 1]} : vector<4x36xf32> to vector<4x1xf32>
    %1242 = vector.shape_cast %1241 : vector<4x1xf32> to vector<1x4x1xf32>
    %1243 = vector.extract_strided_slice %1233 {offsets = [0, 1, 0], sizes = [2, 1, 256], strides = [1, 1, 1]} : vector<2x4x256xf32> to vector<2x1x256xf32>
    %1244 = vector.broadcast %1242 : vector<1x4x1xf32> to vector<2x4x256xf32>
    %1245 = vector.broadcast %1243 : vector<2x1x256xf32> to vector<2x4x256xf32>
    %1246 = arith.mulf %1244, %1245 : vector<2x4x256xf32>
    %1247 = arith.addf %1240, %1246 : vector<2x4x256xf32>
    %1248 = vector.extract_strided_slice %8 {offsets = [0, 34], sizes = [4, 1], strides = [1, 1]} : vector<4x36xf32> to vector<4x1xf32>
    %1249 = vector.shape_cast %1248 : vector<4x1xf32> to vector<1x4x1xf32>
    %1250 = vector.extract_strided_slice %1233 {offsets = [0, 2, 0], sizes = [2, 1, 256], strides = [1, 1, 1]} : vector<2x4x256xf32> to vector<2x1x256xf32>
    %1251 = vector.broadcast %1249 : vector<1x4x1xf32> to vector<2x4x256xf32>
    %1252 = vector.broadcast %1250 : vector<2x1x256xf32> to vector<2x4x256xf32>
    %1253 = arith.mulf %1251, %1252 : vector<2x4x256xf32>
    %1254 = arith.addf %1247, %1253 : vector<2x4x256xf32>
    %1255 = vector.extract_strided_slice %8 {offsets = [0, 35], sizes = [4, 1], strides = [1, 1]} : vector<4x36xf32> to vector<4x1xf32>
    %1256 = vector.shape_cast %1255 : vector<4x1xf32> to vector<1x4x1xf32>
    %1257 = vector.extract_strided_slice %1233 {offsets = [0, 3, 0], sizes = [2, 1, 256], strides = [1, 1, 1]} : vector<2x4x256xf32> to vector<2x1x256xf32>
    %1258 = vector.broadcast %1256 : vector<1x4x1xf32> to vector<2x4x256xf32>
    %1259 = vector.broadcast %1257 : vector<2x1x256xf32> to vector<2x4x256xf32>
    %1260 = arith.mulf %1258, %1259 : vector<2x4x256xf32>
    %1261 = arith.addf %1254, %1260 : vector<2x4x256xf32>
    %1262 = vector.broadcast %20 : vector<1x4x1xf32> to vector<2x4x256xf32>
    %1263 = arith.addf %1261, %1262 : vector<2x4x256xf32>
    %1264 = arith.addf %658, %1263 : vector<2x4x256xf32>
    %1265 = arith.addf %1264, %0 : vector<2x4x256xf32>
    %c0_84 = arith.constant 0 : index
    %c0_85 = arith.constant 0 : index
    %c0_86 = arith.constant 0 : index
    %1266 = vector.load %arg5[%c0_84, %c0_85, %c0_86] : memref<2x4x256xf32, #tpu.memory_space<vmem>>, vector<2x4x256xf32>
    tpu.vector_store %arg5[%c0_84, %c0_85, %c0_86], %1265 {strides = array<i32>} : memref<2x4x256xf32, #tpu.memory_space<vmem>>, vector<2x4x256xf32>,
    return
  }
  func.func @transform_0(%arg0: i32) -> (i32, i32, i32) {
    %c0_i32 = arith.constant 0 : i32
    %c0_i32_0 = arith.constant 0 : i32
    %c0_i32_1 = arith.constant 0 : i32
    return %arg0, %c0_i32, %c0_i32_0 : i32, i32, i32
  }
  func.func @transform_1(%arg0: i32) -> (i32, i32, i32) {
    %c0_i32 = arith.constant 0 : i32
    %c0_i32_0 = arith.constant 0 : i32
    %c0_i32_1 = arith.constant 0 : i32
    %c0_i32_2 = arith.constant 0 : i32
    return %c0_i32, %c0_i32_0, %c0_i32_1 : i32, i32, i32
  }
  func.func @transform_2(%arg0: i32) -> (i32, i32, i32) {
    %c0_i32 = arith.constant 0 : i32
    %c0_i32_0 = arith.constant 0 : i32
    %c0_i32_1 = arith.constant 0 : i32
    %c0_i32_2 = arith.constant 0 : i32
    return %c0_i32, %c0_i32_0, %c0_i32_1 : i32, i32, i32
  }
  func.func @transform_3(%arg0: i32) -> (i32, i32, i32, i32) {
    %c0_i32 = arith.constant 0 : i32
    %c0_i32_0 = arith.constant 0 : i32
    %c0_i32_1 = arith.constant 0 : i32
    %c0_i32_2 = arith.constant 0 : i32
    %c0_i32_3 = arith.constant 0 : i32
    return %c0_i32, %c0_i32_0, %c0_i32_1, %c0_i32_2 : i32, i32, i32, i32
  }
  func.func @transform_4(%arg0: i32) -> (i32, i32, i32) {
    %c0_i32 = arith.constant 0 : i32
    %c0_i32_0 = arith.constant 0 : i32
    %c0_i32_1 = arith.constant 0 : i32
    return %arg0, %c0_i32, %c0_i32_0 : i32, i32, i32
  }
}

</mosaic_0001>

<llo_original>
// kernel: resnet_block_forward.1
$region0: #{resnet_block_forward.1}
  #allocation0 [shape = 'u32[]', space=smem, size = 0x4, offset = 0x4, fixed_abs, tag = 'smem constant byte address 0x4 - core index']
  #allocation1 [shape = 'u32[72,128]{1,0:T(1,128)}', space=vmem, size = 0x9000, scoped, tag = 'internal scratch']
  %s0 = inlined_call_operand.vmem [shape: f32[2,4,256], index: 0, kind: input, shape index: {}]
  %s1 = inlined_call_operand.vmem [shape: f32[4,4,36], index: 1, kind: input, shape index: {}]
  %s2 = inlined_call_operand.vmem [shape: f32[4,4,1], index: 2, kind: input, shape index: {}]
  %s3 = inlined_call_operand.vmem [shape: f32[2,9,1,256], index: 3, kind: input, shape index: {}]
  %s4 = inlined_call_operand.vmem [shape: f32[2,4,256], index: 4, kind: output, shape index: {}]
  %s5 = sld [smem:[#allocation0]]
  $region26: #{resnet_block_forward.1} parent=0
    _
  %s7 = ssub.s32 1, %s5
  %s8 = scalar_select 0, %s7, %s5
  // Predicated region
  $region2: #{resnet_block_forward.1} parent=0 // pred_check
    _
  $region3: #{resnet_block_forward.1} parent=0 // pred_check_branch
    %10 = sbr.rel (0) target = $region5
  $region4: #{resnet_block_forward.1} parent=0 // pred_region
    _
  $region5: #{resnet_block_forward.1} parent=0 // pred_fallthru
    _
  // Predicated region
  $region6: #{resnet_block_forward.1} parent=0 // pred_check
    _
  $region7: #{resnet_block_forward.1} parent=0 // pred_check_branch
    %12 = sbr.rel (0) target = $region9
  $region8: #{resnet_block_forward.1} parent=0 // pred_region
    _
  $region9: #{resnet_block_forward.1} parent=0 // pred_fallthru
    _
  // Predicated region
  $region10: #{resnet_block_forward.1} parent=0 // pred_check
    _
  $region11: #{resnet_block_forward.1} parent=0 // pred_check_branch
    %14 = sbr.rel (0) target = $region13
  $region12: #{resnet_block_forward.1} parent=0 // pred_region
    _
  $region13: #{resnet_block_forward.1} parent=0 // pred_fallthru
    _
  // Predicated region
  $region14: #{resnet_block_forward.1} parent=0 // pred_check
    _
  $region15: #{resnet_block_forward.1} parent=0 // pred_check_branch
    %16 = sbr.rel (0) target = $region17
  $region16: #{resnet_block_forward.1} parent=0 // pred_region
    _
  $region17: #{resnet_block_forward.1} parent=0 // pred_fallthru
    _
  %v17 = vld [vmem:[%s0] sm:$0xff]
  %v18 = vld [vmem:[%s0 + $0x8] sm:$0xff]
  %v19 = vld [vmem:[%s1] sm:$0xf]
  %s20 = scalar_lea.vmem %s1, 4
  %v21 = vld [vmem:[%s20] sm:$0xf]
  %s22 = scalar_lea.vmem %s1, 8
  %v23 = vld [vmem:[%s22] sm:$0xf]
  %s24 = scalar_lea.vmem %s1, 12
  %v25 = vld [vmem:[%s24] sm:$0xf]
  %v26 = vld [vmem:[%s2] sm:$0xf]
  %s27 = scalar_lea.vmem %s2, 4
  %v28 = vld [vmem:[%s27] sm:$0xf]
  %s29 = scalar_lea.vmem %s2, 8
  %v30 = vld [vmem:[%s29] sm:$0xf]
  %s31 = scalar_lea.vmem %s2, 12
  %v32 = vld [vmem:[%s31] sm:$0xf]
  %v33 = vld [vmem:[%s3] sm:$0x3]
  %s34 = scalar_lea.vmem %s3, 2
  %v35 = vld [vmem:[%s34] sm:$0x3]
  %s36 = scalar_lea.vmem %s3, 4
  %v37 = vld [vmem:[%s36] sm:$0x3]
  %s38 = scalar_lea.vmem %s3, 6
  %v39 = vld [vmem:[%s38] sm:$0x3]
  %s40 = scalar_lea.vmem %s3, 10
  %v41 = vld [vmem:[%s40] sm:$0x3]
  %s42 = scalar_lea.vmem %s3, 12
  %v43 = vld [vmem:[%s42] sm:$0x3]
  %s44 = scalar_lea.vmem %s3, 14
  %v45 = vld [vmem:[%s44] sm:$0x3]
  %s46 = scalar_lea.vmem %s3, 16
  %v47 = vld [vmem:[%s46] sm:$0x3]
  %s48 = scalar_lea.vmem %s3, 18
  %v49 = vld [vmem:[%s48] sm:$0x3]
  %s50 = scalar_lea.vmem %s3, 20
  %v51 = vld [vmem:[%s50] sm:$0x3]
  %s52 = scalar_lea.vmem %s3, 22
  %v53 = vld [vmem:[%s52] sm:$0x3]
  %s54 = scalar_lea.vmem %s3, 24
  %v55 = vld [vmem:[%s54] sm:$0x3]
  %s56 = scalar_lea.vmem %s3, 28
  %v57 = vld [vmem:[%s56] sm:$0x3]
  %s58 = scalar_lea.vmem %s3, 30
  %v59 = vld [vmem:[%s58] sm:$0x3]
  %s60 = scalar_lea.vmem %s3, 32
  %v61 = vld [vmem:[%s60] sm:$0x3]
  %s62 = scalar_lea.vmem %s3, 34
  %v63 = vld [vmem:[%s62] sm:$0x3]
  %66 = vst [vmem:[#allocation1] ss:$2 sm:$0xff] %v17
  %v67 = vld.sshfl [vmem:[#allocation1 + $0x8] sm:$0xff pattern:$0x75316420]
  %s68 = scalar_lea.vmem [#allocation1], 16
  %69 = vst [vmem:[%s68] ss:$2 sm:$0xff] %v18
  %v70 = vld.sshfl [vmem:[#allocation1 + $0x18] sm:$0xff pattern:$0x75316420]
  %71 = vrot.lane.b32.xlu0 %v67, 17
  %v72 = vpop.permute.xlu0 %71
  %73 = vrot.lane.b32.xlu0 %v70, 17
  %v74 = vpop.permute.xlu0 %73
  %77 = vst [vmem:[#allocation1] ss:$2 sm:$0xff] %v17
  %v78 = vld.sshfl [vmem:[#allocation1] sm:$0xff pattern:$0x75316420]
  %v79 = vld.sshfl [vmem:[#allocation1 + $0x8] sm:$0xff pattern:$0x75316420]
  %s80 = scalar_lea.vmem [#allocation1], 16
  %81 = vst [vmem:[%s80] ss:$2 sm:$0xff] %v18
  %v82 = vld.sshfl [vmem:[#allocation1 + $0x10] sm:$0xff pattern:$0x75316420]
  %v83 = vld.sshfl [vmem:[#allocation1 + $0x18] sm:$0xff pattern:$0x75316420]
  %84 = vrot.lane.b32.xlu0 %v78, 17
  %v85 = vpop.permute.xlu0 %84
  %86 = vrot.lane.b32.xlu0 %v79, 17
  %v87 = vpop.permute.xlu0 %86
  %88 = vrot.lane.b32.xlu0 %v82, 17
  %v89 = vpop.permute.xlu0 %88
  %90 = vrot.lane.b32.xlu0 %v83, 17
  %v91 = vpop.permute.xlu0 %90
  %vm92 = vcmask 138240
  %v93 = vsel %vm92, %v85, %v87
  %v94 = vsel %vm92, %v89, %v91
  %v99 = vsel %vm92, %v72, %v85
  %v100 = vsel %vm92, %v74, %v89
  %v102 = vperm.slane %v33, 0
  %v103 = vperm.slane %v33, 1
  %v106 = vmul.f32 %v99, %v102
  %v107 = vmul.f32 %v93, %v103
  %v108 = vmul.f32 %v100, %v102
  %v109 = vmul.f32 %v94, %v103
  %111 = vset.pattern.permute.xlu0 0
  %112 = vperm.xlu0 %111, %v19
  %v113 = vpop.permute.xlu0 %112
  %v115 = vperm.slane %v106, 0
  %v116 = vperm.slane %v107, 0
  %v117 = vperm.slane %v108, 0
  %v118 = vperm.slane %v109, 0
  %v119 = vmul.f32 %v113, %v115
  %v120 = vmul.f32 %v113, %v116
  %v121 = vmul.f32 %v113, %v117
  %v122 = vmul.f32 %v113, %v118
  %123 = vset.pattern.permute.xlu0 1
  %124 = vperm.xlu0 %123, %v19
  %v125 = vpop.permute.xlu0 %124
  %v127 = vperm.slane %v106, 1
  %v128 = vperm.slane %v107, 1
  %v129 = vperm.slane %v108, 1
  %v130 = vperm.slane %v109, 1
  %v131 = vmul.f32 %v125, %v127
  %v132 = vmul.f32 %v125, %v128
  %v133 = vmul.f32 %v125, %v129
  %v134 = vmul.f32 %v125, %v130
  %v135 = vadd.f32 %v119, %v131
  %v136 = vadd.f32 %v120, %v132
  %v137 = vadd.f32 %v121, %v133
  %v138 = vadd.f32 %v122, %v134
  %139 = vset.pattern.permute.xlu0 2
  %140 = vperm.xlu0 %139, %v19
  %v141 = vpop.permute.xlu0 %140
  %v143 = vperm.slane %v106, 2
  %v144 = vperm.slane %v107, 2
  %v145 = vperm.slane %v108, 2
  %v146 = vperm.slane %v109, 2
  %v147 = vmul.f32 %v141, %v143
  %v148 = vmul.f32 %v141, %v144
  %v149 = vmul.f32 %v141, %v145
  %v150 = vmul.f32 %v141, %v146
  %v151 = vadd.f32 %v135, %v147
  %v152 = vadd.f32 %v136, %v148
  %v153 = vadd.f32 %v137, %v149
  %v154 = vadd.f32 %v138, %v150
  %155 = vset.pattern.permute.xlu0 3
  %156 = vperm.xlu0 %155, %v19
  %v157 = vpop.permute.xlu0 %156
  %v159 = vperm.slane %v106, 3
  %v160 = vperm.slane %v107, 3
  %v161 = vperm.slane %v108, 3
  %v162 = vperm.slane %v109, 3
  %v163 = vmul.f32 %v157, %v159
  %v164 = vmul.f32 %v157, %v160
  %v165 = vmul.f32 %v157, %v161
  %v166 = vmul.f32 %v157, %v162
  %v167 = vadd.f32 %v151, %v163
  %v168 = vadd.f32 %v152, %v164
  %v169 = vadd.f32 %v153, %v165
  %v170 = vadd.f32 %v154, %v166
  %171 = vst [vmem:[#allocation1] ss:$2 sm:$0xff] %v17
  %v172 = vld.sshfl [vmem:[#allocation1 + $0x8] sm:$0xff pattern:$0x75316420]
  %s173 = scalar_lea.vmem [#allocation1], 16
  %174 = vst [vmem:[%s173] ss:$2 sm:$0xff] %v18
  %v175 = vld.sshfl [vmem:[#allocation1 + $0x18] sm:$0xff pattern:$0x75316420]
  %176 = vrot.lane.b32.xlu0 %v172, 16
  %v177 = vpop.permute.xlu0 %176
  %178 = vrot.lane.b32.xlu0 %v175, 16
  %v179 = vpop.permute.xlu0 %178
  %182 = vst [vmem:[#allocation1] ss:$2 sm:$0xff] %v17
  %v183 = vld.sshfl [vmem:[#allocation1] sm:$0xff pattern:$0x75316420]
  %v184 = vld.sshfl [vmem:[#allocation1 + $0x8] sm:$0xff pattern:$0x75316420]
  %s185 = scalar_lea.vmem [#allocation1], 16
  %186 = vst [vmem:[%s185] ss:$2 sm:$0xff] %v18
  %v187 = vld.sshfl [vmem:[#allocation1 + $0x10] sm:$0xff pattern:$0x75316420]
  %v188 = vld.sshfl [vmem:[#allocation1 + $0x18] sm:$0xff pattern:$0x75316420]
  %189 = vrot.lane.b32.xlu0 %v183, 16
  %v190 = vpop.permute.xlu0 %189
  %191 = vrot.lane.b32.xlu0 %v184, 16
  %v192 = vpop.permute.xlu0 %191
  %193 = vrot.lane.b32.xlu0 %v187, 16
  %v194 = vpop.permute.xlu0 %193
  %195 = vrot.lane.b32.xlu0 %v188, 16
  %v196 = vpop.permute.xlu0 %195
  %vm197 = vcmask 130048
  %v198 = vsel %vm197, %v190, %v192
  %v199 = vsel %vm197, %v194, %v196
  %v204 = vsel %vm197, %v177, %v190
  %v205 = vsel %vm197, %v179, %v194
  %v207 = vperm.slane %v35, 0
  %v208 = vperm.slane %v35, 1
  %v211 = vmul.f32 %v204, %v207
  %v212 = vmul.f32 %v198, %v208
  %v213 = vmul.f32 %v205, %v207
  %v214 = vmul.f32 %v199, %v208
  %215 = vset.pattern.permute.xlu0 4
  %216 = vperm.xlu0 %215, %v19
  %v217 = vpop.permute.xlu0 %216
  %v219 = vperm.slane %v211, 0
  %v220 = vperm.slane %v212, 0
  %v221 = vperm.slane %v213, 0
  %v222 = vperm.slane %v214, 0
  %v223 = vmul.f32 %v217, %v219
  %v224 = vmul.f32 %v217, %v220
  %v225 = vmul.f32 %v217, %v221
  %v226 = vmul.f32 %v217, %v222
  %v227 = vadd.f32 %v167, %v223
  %v228 = vadd.f32 %v168, %v224
  %v229 = vadd.f32 %v169, %v225
  %v230 = vadd.f32 %v170, %v226
  %231 = vset.pattern.permute.xlu0 5
  %232 = vperm.xlu0 %231, %v19
  %v233 = vpop.permute.xlu0 %232
  %v235 = vperm.slane %v211, 1
  %v236 = vperm.slane %v212, 1
  %v237 = vperm.slane %v213, 1
  %v238 = vperm.slane %v214, 1
  %v239 = vmul.f32 %v233, %v235
  %v240 = vmul.f32 %v233, %v236
  %v241 = vmul.f32 %v233, %v237
  %v242 = vmul.f32 %v233, %v238
  %v243 = vadd.f32 %v227, %v239
  %v244 = vadd.f32 %v228, %v240
  %v245 = vadd.f32 %v229, %v241
  %v246 = vadd.f32 %v230, %v242
  %247 = vset.pattern.permute.xlu0 6
  %248 = vperm.xlu0 %247, %v19
  %v249 = vpop.permute.xlu0 %248
  %v251 = vperm.slane %v211, 2
  %v252 = vperm.slane %v212, 2
  %v253 = vperm.slane %v213, 2
  %v254 = vperm.slane %v214, 2
  %v255 = vmul.f32 %v249, %v251
  %v256 = vmul.f32 %v249, %v252
  %v257 = vmul.f32 %v249, %v253
  %v258 = vmul.f32 %v249, %v254
  %v259 = vadd.f32 %v243, %v255
  %v260 = vadd.f32 %v244, %v256
  %v261 = vadd.f32 %v245, %v257
  %v262 = vadd.f32 %v246, %v258
  %263 = vset.pattern.permute.xlu0 7
  %264 = vperm.xlu0 %263, %v19
  %v265 = vpop.permute.xlu0 %264
  %v267 = vperm.slane %v211, 3
  %v268 = vperm.slane %v212, 3
  %v269 = vperm.slane %v213, 3
  %v270 = vperm.slane %v214, 3
  %v271 = vmul.f32 %v265, %v267
  %v272 = vmul.f32 %v265, %v268
  %v273 = vmul.f32 %v265, %v269
  %v274 = vmul.f32 %v265, %v270
  %v275 = vadd.f32 %v259, %v271
  %v276 = vadd.f32 %v260, %v272
  %v277 = vadd.f32 %v261, %v273
  %v278 = vadd.f32 %v262, %v274
  %279 = vst [vmem:[#allocation1] ss:$2 sm:$0xff] %v17
  %v280 = vld.sshfl [vmem:[#allocation1 + $0x8] sm:$0xff pattern:$0x75316420]
  %s281 = scalar_lea.vmem [#allocation1], 16
  %282 = vst [vmem:[%s281] ss:$2 sm:$0xff] %v18
  %v283 = vld.sshfl [vmem:[#allocation1 + $0x18] sm:$0xff pattern:$0x75316420]
  %284 = vrot.lane.b32.xlu0 %v280, 15
  %v285 = vpop.permute.xlu0 %284
  %286 = vrot.lane.b32.xlu0 %v283, 15
  %v287 = vpop.permute.xlu0 %286
  %290 = vst [vmem:[#allocation1] ss:$2 sm:$0xff] %v17
  %v291 = vld.sshfl [vmem:[#allocation1] sm:$0xff pattern:$0x75316420]
  %v292 = vld.sshfl [vmem:[#allocation1 + $0x8] sm:$0xff pattern:$0x75316420]
  %s293 = scalar_lea.vmem [#allocation1], 16
  %294 = vst [vmem:[%s293] ss:$2 sm:$0xff] %v18
  %v295 = vld.sshfl [vmem:[#allocation1 + $0x10] sm:$0xff pattern:$0x75316420]
  %v296 = vld.sshfl [vmem:[#allocation1 + $0x18] sm:$0xff pattern:$0x75316420]
  %297 = vrot.lane.b32.xlu0 %v291, 15
  %v298 = vpop.permute.xlu0 %297
  %299 = vrot.lane.b32.xlu0 %v292, 15
  %v300 = vpop.permute.xlu0 %299
  %301 = vrot.lane.b32.xlu0 %v295, 15
  %v302 = vpop.permute.xlu0 %301
  %303 = vrot.lane.b32.xlu0 %v296, 15
  %v304 = vpop.permute.xlu0 %303
  %vm305 = vcmask 121856
  %v306 = vsel %vm305, %v298, %v300
  %v307 = vsel %vm305, %v302, %v304
  %v312 = vsel %vm305, %v285, %v298
  %v313 = vsel %vm305, %v287, %v302
  %v315 = vperm.slane %v37, 0
  %v316 = vperm.slane %v37, 1
  %v319 = vmul.f32 %v312, %v315
  %v320 = vmul.f32 %v306, %v316
  %v321 = vmul.f32 %v313, %v315
  %v322 = vmul.f32 %v307, %v316
  %323 = vset.pattern.permute.xlu0 8
  %324 = vperm.xlu0 %323, %v19
  %v325 = vpop.permute.xlu0 %324
  %v327 = vperm.slane %v319, 0
  %v328 = vperm.slane %v320, 0
  %v329 = vperm.slane %v321, 0
  %v330 = vperm.slane %v322, 0
  %v331 = vmul.f32 %v325, %v327
  %v332 = vmul.f32 %v325, %v328
  %v333 = vmul.f32 %v325, %v329
  %v334 = vmul.f32 %v325, %v330
  %v335 = vadd.f32 %v275, %v331
  %v336 = vadd.f32 %v276, %v332
  %v337 = vadd.f32 %v277, %v333
  %v338 = vadd.f32 %v278, %v334
  %339 = vset.pattern.permute.xlu0 9
  %340 = vperm.xlu0 %339, %v19
  %v341 = vpop.permute.xlu0 %340
  %v343 = vperm.slane %v319, 1
  %v344 = vperm.slane %v320, 1
  %v345 = vperm.slane %v321, 1
  %v346 = vperm.slane %v322, 1
  %v347 = vmul.f32 %v341, %v343
  %v348 = vmul.f32 %v341, %v344
  %v349 = vmul.f32 %v341, %v345
  %v350 = vmul.f32 %v341, %v346
  %v351 = vadd.f32 %v335, %v347
  %v352 = vadd.f32 %v336, %v348
  %v353 = vadd.f32 %v337, %v349
  %v354 = vadd.f32 %v338, %v350
  %355 = vset.pattern.permute.xlu0 10
  %356 = vperm.xlu0 %355, %v19
  %v357 = vpop.permute.xlu0 %356
  %v359 = vperm.slane %v319, 2
  %v360 = vperm.slane %v320, 2
  %v361 = vperm.slane %v321, 2
  %v362 = vperm.slane %v322, 2
  %v363 = vmul.f32 %v357, %v359
  %v364 = vmul.f32 %v357, %v360
  %v365 = vmul.f32 %v357, %v361
  %v366 = vmul.f32 %v357, %v362
  %v367 = vadd.f32 %v351, %v363
  %v368 = vadd.f32 %v352, %v364
  %v369 = vadd.f32 %v353, %v365
  %v370 = vadd.f32 %v354, %v366
  %371 = vset.pattern.permute.xlu0 11
  %372 = vperm.xlu0 %371, %v19
  %v373 = vpop.permute.xlu0 %372
  %v375 = vperm.slane %v319, 3
  %v376 = vperm.slane %v320, 3
  %v377 = vperm.slane %v321, 3
  %v378 = vperm.slane %v322, 3
  %v379 = vmul.f32 %v373, %v375
  %v380 = vmul.f32 %v373, %v376
  %v381 = vmul.f32 %v373, %v377
  %v382 = vmul.f32 %v373, %v378
  %v383 = vadd.f32 %v367, %v379
  %v384 = vadd.f32 %v368, %v380
  %v385 = vadd.f32 %v369, %v381
  %v386 = vadd.f32 %v370, %v382
  %387 = vst [vmem:[#allocation1] ss:$2 sm:$0xff] %v17
  %v388 = vld.sshfl [vmem:[#allocation1 + $0x8] sm:$0xff pattern:$0x75316420]
  %s389 = scalar_lea.vmem [#allocation1], 16
  %390 = vst [vmem:[%s389] ss:$2 sm:$0xff] %v18
  %v391 = vld.sshfl [vmem:[#allocation1 + $0x18] sm:$0xff pattern:$0x75316420]
  %392 = vrot.lane.b32.xlu0 %v388, 1
  %v393 = vpop.permute.xlu0 %392
  %394 = vrot.lane.b32.xlu0 %v391, 1
  %v395 = vpop.permute.xlu0 %394
  %398 = vst [vmem:[#allocation1] ss:$2 sm:$0xff] %v17
  %v399 = vld.sshfl [vmem:[#allocation1] sm:$0xff pattern:$0x75316420]
  %v400 = vld.sshfl [vmem:[#allocation1 + $0x8] sm:$0xff pattern:$0x75316420]
  %s401 = scalar_lea.vmem [#allocation1], 16
  %402 = vst [vmem:[%s401] ss:$2 sm:$0xff] %v18
  %v403 = vld.sshfl [vmem:[#allocation1 + $0x10] sm:$0xff pattern:$0x75316420]
  %v404 = vld.sshfl [vmem:[#allocation1 + $0x18] sm:$0xff pattern:$0x75316420]
  %405 = vrot.lane.b32.xlu0 %v399, 1
  %v406 = vpop.permute.xlu0 %405
  %407 = vrot.lane.b32.xlu0 %v400, 1
  %v408 = vpop.permute.xlu0 %407
  %409 = vrot.lane.b32.xlu0 %v403, 1
  %v410 = vpop.permute.xlu0 %409
  %411 = vrot.lane.b32.xlu0 %v404, 1
  %v412 = vpop.permute.xlu0 %411
  %vm413 = vcmask 7168
  %v414 = vsel %vm413, %v406, %v408
  %v415 = vsel %vm413, %v410, %v412
  %v420 = vsel %vm413, %v393, %v406
  %v421 = vsel %vm413, %v395, %v410
  %v423 = vperm.slane %v39, 0
  %v424 = vperm.slane %v39, 1
  %v427 = vmul.f32 %v420, %v423
  %v428 = vmul.f32 %v414, %v424
  %v429 = vmul.f32 %v421, %v423
  %v430 = vmul.f32 %v415, %v424
  %431 = vset.pattern.permute.xlu0 12
  %432 = vperm.xlu0 %431, %v19
  %v433 = vpop.permute.xlu0 %432
  %v435 = vperm.slane %v427, 0
  %v436 = vperm.slane %v428, 0
  %v437 = vperm.slane %v429, 0
  %v438 = vperm.slane %v430, 0
  %v439 = vmul.f32 %v433, %v435
  %v440 = vmul.f32 %v433, %v436
  %v441 = vmul.f32 %v433, %v437
  %v442 = vmul.f32 %v433, %v438
  %v443 = vadd.f32 %v383, %v439
  %v444 = vadd.f32 %v384, %v440
  %v445 = vadd.f32 %v385, %v441
  %v446 = vadd.f32 %v386, %v442
  %447 = vset.pattern.permute.xlu0 13
  %448 = vperm.xlu0 %447, %v19
  %v449 = vpop.permute.xlu0 %448
  %v451 = vperm.slane %v427, 1
  %v452 = vperm.slane %v428, 1
  %v453 = vperm.slane %v429, 1
  %v454 = vperm.slane %v430, 1
  %v455 = vmul.f32 %v449, %v451
  %v456 = vmul.f32 %v449, %v452
  %v457 = vmul.f32 %v449, %v453
  %v458 = vmul.f32 %v449, %v454
  %v459 = vadd.f32 %v443, %v455
  %v460 = vadd.f32 %v444, %v456
  %v461 = vadd.f32 %v445, %v457
  %v462 = vadd.f32 %v446, %v458
  %463 = vset.pattern.permute.xlu0 14
  %464 = vperm.xlu0 %463, %v19
  %v465 = vpop.permute.xlu0 %464
  %v467 = vperm.slane %v427, 2
  %v468 = vperm.slane %v428, 2
  %v469 = vperm.slane %v429, 2
  %v470 = vperm.slane %v430, 2
  %v471 = vmul.f32 %v465, %v467
  %v472 = vmul.f32 %v465, %v468
  %v473 = vmul.f32 %v465, %v469
  %v474 = vmul.f32 %v465, %v470
  %v475 = vadd.f32 %v459, %v471
  %v476 = vadd.f32 %v460, %v472
  %v477 = vadd.f32 %v461, %v473
  %v478 = vadd.f32 %v462, %v474
  %479 = vset.pattern.permute.xlu0 15
  %480 = vperm.xlu0 %479, %v19
  %v481 = vpop.permute.xlu0 %480
  %v483 = vperm.slane %v427, 3
  %v484 = vperm.slane %v428, 3
  %v485 = vperm.slane %v429, 3
  %v486 = vperm.slane %v430, 3
  %v487 = vmul.f32 %v481, %v483
  %v488 = vmul.f32 %v481, %v484
  %v489 = vmul.f32 %v481, %v485
  %v490 = vmul.f32 %v481, %v486
  %v491 = vadd.f32 %v475, %v487
  %v492 = vadd.f32 %v476, %v488
  %v493 = vadd.f32 %v477, %v489
  %v494 = vadd.f32 %v478, %v490
  %495 = vset.pattern.permute.xlu0 16
  %496 = vperm.xlu0 %495, %v19
  %v497 = vpop.permute.xlu0 %496
  %v499 = vperm.slane %v17, 0
  %v500 = vperm.slane %v17, 4
  %v501 = vperm.slane %v18, 0
  %v502 = vperm.slane %v18, 4
  %v507 = vperm.slane %v499, 0
  %v508 = vperm.slane %v500, 0
  %v509 = vperm.slane %v501, 0
  %v510 = vperm.slane %v502, 0
  %v511 = vmul.f32 %v497, %v507
  %v512 = vmul.f32 %v497, %v508
  %v513 = vmul.f32 %v497, %v509
  %v514 = vmul.f32 %v497, %v510
  %v515 = vadd.f32 %v491, %v511
  %v516 = vadd.f32 %v492, %v512
  %v517 = vadd.f32 %v493, %v513
  %v518 = vadd.f32 %v494, %v514
  %519 = vset.pattern.permute.xlu0 17
  %520 = vperm.xlu0 %519, %v19
  %v521 = vpop.permute.xlu0 %520
  %v523 = vperm.slane %v17, 1
  %v524 = vperm.slane %v17, 5
  %v525 = vperm.slane %v18, 1
  %v526 = vperm.slane %v18, 5
  %v531 = vperm.slane %v523, 1
  %v532 = vperm.slane %v524, 1
  %v533 = vperm.slane %v525, 1
  %v534 = vperm.slane %v526, 1
  %v535 = vmul.f32 %v521, %v531
  %v536 = vmul.f32 %v521, %v532
  %v537 = vmul.f32 %v521, %v533
  %v538 = vmul.f32 %v521, %v534
  %v539 = vadd.f32 %v515, %v535
  %v540 = vadd.f32 %v516, %v536
  %v541 = vadd.f32 %v517, %v537
  %v542 = vadd.f32 %v518, %v538
  %543 = vset.pattern.permute.xlu0 18
  %544 = vperm.xlu0 %543, %v19
  %v545 = vpop.permute.xlu0 %544
  %v547 = vperm.slane %v17, 2
  %v548 = vperm.slane %v17, 6
  %v549 = vperm.slane %v18, 2
  %v550 = vperm.slane %v18, 6
  %v555 = vperm.slane %v547, 2
  %v556 = vperm.slane %v548, 2
  %v557 = vperm.slane %v549, 2
  %v558 = vperm.slane %v550, 2
  %v559 = vmul.f32 %v545, %v555
  %v560 = vmul.f32 %v545, %v556
  %v561 = vmul.f32 %v545, %v557
  %v562 = vmul.f32 %v545, %v558
  %v563 = vadd.f32 %v539, %v559
  %v564 = vadd.f32 %v540, %v560
  %v565 = vadd.f32 %v541, %v561
  %v566 = vadd.f32 %v542, %v562
  %567 = vset.pattern.permute.xlu0 19
  %568 = vperm.xlu0 %567, %v19
  %v569 = vpop.permute.xlu0 %568
  %v571 = vperm.slane %v17, 3
  %v572 = vperm.slane %v17, 7
  %v573 = vperm.slane %v18, 3
  %v574 = vperm.slane %v18, 7
  %v579 = vperm.slane %v571, 3
  %v580 = vperm.slane %v572, 3
  %v581 = vperm.slane %v573, 3
  %v582 = vperm.slane %v574, 3
  %v583 = vmul.f32 %v569, %v579
  %v584 = vmul.f32 %v569, %v580
  %v585 = vmul.f32 %v569, %v581
  %v586 = vmul.f32 %v569, %v582
  %v587 = vadd.f32 %v563, %v583
  %v588 = vadd.f32 %v564, %v584
  %v589 = vadd.f32 %v565, %v585
  %v590 = vadd.f32 %v566, %v586
  %591 = vst [vmem:[#allocation1] ss:$2 sm:$0xff] %v17
  %v592 = vld.sshfl [vmem:[#allocation1] sm:$0xff pattern:$0x75316420]
  %v593 = vld.sshfl [vmem:[#allocation1 + $0x8] sm:$0xff pattern:$0x75316420]
  %s594 = scalar_lea.vmem [#allocation1], 16
  %595 = vst [vmem:[%s594] ss:$2 sm:$0xff] %v18
  %v596 = vld.sshfl [vmem:[#allocation1 + $0x10] sm:$0xff pattern:$0x75316420]
  %v597 = vld.sshfl [vmem:[#allocation1 + $0x18] sm:$0xff pattern:$0x75316420]
  %598 = vrot.lane.b32.xlu0 %v592, 127
  %v599 = vpop.permute.xlu0 %598
  %600 = vrot.lane.b32.xlu0 %v593, 127
  %v601 = vpop.permute.xlu0 %600
  %602 = vrot.lane.b32.xlu0 %v596, 127
  %v603 = vpop.permute.xlu0 %602
  %604 = vrot.lane.b32.xlu0 %v597, 127
  %v605 = vpop.permute.xlu0 %604
  %vm606 = vcmask 1039360
  %v607 = vsel %vm606, %v599, %v601
  %v608 = vsel %vm606, %v603, %v605
  %613 = vst [vmem:[#allocation1] ss:$2 sm:$0xff] %v17
  %v614 = vld.sshfl [vmem:[#allocation1] sm:$0xff pattern:$0x75316420]
  %s615 = scalar_lea.vmem [#allocation1], 16
  %616 = vst [vmem:[%s615] ss:$2 sm:$0xff] %v18
  %v617 = vld.sshfl [vmem:[#allocation1 + $0x10] sm:$0xff pattern:$0x75316420]
  %618 = vrot.lane.b32.xlu0 %v614, 127
  %v619 = vpop.permute.xlu0 %618
  %620 = vrot.lane.b32.xlu0 %v617, 127
  %v621 = vpop.permute.xlu0 %620
  %v624 = vsel %vm606, %v601, %v619
  %v625 = vsel %vm606, %v605, %v621
  %v627 = vperm.slane %v41, 0
  %v628 = vperm.slane %v41, 1
  %v631 = vmul.f32 %v607, %v627
  %v632 = vmul.f32 %v624, %v628
  %v633 = vmul.f32 %v608, %v627
  %v634 = vmul.f32 %v625, %v628
  %635 = vset.pattern.permute.xlu0 20
  %636 = vperm.xlu0 %635, %v19
  %v637 = vpop.permute.xlu0 %636
  %v639 = vperm.slane %v631, 0
  %v640 = vperm.slane %v632, 0
  %v641 = vperm.slane %v633, 0
  %v642 = vperm.slane %v634, 0
  %v643 = vmul.f32 %v637, %v639
  %v644 = vmul.f32 %v637, %v640
  %v645 = vmul.f32 %v637, %v641
  %v646 = vmul.f32 %v637, %v642
  %v647 = vadd.f32 %v587, %v643
  %v648 = vadd.f32 %v588, %v644
  %v649 = vadd.f32 %v589, %v645
  %v650 = vadd.f32 %v590, %v646
  %651 = vset.pattern.permute.xlu0 21
  %652 = vperm.xlu0 %651, %v19
  %v653 = vpop.permute.xlu0 %652
  %v655 = vperm.slane %v631, 1
  %v656 = vperm.slane %v632, 1
  %v657 = vperm.slane %v633, 1
  %v658 = vperm.slane %v634, 1
  %v659 = vmul.f32 %v653, %v655
  %v660 = vmul.f32 %v653, %v656
  %v661 = vmul.f32 %v653, %v657
  %v662 = vmul.f32 %v653, %v658
  %v663 = vadd.f32 %v647, %v659
  %v664 = vadd.f32 %v648, %v660
  %v665 = vadd.f32 %v649, %v661
  %v666 = vadd.f32 %v650, %v662
  %667 = vset.pattern.permute.xlu0 22
  %668 = vperm.xlu0 %667, %v19
  %v669 = vpop.permute.xlu0 %668
  %v671 = vperm.slane %v631, 2
  %v672 = vperm.slane %v632, 2
  %v673 = vperm.slane %v633, 2
  %v674 = vperm.slane %v634, 2
  %v675 = vmul.f32 %v669, %v671
  %v676 = vmul.f32 %v669, %v672
  %v677 = vmul.f32 %v669, %v673
  %v678 = vmul.f32 %v669, %v674
  %v679 = vadd.f32 %v663, %v675
  %v680 = vadd.f32 %v664, %v676
  %v681 = vadd.f32 %v665, %v677
  %v682 = vadd.f32 %v666, %v678
  %683 = vset.pattern.permute.xlu0 23
  %684 = vperm.xlu0 %683, %v19
  %v685 = vpop.permute.xlu0 %684
  %v687 = vperm.slane %v631, 3
  %v688 = vperm.slane %v632, 3
  %v689 = vperm.slane %v633, 3
  %v690 = vperm.slane %v634, 3
  %v691 = vmul.f32 %v685, %v687
  %v692 = vmul.f32 %v685, %v688
  %v693 = vmul.f32 %v685, %v689
  %v694 = vmul.f32 %v685, %v690
  %v695 = vadd.f32 %v679, %v691
  %v696 = vadd.f32 %v680, %v692
  %v697 = vadd.f32 %v681, %v693
  %v698 = vadd.f32 %v682, %v694
  %699 = vst [vmem:[#allocation1] ss:$2 sm:$0xff] %v17
  %v700 = vld.sshfl [vmem:[#allocation1] sm:$0xff pattern:$0x75316420]
  %v701 = vld.sshfl [vmem:[#allocation1 + $0x8] sm:$0xff pattern:$0x75316420]
  %s702 = scalar_lea.vmem [#allocation1], 16
  %703 = vst [vmem:[%s702] ss:$2 sm:$0xff] %v18
  %v704 = vld.sshfl [vmem:[#allocation1 + $0x10] sm:$0xff pattern:$0x75316420]
  %v705 = vld.sshfl [vmem:[#allocation1 + $0x18] sm:$0xff pattern:$0x75316420]
  %706 = vrot.lane.b32.xlu0 %v700, 113
  %v707 = vpop.permute.xlu0 %706
  %708 = vrot.lane.b32.xlu0 %v701, 113
  %v709 = vpop.permute.xlu0 %708
  %710 = vrot.lane.b32.xlu0 %v704, 113
  %v711 = vpop.permute.xlu0 %710
  %712 = vrot.lane.b32.xlu0 %v705, 113
  %v713 = vpop.permute.xlu0 %712
  %vm714 = vcmask 924672
  %v715 = vsel %vm714, %v707, %v709
  %v716 = vsel %vm714, %v711, %v713
  %721 = vst [vmem:[#allocation1] ss:$2 sm:$0xff] %v17
  %v722 = vld.sshfl [vmem:[#allocation1] sm:$0xff pattern:$0x75316420]
  %s723 = scalar_lea.vmem [#allocation1], 16
  %724 = vst [vmem:[%s723] ss:$2 sm:$0xff] %v18
  %v725 = vld.sshfl [vmem:[#allocation1 + $0x10] sm:$0xff pattern:$0x75316420]
  %726 = vrot.lane.b32.xlu0 %v722, 113
  %v727 = vpop.permute.xlu0 %726
  %728 = vrot.lane.b32.xlu0 %v725, 113
  %v729 = vpop.permute.xlu0 %728
  %v732 = vsel %vm714, %v709, %v727
  %v733 = vsel %vm714, %v713, %v729
  %v735 = vperm.slane %v43, 0
  %v736 = vperm.slane %v43, 1
  %v739 = vmul.f32 %v715, %v735
  %v740 = vmul.f32 %v732, %v736
  %v741 = vmul.f32 %v716, %v735
  %v742 = vmul.f32 %v733, %v736
  %743 = vset.pattern.permute.xlu0 24
  %744 = vperm.xlu0 %743, %v19
  %v745 = vpop.permute.xlu0 %744
  %v747 = vperm.slane %v739, 0
  %v748 = vperm.slane %v740, 0
  %v749 = vperm.slane %v741, 0
  %v750 = vperm.slane %v742, 0
  %v751 = vmul.f32 %v745, %v747
  %v752 = vmul.f32 %v745, %v748
  %v753 = vmul.f32 %v745, %v749
  %v754 = vmul.f32 %v745, %v750
  %v755 = vadd.f32 %v695, %v751
  %v756 = vadd.f32 %v696, %v752
  %v757 = vadd.f32 %v697, %v753
  %v758 = vadd.f32 %v698, %v754
  %759 = vset.pattern.permute.xlu0 25
  %760 = vperm.xlu0 %759, %v19
  %v761 = vpop.permute.xlu0 %760
  %v763 = vperm.slane %v739, 1
  %v764 = vperm.slane %v740, 1
  %v765 = vperm.slane %v741, 1
  %v766 = vperm.slane %v742, 1
  %v767 = vmul.f32 %v761, %v763
  %v768 = vmul.f32 %v761, %v764
  %v769 = vmul.f32 %v761, %v765
  %v770 = vmul.f32 %v761, %v766
  %v771 = vadd.f32 %v755, %v767
  %v772 = vadd.f32 %v756, %v768
  %v773 = vadd.f32 %v757, %v769
  %v774 = vadd.f32 %v758, %v770
  %775 = vset.pattern.permute.xlu0 26
  %776 = vperm.xlu0 %775, %v19
  %v777 = vpop.permute.xlu0 %776
  %v779 = vperm.slane %v739, 2
  %v780 = vperm.slane %v740, 2
  %v781 = vperm.slane %v741, 2
  %v782 = vperm.slane %v742, 2
  %v783 = vmul.f32 %v777, %v779
  %v784 = vmul.f32 %v777, %v780
  %v785 = vmul.f32 %v777, %v781
  %v786 = vmul.f32 %v777, %v782
  %v787 = vadd.f32 %v771, %v783
  %v788 = vadd.f32 %v772, %v784
  %v789 = vadd.f32 %v773, %v785
  %v790 = vadd.f32 %v774, %v786
  %791 = vset.pattern.permute.xlu0 27
  %792 = vperm.xlu0 %791, %v19
  %v793 = vpop.permute.xlu0 %792
  %v795 = vperm.slane %v739, 3
  %v796 = vperm.slane %v740, 3
  %v797 = vperm.slane %v741, 3
  %v798 = vperm.slane %v742, 3
  %v799 = vmul.f32 %v793, %v795
  %v800 = vmul.f32 %v793, %v796
  %v801 = vmul.f32 %v793, %v797
  %v802 = vmul.f32 %v793, %v798
  %v803 = vadd.f32 %v787, %v799
  %v804 = vadd.f32 %v788, %v800
  %v805 = vadd.f32 %v789, %v801
  %v806 = vadd.f32 %v790, %v802
  %807 = vst [vmem:[#allocation1] ss:$2 sm:$0xff] %v17
  %v808 = vld.sshfl [vmem:[#allocation1] sm:$0xff pattern:$0x75316420]
  %v809 = vld.sshfl [vmem:[#allocation1 + $0x8] sm:$0xff pattern:$0x75316420]
  %s810 = scalar_lea.vmem [#allocation1], 16
  %811 = vst [vmem:[%s810] ss:$2 sm:$0xff] %v18
  %v812 = vld.sshfl [vmem:[#allocation1 + $0x10] sm:$0xff pattern:$0x75316420]
  %v813 = vld.sshfl [vmem:[#allocation1 + $0x18] sm:$0xff pattern:$0x75316420]
  %814 = vrot.lane.b32.xlu0 %v808, 112
  %v815 = vpop.permute.xlu0 %814
  %816 = vrot.lane.b32.xlu0 %v809, 112
  %v817 = vpop.permute.xlu0 %816
  %818 = vrot.lane.b32.xlu0 %v812, 112
  %v819 = vpop.permute.xlu0 %818
  %820 = vrot.lane.b32.xlu0 %v813, 112
  %v821 = vpop.permute.xlu0 %820
  %vm822 = vcmask 916480
  %v823 = vsel %vm822, %v815, %v817
  %v824 = vsel %vm822, %v819, %v821
  %829 = vst [vmem:[#allocation1] ss:$2 sm:$0xff] %v17
  %v830 = vld.sshfl [vmem:[#allocation1] sm:$0xff pattern:$0x75316420]
  %s831 = scalar_lea.vmem [#allocation1], 16
  %832 = vst [vmem:[%s831] ss:$2 sm:$0xff] %v18
  %v833 = vld.sshfl [vmem:[#allocation1 + $0x10] sm:$0xff pattern:$0x75316420]
  %834 = vrot.lane.b32.xlu0 %v830, 112
  %v835 = vpop.permute.xlu0 %834
  %836 = vrot.lane.b32.xlu0 %v833, 112
  %v837 = vpop.permute.xlu0 %836
  %v840 = vsel %vm822, %v817, %v835
  %v841 = vsel %vm822, %v821, %v837
  %v843 = vperm.slane %v45, 0
  %v844 = vperm.slane %v45, 1
  %v847 = vmul.f32 %v823, %v843
  %v848 = vmul.f32 %v840, %v844
  %v849 = vmul.f32 %v824, %v843
  %v850 = vmul.f32 %v841, %v844
  %851 = vset.pattern.permute.xlu0 28
  %852 = vperm.xlu0 %851, %v19
  %v853 = vpop.permute.xlu0 %852
  %v855 = vperm.slane %v847, 0
  %v856 = vperm.slane %v848, 0
  %v857 = vperm.slane %v849, 0
  %v858 = vperm.slane %v850, 0
  %v859 = vmul.f32 %v853, %v855
  %v860 = vmul.f32 %v853, %v856
  %v861 = vmul.f32 %v853, %v857
  %v862 = vmul.f32 %v853, %v858
  %v863 = vadd.f32 %v803, %v859
  %v864 = vadd.f32 %v804, %v860
  %v865 = vadd.f32 %v805, %v861
  %v866 = vadd.f32 %v806, %v862
  %867 = vset.pattern.permute.xlu0 29
  %868 = vperm.xlu0 %867, %v19
  %v869 = vpop.permute.xlu0 %868
  %v871 = vperm.slane %v847, 1
  %v872 = vperm.slane %v848, 1
  %v873 = vperm.slane %v849, 1
  %v874 = vperm.slane %v850, 1
  %v875 = vmul.f32 %v869, %v871
  %v876 = vmul.f32 %v869, %v872
  %v877 = vmul.f32 %v869, %v873
  %v878 = vmul.f32 %v869, %v874
  %v879 = vadd.f32 %v863, %v875
  %v880 = vadd.f32 %v864, %v876
  %v881 = vadd.f32 %v865, %v877
  %v882 = vadd.f32 %v866, %v878
  %883 = vset.pattern.permute.xlu0 30
  %884 = vperm.xlu0 %883, %v19
  %v885 = vpop.permute.xlu0 %884
  %v887 = vperm.slane %v847, 2
  %v888 = vperm.slane %v848, 2
  %v889 = vperm.slane %v849, 2
  %v890 = vperm.slane %v850, 2
  %v891 = vmul.f32 %v885, %v887
  %v892 = vmul.f32 %v885, %v888
  %v893 = vmul.f32 %v885, %v889
  %v894 = vmul.f32 %v885, %v890
  %v895 = vadd.f32 %v879, %v891
  %v896 = vadd.f32 %v880, %v892
  %v897 = vadd.f32 %v881, %v893
  %v898 = vadd.f32 %v882, %v894
  %899 = vset.pattern.permute.xlu0 31
  %900 = vperm.xlu0 %899, %v19
  %v901 = vpop.permute.xlu0 %900
  %v903 = vperm.slane %v847, 3
  %v904 = vperm.slane %v848, 3
  %v905 = vperm.slane %v849, 3
  %v906 = vperm.slane %v850, 3
  %v907 = vmul.f32 %v901, %v903
  %v908 = vmul.f32 %v901, %v904
  %v909 = vmul.f32 %v901, %v905
  %v910 = vmul.f32 %v901, %v906
  %v911 = vadd.f32 %v895, %v907
  %v912 = vadd.f32 %v896, %v908
  %v913 = vadd.f32 %v897, %v909
  %v914 = vadd.f32 %v898, %v910
  %915 = vst [vmem:[#allocation1] ss:$2 sm:$0xff] %v17
  %v916 = vld.sshfl [vmem:[#allocation1] sm:$0xff pattern:$0x75316420]
  %v917 = vld.sshfl [vmem:[#allocation1 + $0x8] sm:$0xff pattern:$0x75316420]
  %s918 = scalar_lea.vmem [#allocation1], 16
  %919 = vst [vmem:[%s918] ss:$2 sm:$0xff] %v18
  %v920 = vld.sshfl [vmem:[#allocation1 + $0x10] sm:$0xff pattern:$0x75316420]
  %v921 = vld.sshfl [vmem:[#allocation1 + $0x18] sm:$0xff pattern:$0x75316420]
  %922 = vrot.lane.b32.xlu0 %v916, 111
  %v923 = vpop.permute.xlu0 %922
  %924 = vrot.lane.b32.xlu0 %v917, 111
  %v925 = vpop.permute.xlu0 %924
  %926 = vrot.lane.b32.xlu0 %v920, 111
  %v927 = vpop.permute.xlu0 %926
  %928 = vrot.lane.b32.xlu0 %v921, 111
  %v929 = vpop.permute.xlu0 %928
  %vm930 = vcmask 908288
  %v931 = vsel %vm930, %v923, %v925
  %v932 = vsel %vm930, %v927, %v929
  %937 = vst [vmem:[#allocation1] ss:$2 sm:$0xff] %v17
  %v938 = vld.sshfl [vmem:[#allocation1] sm:$0xff pattern:$0x75316420]
  %s939 = scalar_lea.vmem [#allocation1], 16
  %940 = vst [vmem:[%s939] ss:$2 sm:$0xff] %v18
  %v941 = vld.sshfl [vmem:[#allocation1 + $0x10] sm:$0xff pattern:$0x75316420]
  %942 = vrot.lane.b32.xlu0 %v938, 111
  %v943 = vpop.permute.xlu0 %942
  %944 = vrot.lane.b32.xlu0 %v941, 111
  %v945 = vpop.permute.xlu0 %944
  %v948 = vsel %vm930, %v925, %v943
  %v949 = vsel %vm930, %v929, %v945
  %v951 = vperm.slane %v47, 0
  %v952 = vperm.slane %v47, 1
  %v955 = vmul.f32 %v931, %v951
  %v956 = vmul.f32 %v948, %v952
  %v957 = vmul.f32 %v932, %v951
  %v958 = vmul.f32 %v949, %v952
  %959 = vset.pattern.permute.xlu0 32
  %960 = vperm.xlu0 %959, %v19
  %v961 = vpop.permute.xlu0 %960
  %v963 = vperm.slane %v955, 0
  %v964 = vperm.slane %v956, 0
  %v965 = vperm.slane %v957, 0
  %v966 = vperm.slane %v958, 0
  %v967 = vmul.f32 %v961, %v963
  %v968 = vmul.f32 %v961, %v964
  %v969 = vmul.f32 %v961, %v965
  %v970 = vmul.f32 %v961, %v966
  %v971 = vadd.f32 %v911, %v967
  %v972 = vadd.f32 %v912, %v968
  %v973 = vadd.f32 %v913, %v969
  %v974 = vadd.f32 %v914, %v970
  %975 = vset.pattern.permute.xlu0 33
  %976 = vperm.xlu0 %975, %v19
  %v977 = vpop.permute.xlu0 %976
  %v979 = vperm.slane %v955, 1
  %v980 = vperm.slane %v956, 1
  %v981 = vperm.slane %v957, 1
  %v982 = vperm.slane %v958, 1
  %v983 = vmul.f32 %v977, %v979
  %v984 = vmul.f32 %v977, %v980
  %v985 = vmul.f32 %v977, %v981
  %v986 = vmul.f32 %v977, %v982
  %v987 = vadd.f32 %v971, %v983
  %v988 = vadd.f32 %v972, %v984
  %v989 = vadd.f32 %v973, %v985
  %v990 = vadd.f32 %v974, %v986
  %991 = vset.pattern.permute.xlu0 34
  %992 = vperm.xlu0 %991, %v19
  %v993 = vpop.permute.xlu0 %992
  %v995 = vperm.slane %v955, 2
  %v996 = vperm.slane %v956, 2
  %v997 = vperm.slane %v957, 2
  %v998 = vperm.slane %v958, 2
  %v999 = vmul.f32 %v993, %v995
  %v1000 = vmul.f32 %v993, %v996
  %v1001 = vmul.f32 %v993, %v997
  %v1002 = vmul.f32 %v993, %v998
  %v1003 = vadd.f32 %v987, %v999
  %v1004 = vadd.f32 %v988, %v1000
  %v1005 = vadd.f32 %v989, %v1001
  %v1006 = vadd.f32 %v990, %v1002
  %1007 = vset.pattern.permute.xlu0 35
  %1008 = vperm.xlu0 %1007, %v19
  %v1009 = vpop.permute.xlu0 %1008
  %v1011 = vperm.slane %v955, 3
  %v1012 = vperm.slane %v956, 3
  %v1013 = vperm.slane %v957, 3
  %v1014 = vperm.slane %v958, 3
  %v1015 = vmul.f32 %v1009, %v1011
  %v1016 = vmul.f32 %v1009, %v1012
  %v1017 = vmul.f32 %v1009, %v1013
  %v1018 = vmul.f32 %v1009, %v1014
  %v1019 = vadd.f32 %v1003, %v1015
  %v1020 = vadd.f32 %v1004, %v1016
  %v1021 = vadd.f32 %v1005, %v1017
  %v1022 = vadd.f32 %v1006, %v1018
  %1024 = vset.pattern.permute.xlu0 0
  %1025 = vperm.xlu0 %1024, %v26
  %v1026 = vpop.permute.xlu0 %1025
  %v1028 = vadd.f32 %v1019, %v1026
  %v1029 = vadd.f32 %v1020, %v1026
  %v1030 = vadd.f32 %v1021, %v1026
  %v1031 = vadd.f32 %v1022, %v1026
  %v1032 = vmul.f32 %v1028, 0.1
  %v1033 = vmul.f32 %v1029, 0.1
  %v1034 = vmul.f32 %v1030, 0.1
  %v1035 = vmul.f32 %v1031, 0.1
  %v1036 = vmax.f32 %v1028, %v1032
  %v1037 = vmax.f32 %v1029, %v1033
  %v1038 = vmax.f32 %v1030, %v1034
  %v1039 = vmax.f32 %v1031, %v1035
  %1042 = vrot.lane.b32.xlu0 %v1037, 34
  %v1043 = vpop.permute.xlu0 %1042
  %1044 = vrot.lane.b32.xlu0 %v1039, 34
  %v1045 = vpop.permute.xlu0 %1044
  %1050 = vrot.lane.b32.xlu0 %v1036, 34
  %v1051 = vpop.permute.xlu0 %1050
  %1052 = vrot.lane.b32.xlu0 %v1038, 34
  %v1053 = vpop.permute.xlu0 %1052
  %vm1054 = vcmask 277504
  %v1055 = vsel %vm1054, %v1051, %v1043
  %v1056 = vsel %vm1054, %v1053, %v1045
  %v1061 = vsel %vm1054, %v1043, %v1051
  %v1062 = vsel %vm1054, %v1045, %v1053
  %v1064 = vperm.slane %v49, 0
  %v1065 = vperm.slane %v49, 1
  %v1068 = vmul.f32 %v1061, %v1064
  %v1069 = vmul.f32 %v1055, %v1065
  %v1070 = vmul.f32 %v1062, %v1064
  %v1071 = vmul.f32 %v1056, %v1065
  %1073 = vset.pattern.permute.xlu0 0
  %1074 = vperm.xlu0 %1073, %v21
  %v1075 = vpop.permute.xlu0 %1074
  %v1077 = vperm.slane %v1068, 0
  %v1078 = vperm.slane %v1069, 0
  %v1079 = vperm.slane %v1070, 0
  %v1080 = vperm.slane %v1071, 0
  %v1081 = vmul.f32 %v1075, %v1077
  %v1082 = vmul.f32 %v1075, %v1078
  %v1083 = vmul.f32 %v1075, %v1079
  %v1084 = vmul.f32 %v1075, %v1080
  %1085 = vset.pattern.permute.xlu0 1
  %1086 = vperm.xlu0 %1085, %v21
  %v1087 = vpop.permute.xlu0 %1086
  %v1089 = vperm.slane %v1068, 1
  %v1090 = vperm.slane %v1069, 1
  %v1091 = vperm.slane %v1070, 1
  %v1092 = vperm.slane %v1071, 1
  %v1093 = vmul.f32 %v1087, %v1089
  %v1094 = vmul.f32 %v1087, %v1090
  %v1095 = vmul.f32 %v1087, %v1091
  %v1096 = vmul.f32 %v1087, %v1092
  %v1097 = vadd.f32 %v1081, %v1093
  %v1098 = vadd.f32 %v1082, %v1094
  %v1099 = vadd.f32 %v1083, %v1095
  %v1100 = vadd.f32 %v1084, %v1096
  %1101 = vset.pattern.permute.xlu0 2
  %1102 = vperm.xlu0 %1101, %v21
  %v1103 = vpop.permute.xlu0 %1102
  %v1105 = vperm.slane %v1068, 2
  %v1106 = vperm.slane %v1069, 2
  %v1107 = vperm.slane %v1070, 2
  %v1108 = vperm.slane %v1071, 2
  %v1109 = vmul.f32 %v1103, %v1105
  %v1110 = vmul.f32 %v1103, %v1106
  %v1111 = vmul.f32 %v1103, %v1107
  %v1112 = vmul.f32 %v1103, %v1108
  %v1113 = vadd.f32 %v1097, %v1109
  %v1114 = vadd.f32 %v1098, %v1110
  %v1115 = vadd.f32 %v1099, %v1111
  %v1116 = vadd.f32 %v1100, %v1112
  %1117 = vset.pattern.permute.xlu0 3
  %1118 = vperm.xlu0 %1117, %v21
  %v1119 = vpop.permute.xlu0 %1118
  %v1121 = vperm.slane %v1068, 3
  %v1122 = vperm.slane %v1069, 3
  %v1123 = vperm.slane %v1070, 3
  %v1124 = vperm.slane %v1071, 3
  %v1125 = vmul.f32 %v1119, %v1121
  %v1126 = vmul.f32 %v1119, %v1122
  %v1127 = vmul.f32 %v1119, %v1123
  %v1128 = vmul.f32 %v1119, %v1124
  %v1129 = vadd.f32 %v1113, %v1125
  %v1130 = vadd.f32 %v1114, %v1126
  %v1131 = vadd.f32 %v1115, %v1127
  %v1132 = vadd.f32 %v1116, %v1128
  %1133 = vrot.lane.b32.xlu0 %v1037, 32
  %v1134 = vpop.permute.xlu0 %1133
  %1135 = vrot.lane.b32.xlu0 %v1039, 32
  %v1136 = vpop.permute.xlu0 %1135
  %1139 = vrot.lane.b32.xlu0 %v1036, 32
  %v1140 = vpop.permute.xlu0 %1139
  %1141 = vrot.lane.b32.xlu0 %v1038, 32
  %v1142 = vpop.permute.xlu0 %1141
  %vm1143 = vcmask 261120
  %v1144 = vsel %vm1143, %v1140, %v1134
  %v1145 = vsel %vm1143, %v1142, %v1136
  %v1150 = vsel %vm1143, %v1134, %v1140
  %v1151 = vsel %vm1143, %v1136, %v1142
  %v1153 = vperm.slane %v51, 0
  %v1154 = vperm.slane %v51, 1
  %v1157 = vmul.f32 %v1150, %v1153
  %v1158 = vmul.f32 %v1144, %v1154
  %v1159 = vmul.f32 %v1151, %v1153
  %v1160 = vmul.f32 %v1145, %v1154
  %1161 = vset.pattern.permute.xlu0 4
  %1162 = vperm.xlu0 %1161, %v21
  %v1163 = vpop.permute.xlu0 %1162
  %v1165 = vperm.slane %v1157, 0
  %v1166 = vperm.slane %v1158, 0
  %v1167 = vperm.slane %v1159, 0
  %v1168 = vperm.slane %v1160, 0
  %v1169 = vmul.f32 %v1163, %v1165
  %v1170 = vmul.f32 %v1163, %v1166
  %v1171 = vmul.f32 %v1163, %v1167
  %v1172 = vmul.f32 %v1163, %v1168
  %v1173 = vadd.f32 %v1129, %v1169
  %v1174 = vadd.f32 %v1130, %v1170
  %v1175 = vadd.f32 %v1131, %v1171
  %v1176 = vadd.f32 %v1132, %v1172
  %1177 = vset.pattern.permute.xlu0 5
  %1178 = vperm.xlu0 %1177, %v21
  %v1179 = vpop.permute.xlu0 %1178
  %v1181 = vperm.slane %v1157, 1
  %v1182 = vperm.slane %v1158, 1
  %v1183 = vperm.slane %v1159, 1
  %v1184 = vperm.slane %v1160, 1
  %v1185 = vmul.f32 %v1179, %v1181
  %v1186 = vmul.f32 %v1179, %v1182
  %v1187 = vmul.f32 %v1179, %v1183
  %v1188 = vmul.f32 %v1179, %v1184
  %v1189 = vadd.f32 %v1173, %v1185
  %v1190 = vadd.f32 %v1174, %v1186
  %v1191 = vadd.f32 %v1175, %v1187
  %v1192 = vadd.f32 %v1176, %v1188
  %1193 = vset.pattern.permute.xlu0 6
  %1194 = vperm.xlu0 %1193, %v21
  %v1195 = vpop.permute.xlu0 %1194
  %v1197 = vperm.slane %v1157, 2
  %v1198 = vperm.slane %v1158, 2
  %v1199 = vperm.slane %v1159, 2
  %v1200 = vperm.slane %v1160, 2
  %v1201 = vmul.f32 %v1195, %v1197
  %v1202 = vmul.f32 %v1195, %v1198
  %v1203 = vmul.f32 %v1195, %v1199
  %v1204 = vmul.f32 %v1195, %v1200
  %v1205 = vadd.f32 %v1189, %v1201
  %v1206 = vadd.f32 %v1190, %v1202
  %v1207 = vadd.f32 %v1191, %v1203
  %v1208 = vadd.f32 %v1192, %v1204
  %1209 = vset.pattern.permute.xlu0 7
  %1210 = vperm.xlu0 %1209, %v21
  %v1211 = vpop.permute.xlu0 %1210
  %v1213 = vperm.slane %v1157, 3
  %v1214 = vperm.slane %v1158, 3
  %v1215 = vperm.slane %v1159, 3
  %v1216 = vperm.slane %v1160, 3
  %v1217 = vmul.f32 %v1211, %v1213
  %v1218 = vmul.f32 %v1211, %v1214
  %v1219 = vmul.f32 %v1211, %v1215
  %v1220 = vmul.f32 %v1211, %v1216
  %v1221 = vadd.f32 %v1205, %v1217
  %v1222 = vadd.f32 %v1206, %v1218
  %v1223 = vadd.f32 %v1207, %v1219
  %v1224 = vadd.f32 %v1208, %v1220
  %1225 = vrot.lane.b32.xlu0 %v1037, 30
  %v1226 = vpop.permute.xlu0 %1225
  %1227 = vrot.lane.b32.xlu0 %v1039, 30
  %v1228 = vpop.permute.xlu0 %1227
  %1231 = vrot.lane.b32.xlu0 %v1036, 30
  %v1232 = vpop.permute.xlu0 %1231
  %1233 = vrot.lane.b32.xlu0 %v1038, 30
  %v1234 = vpop.permute.xlu0 %1233
  %vm1235 = vcmask 244736
  %v1236 = vsel %vm1235, %v1232, %v1226
  %v1237 = vsel %vm1235, %v1234, %v1228
  %v1242 = vsel %vm1235, %v1226, %v1232
  %v1243 = vsel %vm1235, %v1228, %v1234
  %v1245 = vperm.slane %v53, 0
  %v1246 = vperm.slane %v53, 1
  %v1249 = vmul.f32 %v1242, %v1245
  %v1250 = vmul.f32 %v1236, %v1246
  %v1251 = vmul.f32 %v1243, %v1245
  %v1252 = vmul.f32 %v1237, %v1246
  %1253 = vset.pattern.permute.xlu0 8
  %1254 = vperm.xlu0 %1253, %v21
  %v1255 = vpop.permute.xlu0 %1254
  %v1257 = vperm.slane %v1249, 0
  %v1258 = vperm.slane %v1250, 0
  %v1259 = vperm.slane %v1251, 0
  %v1260 = vperm.slane %v1252, 0
  %v1261 = vmul.f32 %v1255, %v1257
  %v1262 = vmul.f32 %v1255, %v1258
  %v1263 = vmul.f32 %v1255, %v1259
  %v1264 = vmul.f32 %v1255, %v1260
  %v1265 = vadd.f32 %v1221, %v1261
  %v1266 = vadd.f32 %v1222, %v1262
  %v1267 = vadd.f32 %v1223, %v1263
  %v1268 = vadd.f32 %v1224, %v1264
  %1269 = vset.pattern.permute.xlu0 9
  %1270 = vperm.xlu0 %1269, %v21
  %v1271 = vpop.permute.xlu0 %1270
  %v1273 = vperm.slane %v1249, 1
  %v1274 = vperm.slane %v1250, 1
  %v1275 = vperm.slane %v1251, 1
  %v1276 = vperm.slane %v1252, 1
  %v1277 = vmul.f32 %v1271, %v1273
  %v1278 = vmul.f32 %v1271, %v1274
  %v1279 = vmul.f32 %v1271, %v1275
  %v1280 = vmul.f32 %v1271, %v1276
  %v1281 = vadd.f32 %v1265, %v1277
  %v1282 = vadd.f32 %v1266, %v1278
  %v1283 = vadd.f32 %v1267, %v1279
  %v1284 = vadd.f32 %v1268, %v1280
  %1285 = vset.pattern.permute.xlu0 10
  %1286 = vperm.xlu0 %1285, %v21
  %v1287 = vpop.permute.xlu0 %1286
  %v1289 = vperm.slane %v1249, 2
  %v1290 = vperm.slane %v1250, 2
  %v1291 = vperm.slane %v1251, 2
  %v1292 = vperm.slane %v1252, 2
  %v1293 = vmul.f32 %v1287, %v1289
  %v1294 = vmul.f32 %v1287, %v1290
  %v1295 = vmul.f32 %v1287, %v1291
  %v1296 = vmul.f32 %v1287, %v1292
  %v1297 = vadd.f32 %v1281, %v1293
  %v1298 = vadd.f32 %v1282, %v1294
  %v1299 = vadd.f32 %v1283, %v1295
  %v1300 = vadd.f32 %v1284, %v1296
  %1301 = vset.pattern.permute.xlu0 11
  %1302 = vperm.xlu0 %1301, %v21
  %v1303 = vpop.permute.xlu0 %1302
  %v1305 = vperm.slane %v1249, 3
  %v1306 = vperm.slane %v1250, 3
  %v1307 = vperm.slane %v1251, 3
  %v1308 = vperm.slane %v1252, 3
  %v1309 = vmul.f32 %v1303, %v1305
  %v1310 = vmul.f32 %v1303, %v1306
  %v1311 = vmul.f32 %v1303, %v1307
  %v1312 = vmul.f32 %v1303, %v1308
  %v1313 = vadd.f32 %v1297, %v1309
  %v1314 = vadd.f32 %v1298, %v1310
  %v1315 = vadd.f32 %v1299, %v1311
  %v1316 = vadd.f32 %v1300, %v1312
  %1317 = vrot.lane.b32.xlu0 %v1037, 2
  %v1318 = vpop.permute.xlu0 %1317
  %1319 = vrot.lane.b32.xlu0 %v1039, 2
  %v1320 = vpop.permute.xlu0 %1319
  %1323 = vrot.lane.b32.xlu0 %v1036, 2
  %v1324 = vpop.permute.xlu0 %1323
  %1325 = vrot.lane.b32.xlu0 %v1038, 2
  %v1326 = vpop.permute.xlu0 %1325
  %vm1327 = vcmask 15360
  %v1328 = vsel %vm1327, %v1324, %v1318
  %v1329 = vsel %vm1327, %v1326, %v1320
  %v1334 = vsel %vm1327, %v1318, %v1324
  %v1335 = vsel %vm1327, %v1320, %v1326
  %v1337 = vperm.slane %v55, 0
  %v1338 = vperm.slane %v55, 1
  %v1341 = vmul.f32 %v1334, %v1337
  %v1342 = vmul.f32 %v1328, %v1338
  %v1343 = vmul.f32 %v1335, %v1337
  %v1344 = vmul.f32 %v1329, %v1338
  %1345 = vset.pattern.permute.xlu0 12
  %1346 = vperm.xlu0 %1345, %v21
  %v1347 = vpop.permute.xlu0 %1346
  %v1349 = vperm.slane %v1341, 0
  %v1350 = vperm.slane %v1342, 0
  %v1351 = vperm.slane %v1343, 0
  %v1352 = vperm.slane %v1344, 0
  %v1353 = vmul.f32 %v1347, %v1349
  %v1354 = vmul.f32 %v1347, %v1350
  %v1355 = vmul.f32 %v1347, %v1351
  %v1356 = vmul.f32 %v1347, %v1352
  %v1357 = vadd.f32 %v1313, %v1353
  %v1358 = vadd.f32 %v1314, %v1354
  %v1359 = vadd.f32 %v1315, %v1355
  %v1360 = vadd.f32 %v1316, %v1356
  %1361 = vset.pattern.permute.xlu0 13
  %1362 = vperm.xlu0 %1361, %v21
  %v1363 = vpop.permute.xlu0 %1362
  %v1365 = vperm.slane %v1341, 1
  %v1366 = vperm.slane %v1342, 1
  %v1367 = vperm.slane %v1343, 1
  %v1368 = vperm.slane %v1344, 1
  %v1369 = vmul.f32 %v1363, %v1365
  %v1370 = vmul.f32 %v1363, %v1366
  %v1371 = vmul.f32 %v1363, %v1367
  %v1372 = vmul.f32 %v1363, %v1368
  %v1373 = vadd.f32 %v1357, %v1369
  %v1374 = vadd.f32 %v1358, %v1370
  %v1375 = vadd.f32 %v1359, %v1371
  %v1376 = vadd.f32 %v1360, %v1372
  %1377 = vset.pattern.permute.xlu0 14
  %1378 = vperm.xlu0 %1377, %v21
  %v1379 = vpop.permute.xlu0 %1378
  %v1381 = vperm.slane %v1341, 2
  %v1382 = vperm.slane %v1342, 2
  %v1383 = vperm.slane %v1343, 2
  %v1384 = vperm.slane %v1344, 2
  %v1385 = vmul.f32 %v1379, %v1381
  %v1386 = vmul.f32 %v1379, %v1382
  %v1387 = vmul.f32 %v1379, %v1383
  %v1388 = vmul.f32 %v1379, %v1384
  %v1389 = vadd.f32 %v1373, %v1385
  %v1390 = vadd.f32 %v1374, %v1386
  %v1391 = vadd.f32 %v1375, %v1387
  %v1392 = vadd.f32 %v1376, %v1388
  %1393 = vset.pattern.permute.xlu0 15
  %1394 = vperm.xlu0 %1393, %v21
  %v1395 = vpop.permute.xlu0 %1394
  %v1397 = vperm.slane %v1341, 3
  %v1398 = vperm.slane %v1342, 3
  %v1399 = vperm.slane %v1343, 3
  %v1400 = vperm.slane %v1344, 3
  %v1401 = vmul.f32 %v1395, %v1397
  %v1402 = vmul.f32 %v1395, %v1398
  %v1403 = vmul.f32 %v1395, %v1399
  %v1404 = vmul.f32 %v1395, %v1400
  %v1405 = vadd.f32 %v1389, %v1401
  %v1406 = vadd.f32 %v1390, %v1402
  %v1407 = vadd.f32 %v1391, %v1403
  %v1408 = vadd.f32 %v1392, %v1404
  %1409 = vset.pattern.permute.xlu0 16
  %1410 = vperm.xlu0 %1409, %v21
  %v1411 = vpop.permute.xlu0 %1410
  %v1413 = vperm.slane %v1036, 0
  %v1414 = vperm.slane %v1037, 0
  %v1415 = vperm.slane %v1038, 0
  %v1416 = vperm.slane %v1039, 0
  %v1417 = vmul.f32 %v1411, %v1413
  %v1418 = vmul.f32 %v1411, %v1414
  %v1419 = vmul.f32 %v1411, %v1415
  %v1420 = vmul.f32 %v1411, %v1416
  %v1421 = vadd.f32 %v1405, %v1417
  %v1422 = vadd.f32 %v1406, %v1418
  %v1423 = vadd.f32 %v1407, %v1419
  %v1424 = vadd.f32 %v1408, %v1420
  %1425 = vset.pattern.permute.xlu0 17
  %1426 = vperm.xlu0 %1425, %v21
  %v1427 = vpop.permute.xlu0 %1426
  %v1429 = vperm.slane %v1036, 1
  %v1430 = vperm.slane %v1037, 1
  %v1431 = vperm.slane %v1038, 1
  %v1432 = vperm.slane %v1039, 1
  %v1433 = vmul.f32 %v1427, %v1429
  %v1434 = vmul.f32 %v1427, %v1430
  %v1435 = vmul.f32 %v1427, %v1431
  %v1436 = vmul.f32 %v1427, %v1432
  %v1437 = vadd.f32 %v1421, %v1433
  %v1438 = vadd.f32 %v1422, %v1434
  %v1439 = vadd.f32 %v1423, %v1435
  %v1440 = vadd.f32 %v1424, %v1436
  %1441 = vset.pattern.permute.xlu0 18
  %1442 = vperm.xlu0 %1441, %v21
  %v1443 = vpop.permute.xlu0 %1442
  %v1445 = vperm.slane %v1036, 2
  %v1446 = vperm.slane %v1037, 2
  %v1447 = vperm.slane %v1038, 2
  %v1448 = vperm.slane %v1039, 2
  %v1449 = vmul.f32 %v1443, %v1445
  %v1450 = vmul.f32 %v1443, %v1446
  %v1451 = vmul.f32 %v1443, %v1447
  %v1452 = vmul.f32 %v1443, %v1448
  %v1453 = vadd.f32 %v1437, %v1449
  %v1454 = vadd.f32 %v1438, %v1450
  %v1455 = vadd.f32 %v1439, %v1451
  %v1456 = vadd.f32 %v1440, %v1452
  %1457 = vset.pattern.permute.xlu0 19
  %1458 = vperm.xlu0 %1457, %v21
  %v1459 = vpop.permute.xlu0 %1458
  %v1461 = vperm.slane %v1036, 3
  %v1462 = vperm.slane %v1037, 3
  %v1463 = vperm.slane %v1038, 3
  %v1464 = vperm.slane %v1039, 3
  %v1465 = vmul.f32 %v1459, %v1461
  %v1466 = vmul.f32 %v1459, %v1462
  %v1467 = vmul.f32 %v1459, %v1463
  %v1468 = vmul.f32 %v1459, %v1464
  %v1469 = vadd.f32 %v1453, %v1465
  %v1470 = vadd.f32 %v1454, %v1466
  %v1471 = vadd.f32 %v1455, %v1467
  %v1472 = vadd.f32 %v1456, %v1468
  %1473 = vrot.lane.b32.xlu0 %v1036, 126
  %v1474 = vpop.permute.xlu0 %1473
  %1475 = vrot.lane.b32.xlu0 %v1037, 126
  %v1476 = vpop.permute.xlu0 %1475
  %1477 = vrot.lane.b32.xlu0 %v1038, 126
  %v1478 = vpop.permute.xlu0 %1477
  %1479 = vrot.lane.b32.xlu0 %v1039, 126
  %v1480 = vpop.permute.xlu0 %1479
  %vm1481 = vcmask 1031168
  %v1482 = vsel %vm1481, %v1474, %v1476
  %v1483 = vsel %vm1481, %v1478, %v1480
  %v1490 = vsel %vm1481, %v1476, %v1474
  %v1491 = vsel %vm1481, %v1480, %v1478
  %v1493 = vperm.slane %v57, 0
  %v1494 = vperm.slane %v57, 1
  %v1497 = vmul.f32 %v1482, %v1493
  %v1498 = vmul.f32 %v1490, %v1494
  %v1499 = vmul.f32 %v1483, %v1493
  %v1500 = vmul.f32 %v1491, %v1494
  %1501 = vset.pattern.permute.xlu0 20
  %1502 = vperm.xlu0 %1501, %v21
  %v1503 = vpop.permute.xlu0 %1502
  %v1505 = vperm.slane %v1497, 0
  %v1506 = vperm.slane %v1498, 0
  %v1507 = vperm.slane %v1499, 0
  %v1508 = vperm.slane %v1500, 0
  %v1509 = vmul.f32 %v1503, %v1505
  %v1510 = vmul.f32 %v1503, %v1506
  %v1511 = vmul.f32 %v1503, %v1507
  %v1512 = vmul.f32 %v1503, %v1508
  %v1513 = vadd.f32 %v1469, %v1509
  %v1514 = vadd.f32 %v1470, %v1510
  %v1515 = vadd.f32 %v1471, %v1511
  %v1516 = vadd.f32 %v1472, %v1512
  %1517 = vset.pattern.permute.xlu0 21
  %1518 = vperm.xlu0 %1517, %v21
  %v1519 = vpop.permute.xlu0 %1518
  %v1521 = vperm.slane %v1497, 1
  %v1522 = vperm.slane %v1498, 1
  %v1523 = vperm.slane %v1499, 1
  %v1524 = vperm.slane %v1500, 1
  %v1525 = vmul.f32 %v1519, %v1521
  %v1526 = vmul.f32 %v1519, %v1522
  %v1527 = vmul.f32 %v1519, %v1523
  %v1528 = vmul.f32 %v1519, %v1524
  %v1529 = vadd.f32 %v1513, %v1525
  %v1530 = vadd.f32 %v1514, %v1526
  %v1531 = vadd.f32 %v1515, %v1527
  %v1532 = vadd.f32 %v1516, %v1528
  %1533 = vset.pattern.permute.xlu0 22
  %1534 = vperm.xlu0 %1533, %v21
  %v1535 = vpop.permute.xlu0 %1534
  %v1537 = vperm.slane %v1497, 2
  %v1538 = vperm.slane %v1498, 2
  %v1539 = vperm.slane %v1499, 2
  %v1540 = vperm.slane %v1500, 2
  %v1541 = vmul.f32 %v1535, %v1537
  %v1542 = vmul.f32 %v1535, %v1538
  %v1543 = vmul.f32 %v1535, %v1539
  %v1544 = vmul.f32 %v1535, %v1540
  %v1545 = vadd.f32 %v1529, %v1541
  %v1546 = vadd.f32 %v1530, %v1542
  %v1547 = vadd.f32 %v1531, %v1543
  %v1548 = vadd.f32 %v1532, %v1544
  %1549 = vset.pattern.permute.xlu0 23
  %1550 = vperm.xlu0 %1549, %v21
  %v1551 = vpop.permute.xlu0 %1550
  %v1553 = vperm.slane %v1497, 3
  %v1554 = vperm.slane %v1498, 3
  %v1555 = vperm.slane %v1499, 3
  %v1556 = vperm.slane %v1500, 3
  %v1557 = vmul.f32 %v1551, %v1553
  %v1558 = vmul.f32 %v1551, %v1554
  %v1559 = vmul.f32 %v1551, %v1555
  %v1560 = vmul.f32 %v1551, %v1556
  %v1561 = vadd.f32 %v1545, %v1557
  %v1562 = vadd.f32 %v1546, %v1558
  %v1563 = vadd.f32 %v1547, %v1559
  %v1564 = vadd.f32 %v1548, %v1560
  %1565 = vrot.lane.b32.xlu0 %v1036, 98
  %v1566 = vpop.permute.xlu0 %1565
  %1567 = vrot.lane.b32.xlu0 %v1037, 98
  %v1568 = vpop.permute.xlu0 %1567
  %1569 = vrot.lane.b32.xlu0 %v1038, 98
  %v1570 = vpop.permute.xlu0 %1569
  %1571 = vrot.lane.b32.xlu0 %v1039, 98
  %v1572 = vpop.permute.xlu0 %1571
  %vm1573 = vcmask 801792
  %v1574 = vsel %vm1573, %v1566, %v1568
  %v1575 = vsel %vm1573, %v1570, %v1572
  %v1582 = vsel %vm1573, %v1568, %v1566
  %v1583 = vsel %vm1573, %v1572, %v1570
  %v1585 = vperm.slane %v59, 0
  %v1586 = vperm.slane %v59, 1
  %v1589 = vmul.f32 %v1574, %v1585
  %v1590 = vmul.f32 %v1582, %v1586
  %v1591 = vmul.f32 %v1575, %v1585
  %v1592 = vmul.f32 %v1583, %v1586
  %1593 = vset.pattern.permute.xlu0 24
  %1594 = vperm.xlu0 %1593, %v21
  %v1595 = vpop.permute.xlu0 %1594
  %v1597 = vperm.slane %v1589, 0
  %v1598 = vperm.slane %v1590, 0
  %v1599 = vperm.slane %v1591, 0
  %v1600 = vperm.slane %v1592, 0
  %v1601 = vmul.f32 %v1595, %v1597
  %v1602 = vmul.f32 %v1595, %v1598
  %v1603 = vmul.f32 %v1595, %v1599
  %v1604 = vmul.f32 %v1595, %v1600
  %v1605 = vadd.f32 %v1561, %v1601
  %v1606 = vadd.f32 %v1562, %v1602
  %v1607 = vadd.f32 %v1563, %v1603
  %v1608 = vadd.f32 %v1564, %v1604
  %1609 = vset.pattern.permute.xlu0 25
  %1610 = vperm.xlu0 %1609, %v21
  %v1611 = vpop.permute.xlu0 %1610
  %v1613 = vperm.slane %v1589, 1
  %v1614 = vperm.slane %v1590, 1
  %v1615 = vperm.slane %v1591, 1
  %v1616 = vperm.slane %v1592, 1
  %v1617 = vmul.f32 %v1611, %v1613
  %v1618 = vmul.f32 %v1611, %v1614
  %v1619 = vmul.f32 %v1611, %v1615
  %v1620 = vmul.f32 %v1611, %v1616
  %v1621 = vadd.f32 %v1605, %v1617
  %v1622 = vadd.f32 %v1606, %v1618
  %v1623 = vadd.f32 %v1607, %v1619
  %v1624 = vadd.f32 %v1608, %v1620
  %1625 = vset.pattern.permute.xlu0 26
  %1626 = vperm.xlu0 %1625, %v21
  %v1627 = vpop.permute.xlu0 %1626
  %v1629 = vperm.slane %v1589, 2
  %v1630 = vperm.slane %v1590, 2
  %v1631 = vperm.slane %v1591, 2
  %v1632 = vperm.slane %v1592, 2
  %v1633 = vmul.f32 %v1627, %v1629
  %v1634 = vmul.f32 %v1627, %v1630
  %v1635 = vmul.f32 %v1627, %v1631
  %v1636 = vmul.f32 %v1627, %v1632
  %v1637 = vadd.f32 %v1621, %v1633
  %v1638 = vadd.f32 %v1622, %v1634
  %v1639 = vadd.f32 %v1623, %v1635
  %v1640 = vadd.f32 %v1624, %v1636
  %1641 = vset.pattern.permute.xlu0 27
  %1642 = vperm.xlu0 %1641, %v21
  %v1643 = vpop.permute.xlu0 %1642
  %v1645 = vperm.slane %v1589, 3
  %v1646 = vperm.slane %v1590, 3
  %v1647 = vperm.slane %v1591, 3
  %v1648 = vperm.slane %v1592, 3
  %v1649 = vmul.f32 %v1643, %v1645
  %v1650 = vmul.f32 %v1643, %v1646
  %v1651 = vmul.f32 %v1643, %v1647
  %v1652 = vmul.f32 %v1643, %v1648
  %v1653 = vadd.f32 %v1637, %v1649
  %v1654 = vadd.f32 %v1638, %v1650
  %v1655 = vadd.f32 %v1639, %v1651
  %v1656 = vadd.f32 %v1640, %v1652
  %1657 = vrot.lane.b32.xlu0 %v1036, 96
  %v1658 = vpop.permute.xlu0 %1657
  %1659 = vrot.lane.b32.xlu0 %v1037, 96
  %v1660 = vpop.permute.xlu0 %1659
  %1661 = vrot.lane.b32.xlu0 %v1038, 96
  %v1662 = vpop.permute.xlu0 %1661
  %1663 = vrot.lane.b32.xlu0 %v1039, 96
  %v1664 = vpop.permute.xlu0 %1663
  %vm1665 = vcmask 785408
  %v1666 = vsel %vm1665, %v1658, %v1660
  %v1667 = vsel %vm1665, %v1662, %v1664
  %v1674 = vsel %vm1665, %v1660, %v1658
  %v1675 = vsel %vm1665, %v1664, %v1662
  %v1677 = vperm.slane %v61, 0
  %v1678 = vperm.slane %v61, 1
  %v1681 = vmul.f32 %v1666, %v1677
  %v1682 = vmul.f32 %v1674, %v1678
  %v1683 = vmul.f32 %v1667, %v1677
  %v1684 = vmul.f32 %v1675, %v1678
  %1685 = vset.pattern.permute.xlu0 28
  %1686 = vperm.xlu0 %1685, %v21
  %v1687 = vpop.permute.xlu0 %1686
  %v1689 = vperm.slane %v1681, 0
  %v1690 = vperm.slane %v1682, 0
  %v1691 = vperm.slane %v1683, 0
  %v1692 = vperm.slane %v1684, 0
  %v1693 = vmul.f32 %v1687, %v1689
  %v1694 = vmul.f32 %v1687, %v1690
  %v1695 = vmul.f32 %v1687, %v1691
  %v1696 = vmul.f32 %v1687, %v1692
  %v1697 = vadd.f32 %v1653, %v1693
  %v1698 = vadd.f32 %v1654, %v1694
  %v1699 = vadd.f32 %v1655, %v1695
  %v1700 = vadd.f32 %v1656, %v1696
  %1701 = vset.pattern.permute.xlu0 29
  %1702 = vperm.xlu0 %1701, %v21
  %v1703 = vpop.permute.xlu0 %1702
  %v1705 = vperm.slane %v1681, 1
  %v1706 = vperm.slane %v1682, 1
  %v1707 = vperm.slane %v1683, 1
  %v1708 = vperm.slane %v1684, 1
  %v1709 = vmul.f32 %v1703, %v1705
  %v1710 = vmul.f32 %v1703, %v1706
  %v1711 = vmul.f32 %v1703, %v1707
  %v1712 = vmul.f32 %v1703, %v1708
  %v1713 = vadd.f32 %v1697, %v1709
  %v1714 = vadd.f32 %v1698, %v1710
  %v1715 = vadd.f32 %v1699, %v1711
  %v1716 = vadd.f32 %v1700, %v1712
  %1717 = vset.pattern.permute.xlu0 30
  %1718 = vperm.xlu0 %1717, %v21
  %v1719 = vpop.permute.xlu0 %1718
  %v1721 = vperm.slane %v1681, 2
  %v1722 = vperm.slane %v1682, 2
  %v1723 = vperm.slane %v1683, 2
  %v1724 = vperm.slane %v1684, 2
  %v1725 = vmul.f32 %v1719, %v1721
  %v1726 = vmul.f32 %v1719, %v1722
  %v1727 = vmul.f32 %v1719, %v1723
  %v1728 = vmul.f32 %v1719, %v1724
  %v1729 = vadd.f32 %v1713, %v1725
  %v1730 = vadd.f32 %v1714, %v1726
  %v1731 = vadd.f32 %v1715, %v1727
  %v1732 = vadd.f32 %v1716, %v1728
  %1733 = vset.pattern.permute.xlu0 31
  %1734 = vperm.xlu0 %1733, %v21
  %v1735 = vpop.permute.xlu0 %1734
  %v1737 = vperm.slane %v1681, 3
  %v1738 = vperm.slane %v1682, 3
  %v1739 = vperm.slane %v1683, 3
  %v1740 = vperm.slane %v1684, 3
  %v1741 = vmul.f32 %v1735, %v1737
  %v1742 = vmul.f32 %v1735, %v1738
  %v1743 = vmul.f32 %v1735, %v1739
  %v1744 = vmul.f32 %v1735, %v1740
  %v1745 = vadd.f32 %v1729, %v1741
  %v1746 = vadd.f32 %v1730, %v1742
  %v1747 = vadd.f32 %v1731, %v1743
  %v1748 = vadd.f32 %v1732, %v1744
  %1749 = vrot.lane.b32.xlu0 %v1036, 94
  %v1750 = vpop.permute.xlu0 %1749
  %1751 = vrot.lane.b32.xlu0 %v1037, 94
  %v1752 = vpop.permute.xlu0 %1751
  %1753 = vrot.lane.b32.xlu0 %v1038, 94
  %v1754 = vpop.permute.xlu0 %1753
  %1755 = vrot.lane.b32.xlu0 %v1039, 94
  %v1756 = vpop.permute.xlu0 %1755
  %vm1757 = vcmask 769024
  %v1758 = vsel %vm1757, %v1750, %v1752
  %v1759 = vsel %vm1757, %v1754, %v1756
  %v1766 = vsel %vm1757, %v1752, %v1750
  %v1767 = vsel %vm1757, %v1756, %v1754
  %v1769 = vperm.slane %v63, 0
  %v1770 = vperm.slane %v63, 1
  %v1773 = vmul.f32 %v1758, %v1769
  %v1774 = vmul.f32 %v1766, %v1770
  %v1775 = vmul.f32 %v1759, %v1769
  %v1776 = vmul.f32 %v1767, %v1770
  %1777 = vset.pattern.permute.xlu0 32
  %1778 = vperm.xlu0 %1777, %v21
  %v1779 = vpop.permute.xlu0 %1778
  %v1781 = vperm.slane %v1773, 0
  %v1782 = vperm.slane %v1774, 0
  %v1783 = vperm.slane %v1775, 0
  %v1784 = vperm.slane %v1776, 0
  %v1785 = vmul.f32 %v1779, %v1781
  %v1786 = vmul.f32 %v1779, %v1782
  %v1787 = vmul.f32 %v1779, %v1783
  %v1788 = vmul.f32 %v1779, %v1784
  %v1789 = vadd.f32 %v1745, %v1785
  %v1790 = vadd.f32 %v1746, %v1786
  %v1791 = vadd.f32 %v1747, %v1787
  %v1792 = vadd.f32 %v1748, %v1788
  %1793 = vset.pattern.permute.xlu0 33
  %1794 = vperm.xlu0 %1793, %v21
  %v1795 = vpop.permute.xlu0 %1794
  %v1797 = vperm.slane %v1773, 1
  %v1798 = vperm.slane %v1774, 1
  %v1799 = vperm.slane %v1775, 1
  %v1800 = vperm.slane %v1776, 1
  %v1801 = vmul.f32 %v1795, %v1797
  %v1802 = vmul.f32 %v1795, %v1798
  %v1803 = vmul.f32 %v1795, %v1799
  %v1804 = vmul.f32 %v1795, %v1800
  %v1805 = vadd.f32 %v1789, %v1801
  %v1806 = vadd.f32 %v1790, %v1802
  %v1807 = vadd.f32 %v1791, %v1803
  %v1808 = vadd.f32 %v1792, %v1804
  %1809 = vset.pattern.permute.xlu0 34
  %1810 = vperm.xlu0 %1809, %v21
  %v1811 = vpop.permute.xlu0 %1810
  %v1813 = vperm.slane %v1773, 2
  %v1814 = vperm.slane %v1774, 2
  %v1815 = vperm.slane %v1775, 2
  %v1816 = vperm.slane %v1776, 2
  %v1817 = vmul.f32 %v1811, %v1813
  %v1818 = vmul.f32 %v1811, %v1814
  %v1819 = vmul.f32 %v1811, %v1815
  %v1820 = vmul.f32 %v1811, %v1816
  %v1821 = vadd.f32 %v1805, %v1817
  %v1822 = vadd.f32 %v1806, %v1818
  %v1823 = vadd.f32 %v1807, %v1819
  %v1824 = vadd.f32 %v1808, %v1820
  %1825 = vset.pattern.permute.xlu0 35
  %1826 = vperm.xlu0 %1825, %v21
  %v1827 = vpop.permute.xlu0 %1826
  %v1829 = vperm.slane %v1773, 3
  %v1830 = vperm.slane %v1774, 3
  %v1831 = vperm.slane %v1775, 3
  %v1832 = vperm.slane %v1776, 3
  %v1833 = vmul.f32 %v1827, %v1829
  %v1834 = vmul.f32 %v1827, %v1830
  %v1835 = vmul.f32 %v1827, %v1831
  %v1836 = vmul.f32 %v1827, %v1832
  %v1837 = vadd.f32 %v1821, %v1833
  %v1838 = vadd.f32 %v1822, %v1834
  %v1839 = vadd.f32 %v1823, %v1835
  %v1840 = vadd.f32 %v1824, %v1836
  %1842 = vset.pattern.permute.xlu0 0
  %1843 = vperm.xlu0 %1842, %v28
  %v1844 = vpop.permute.xlu0 %1843
  %v1846 = vadd.f32 %v1837, %v1844
  %v1847 = vadd.f32 %v1838, %v1844
  %v1848 = vadd.f32 %v1839, %v1844
  %v1849 = vadd.f32 %v1840, %v1844
  %v1854 = vrot.slane %v1847, 4
  %v1855 = vrot.slane %v1849, 4
  %vm1856 = vcmask 1043456
  %v1857 = vsel %vm1856, %v1846, %v1854
  %v1858 = vsel %vm1856, %v1848, %v1855
  %v1861 = vadd.f32 %v17, %v1857
  %v1862 = vadd.f32 %v18, %v1858
  %1865 = vst [vmem:[#allocation1] ss:$2 sm:$0xff] %v1861
  %v1866 = vld.sshfl [vmem:[#allocation1 + $0x8] sm:$0xff pattern:$0x75316420]
  %s1867 = scalar_lea.vmem [#allocation1], 16
  %1868 = vst [vmem:[%s1867] ss:$2 sm:$0xff] %v1862
  %v1869 = vld.sshfl [vmem:[#allocation1 + $0x18] sm:$0xff pattern:$0x75316420]
  %1870 = vrot.lane.b32.xlu0 %v1866, 17
  %v1871 = vpop.permute.xlu0 %1870
  %1872 = vrot.lane.b32.xlu0 %v1869, 17
  %v1873 = vpop.permute.xlu0 %1872
  %1876 = vst [vmem:[#allocation1] ss:$2 sm:$0xff] %v1861
  %v1877 = vld.sshfl [vmem:[#allocation1] sm:$0xff pattern:$0x75316420]
  %v1878 = vld.sshfl [vmem:[#allocation1 + $0x8] sm:$0xff pattern:$0x75316420]
  %s1879 = scalar_lea.vmem [#allocation1], 16
  %1880 = vst [vmem:[%s1879] ss:$2 sm:$0xff] %v1862
  %v1881 = vld.sshfl [vmem:[#allocation1 + $0x10] sm:$0xff pattern:$0x75316420]
  %v1882 = vld.sshfl [vmem:[#allocation1 + $0x18] sm:$0xff pattern:$0x75316420]
  %1883 = vrot.lane.b32.xlu0 %v1877, 17
  %v1884 = vpop.permute.xlu0 %1883
  %1885 = vrot.lane.b32.xlu0 %v1878, 17
  %v1886 = vpop.permute.xlu0 %1885
  %1887 = vrot.lane.b32.xlu0 %v1881, 17
  %v1888 = vpop.permute.xlu0 %1887
  %1889 = vrot.lane.b32.xlu0 %v1882, 17
  %v1890 = vpop.permute.xlu0 %1889
  %v1891 = vsel %vm92, %v1884, %v1886
  %v1892 = vsel %vm92, %v1888, %v1890
  %v1897 = vsel %vm92, %v1871, %v1884
  %v1898 = vsel %vm92, %v1873, %v1888
  %v1899 = vmul.f32 %v1897, %v102
  %v1900 = vmul.f32 %v1891, %v103
  %v1901 = vmul.f32 %v1898, %v102
  %v1902 = vmul.f32 %v1892, %v103
  %1904 = vset.pattern.permute.xlu0 0
  %1905 = vperm.xlu0 %1904, %v23
  %v1906 = vpop.permute.xlu0 %1905
  %v1908 = vperm.slane %v1899, 0
  %v1909 = vperm.slane %v1900, 0
  %v1910 = vperm.slane %v1901, 0
  %v1911 = vperm.slane %v1902, 0
  %v1912 = vmul.f32 %v1906, %v1908
  %v1913 = vmul.f32 %v1906, %v1909
  %v1914 = vmul.f32 %v1906, %v1910
  %v1915 = vmul.f32 %v1906, %v1911
  %1916 = vset.pattern.permute.xlu0 1
  %1917 = vperm.xlu0 %1916, %v23
  %v1918 = vpop.permute.xlu0 %1917
  %v1920 = vperm.slane %v1899, 1
  %v1921 = vperm.slane %v1900, 1
  %v1922 = vperm.slane %v1901, 1
  %v1923 = vperm.slane %v1902, 1
  %v1924 = vmul.f32 %v1918, %v1920
  %v1925 = vmul.f32 %v1918, %v1921
  %v1926 = vmul.f32 %v1918, %v1922
  %v1927 = vmul.f32 %v1918, %v1923
  %v1928 = vadd.f32 %v1912, %v1924
  %v1929 = vadd.f32 %v1913, %v1925
  %v1930 = vadd.f32 %v1914, %v1926
  %v1931 = vadd.f32 %v1915, %v1927
  %1932 = vset.pattern.permute.xlu0 2
  %1933 = vperm.xlu0 %1932, %v23
  %v1934 = vpop.permute.xlu0 %1933
  %v1936 = vperm.slane %v1899, 2
  %v1937 = vperm.slane %v1900, 2
  %v1938 = vperm.slane %v1901, 2
  %v1939 = vperm.slane %v1902, 2
  %v1940 = vmul.f32 %v1934, %v1936
  %v1941 = vmul.f32 %v1934, %v1937
  %v1942 = vmul.f32 %v1934, %v1938
  %v1943 = vmul.f32 %v1934, %v1939
  %v1944 = vadd.f32 %v1928, %v1940
  %v1945 = vadd.f32 %v1929, %v1941
  %v1946 = vadd.f32 %v1930, %v1942
  %v1947 = vadd.f32 %v1931, %v1943
  %1948 = vset.pattern.permute.xlu0 3
  %1949 = vperm.xlu0 %1948, %v23
  %v1950 = vpop.permute.xlu0 %1949
  %v1952 = vperm.slane %v1899, 3
  %v1953 = vperm.slane %v1900, 3
  %v1954 = vperm.slane %v1901, 3
  %v1955 = vperm.slane %v1902, 3
  %v1956 = vmul.f32 %v1950, %v1952
  %v1957 = vmul.f32 %v1950, %v1953
  %v1958 = vmul.f32 %v1950, %v1954
  %v1959 = vmul.f32 %v1950, %v1955
  %v1960 = vadd.f32 %v1944, %v1956
  %v1961 = vadd.f32 %v1945, %v1957
  %v1962 = vadd.f32 %v1946, %v1958
  %v1963 = vadd.f32 %v1947, %v1959
  %1964 = vst [vmem:[#allocation1] ss:$2 sm:$0xff] %v1861
  %v1965 = vld.sshfl [vmem:[#allocation1 + $0x8] sm:$0xff pattern:$0x75316420]
  %s1966 = scalar_lea.vmem [#allocation1], 16
  %1967 = vst [vmem:[%s1966] ss:$2 sm:$0xff] %v1862
  %v1968 = vld.sshfl [vmem:[#allocation1 + $0x18] sm:$0xff pattern:$0x75316420]
  %1969 = vrot.lane.b32.xlu0 %v1965, 16
  %v1970 = vpop.permute.xlu0 %1969
  %1971 = vrot.lane.b32.xlu0 %v1968, 16
  %v1972 = vpop.permute.xlu0 %1971
  %1975 = vst [vmem:[#allocation1] ss:$2 sm:$0xff] %v1861
  %v1976 = vld.sshfl [vmem:[#allocation1] sm:$0xff pattern:$0x75316420]
  %v1977 = vld.sshfl [vmem:[#allocation1 + $0x8] sm:$0xff pattern:$0x75316420]
  %s1978 = scalar_lea.vmem [#allocation1], 16
  %1979 = vst [vmem:[%s1978] ss:$2 sm:$0xff] %v1862
  %v1980 = vld.sshfl [vmem:[#allocation1 + $0x10] sm:$0xff pattern:$0x75316420]
  %v1981 = vld.sshfl [vmem:[#allocation1 + $0x18] sm:$0xff pattern:$0x75316420]
  %1982 = vrot.lane.b32.xlu0 %v1976, 16
  %v1983 = vpop.permute.xlu0 %1982
  %1984 = vrot.lane.b32.xlu0 %v1977, 16
  %v1985 = vpop.permute.xlu0 %1984
  %1986 = vrot.lane.b32.xlu0 %v1980, 16
  %v1987 = vpop.permute.xlu0 %1986
  %1988 = vrot.lane.b32.xlu0 %v1981, 16
  %v1989 = vpop.permute.xlu0 %1988
  %v1990 = vsel %vm197, %v1983, %v1985
  %v1991 = vsel %vm197, %v1987, %v1989
  %v1996 = vsel %vm197, %v1970, %v1983
  %v1997 = vsel %vm197, %v1972, %v1987
  %v1998 = vmul.f32 %v1996, %v207
  %v1999 = vmul.f32 %v1990, %v208
  %v2000 = vmul.f32 %v1997, %v207
  %v2001 = vmul.f32 %v1991, %v208
  %2002 = vset.pattern.permute.xlu0 4
  %2003 = vperm.xlu0 %2002, %v23
  %v2004 = vpop.permute.xlu0 %2003
  %v2006 = vperm.slane %v1998, 0
  %v2007 = vperm.slane %v1999, 0
  %v2008 = vperm.slane %v2000, 0
  %v2009 = vperm.slane %v2001, 0
  %v2010 = vmul.f32 %v2004, %v2006
  %v2011 = vmul.f32 %v2004, %v2007
  %v2012 = vmul.f32 %v2004, %v2008
  %v2013 = vmul.f32 %v2004, %v2009
  %v2014 = vadd.f32 %v1960, %v2010
  %v2015 = vadd.f32 %v1961, %v2011
  %v2016 = vadd.f32 %v1962, %v2012
  %v2017 = vadd.f32 %v1963, %v2013
  %2018 = vset.pattern.permute.xlu0 5
  %2019 = vperm.xlu0 %2018, %v23
  %v2020 = vpop.permute.xlu0 %2019
  %v2022 = vperm.slane %v1998, 1
  %v2023 = vperm.slane %v1999, 1
  %v2024 = vperm.slane %v2000, 1
  %v2025 = vperm.slane %v2001, 1
  %v2026 = vmul.f32 %v2020, %v2022
  %v2027 = vmul.f32 %v2020, %v2023
  %v2028 = vmul.f32 %v2020, %v2024
  %v2029 = vmul.f32 %v2020, %v2025
  %v2030 = vadd.f32 %v2014, %v2026
  %v2031 = vadd.f32 %v2015, %v2027
  %v2032 = vadd.f32 %v2016, %v2028
  %v2033 = vadd.f32 %v2017, %v2029
  %2034 = vset.pattern.permute.xlu0 6
  %2035 = vperm.xlu0 %2034, %v23
  %v2036 = vpop.permute.xlu0 %2035
  %v2038 = vperm.slane %v1998, 2
  %v2039 = vperm.slane %v1999, 2
  %v2040 = vperm.slane %v2000, 2
  %v2041 = vperm.slane %v2001, 2
  %v2042 = vmul.f32 %v2036, %v2038
  %v2043 = vmul.f32 %v2036, %v2039
  %v2044 = vmul.f32 %v2036, %v2040
  %v2045 = vmul.f32 %v2036, %v2041
  %v2046 = vadd.f32 %v2030, %v2042
  %v2047 = vadd.f32 %v2031, %v2043
  %v2048 = vadd.f32 %v2032, %v2044
  %v2049 = vadd.f32 %v2033, %v2045
  %2050 = vset.pattern.permute.xlu0 7
  %2051 = vperm.xlu0 %2050, %v23
  %v2052 = vpop.permute.xlu0 %2051
  %v2054 = vperm.slane %v1998, 3
  %v2055 = vperm.slane %v1999, 3
  %v2056 = vperm.slane %v2000, 3
  %v2057 = vperm.slane %v2001, 3
  %v2058 = vmul.f32 %v2052, %v2054
  %v2059 = vmul.f32 %v2052, %v2055
  %v2060 = vmul.f32 %v2052, %v2056
  %v2061 = vmul.f32 %v2052, %v2057
  %v2062 = vadd.f32 %v2046, %v2058
  %v2063 = vadd.f32 %v2047, %v2059
  %v2064 = vadd.f32 %v2048, %v2060
  %v2065 = vadd.f32 %v2049, %v2061
  %2066 = vst [vmem:[#allocation1] ss:$2 sm:$0xff] %v1861
  %v2067 = vld.sshfl [vmem:[#allocation1 + $0x8] sm:$0xff pattern:$0x75316420]
  %s2068 = scalar_lea.vmem [#allocation1], 16
  %2069 = vst [vmem:[%s2068] ss:$2 sm:$0xff] %v1862
  %v2070 = vld.sshfl [vmem:[#allocation1 + $0x18] sm:$0xff pattern:$0x75316420]
  %2071 = vrot.lane.b32.xlu0 %v2067, 15
  %v2072 = vpop.permute.xlu0 %2071
  %2073 = vrot.lane.b32.xlu0 %v2070, 15
  %v2074 = vpop.permute.xlu0 %2073
  %2077 = vst [vmem:[#allocation1] ss:$2 sm:$0xff] %v1861
  %v2078 = vld.sshfl [vmem:[#allocation1] sm:$0xff pattern:$0x75316420]
  %v2079 = vld.sshfl [vmem:[#allocation1 + $0x8] sm:$0xff pattern:$0x75316420]
  %s2080 = scalar_lea.vmem [#allocation1], 16
  %2081 = vst [vmem:[%s2080] ss:$2 sm:$0xff] %v1862
  %v2082 = vld.sshfl [vmem:[#allocation1 + $0x10] sm:$0xff pattern:$0x75316420]
  %v2083 = vld.sshfl [vmem:[#allocation1 + $0x18] sm:$0xff pattern:$0x75316420]
  %2084 = vrot.lane.b32.xlu0 %v2078, 15
  %v2085 = vpop.permute.xlu0 %2084
  %2086 = vrot.lane.b32.xlu0 %v2079, 15
  %v2087 = vpop.permute.xlu0 %2086
  %2088 = vrot.lane.b32.xlu0 %v2082, 15
  %v2089 = vpop.permute.xlu0 %2088
  %2090 = vrot.lane.b32.xlu0 %v2083, 15
  %v2091 = vpop.permute.xlu0 %2090
  %v2092 = vsel %vm305, %v2085, %v2087
  %v2093 = vsel %vm305, %v2089, %v2091
  %v2098 = vsel %vm305, %v2072, %v2085
  %v2099 = vsel %vm305, %v2074, %v2089
  %v2100 = vmul.f32 %v2098, %v315
  %v2101 = vmul.f32 %v2092, %v316
  %v2102 = vmul.f32 %v2099, %v315
  %v2103 = vmul.f32 %v2093, %v316
  %2104 = vset.pattern.permute.xlu0 8
  %2105 = vperm.xlu0 %2104, %v23
  %v2106 = vpop.permute.xlu0 %2105
  %v2108 = vperm.slane %v2100, 0
  %v2109 = vperm.slane %v2101, 0
  %v2110 = vperm.slane %v2102, 0
  %v2111 = vperm.slane %v2103, 0
  %v2112 = vmul.f32 %v2106, %v2108
  %v2113 = vmul.f32 %v2106, %v2109
  %v2114 = vmul.f32 %v2106, %v2110
  %v2115 = vmul.f32 %v2106, %v2111
  %v2116 = vadd.f32 %v2062, %v2112
  %v2117 = vadd.f32 %v2063, %v2113
  %v2118 = vadd.f32 %v2064, %v2114
  %v2119 = vadd.f32 %v2065, %v2115
  %2120 = vset.pattern.permute.xlu0 9
  %2121 = vperm.xlu0 %2120, %v23
  %v2122 = vpop.permute.xlu0 %2121
  %v2124 = vperm.slane %v2100, 1
  %v2125 = vperm.slane %v2101, 1
  %v2126 = vperm.slane %v2102, 1
  %v2127 = vperm.slane %v2103, 1
  %v2128 = vmul.f32 %v2122, %v2124
  %v2129 = vmul.f32 %v2122, %v2125
  %v2130 = vmul.f32 %v2122, %v2126
  %v2131 = vmul.f32 %v2122, %v2127
  %v2132 = vadd.f32 %v2116, %v2128
  %v2133 = vadd.f32 %v2117, %v2129
  %v2134 = vadd.f32 %v2118, %v2130
  %v2135 = vadd.f32 %v2119, %v2131
  %2136 = vset.pattern.permute.xlu0 10
  %2137 = vperm.xlu0 %2136, %v23
  %v2138 = vpop.permute.xlu0 %2137
  %v2140 = vperm.slane %v2100, 2
  %v2141 = vperm.slane %v2101, 2
  %v2142 = vperm.slane %v2102, 2
  %v2143 = vperm.slane %v2103, 2
  %v2144 = vmul.f32 %v2138, %v2140
  %v2145 = vmul.f32 %v2138, %v2141
  %v2146 = vmul.f32 %v2138, %v2142
  %v2147 = vmul.f32 %v2138, %v2143
  %v2148 = vadd.f32 %v2132, %v2144
  %v2149 = vadd.f32 %v2133, %v2145
  %v2150 = vadd.f32 %v2134, %v2146
  %v2151 = vadd.f32 %v2135, %v2147
  %2152 = vset.pattern.permute.xlu0 11
  %2153 = vperm.xlu0 %2152, %v23
  %v2154 = vpop.permute.xlu0 %2153
  %v2156 = vperm.slane %v2100, 3
  %v2157 = vperm.slane %v2101, 3
  %v2158 = vperm.slane %v2102, 3
  %v2159 = vperm.slane %v2103, 3
  %v2160 = vmul.f32 %v2154, %v2156
  %v2161 = vmul.f32 %v2154, %v2157
  %v2162 = vmul.f32 %v2154, %v2158
  %v2163 = vmul.f32 %v2154, %v2159
  %v2164 = vadd.f32 %v2148, %v2160
  %v2165 = vadd.f32 %v2149, %v2161
  %v2166 = vadd.f32 %v2150, %v2162
  %v2167 = vadd.f32 %v2151, %v2163
  %2168 = vst [vmem:[#allocation1] ss:$2 sm:$0xff] %v1861
  %v2169 = vld.sshfl [vmem:[#allocation1 + $0x8] sm:$0xff pattern:$0x75316420]
  %s2170 = scalar_lea.vmem [#allocation1], 16
  %2171 = vst [vmem:[%s2170] ss:$2 sm:$0xff] %v1862
  %v2172 = vld.sshfl [vmem:[#allocation1 + $0x18] sm:$0xff pattern:$0x75316420]
  %2173 = vrot.lane.b32.xlu0 %v2169, 1
  %v2174 = vpop.permute.xlu0 %2173
  %2175 = vrot.lane.b32.xlu0 %v2172, 1
  %v2176 = vpop.permute.xlu0 %2175
  %2179 = vst [vmem:[#allocation1] ss:$2 sm:$0xff] %v1861
  %v2180 = vld.sshfl [vmem:[#allocation1] sm:$0xff pattern:$0x75316420]
  %v2181 = vld.sshfl [vmem:[#allocation1 + $0x8] sm:$0xff pattern:$0x75316420]
  %s2182 = scalar_lea.vmem [#allocation1], 16
  %2183 = vst [vmem:[%s2182] ss:$2 sm:$0xff] %v1862
  %v2184 = vld.sshfl [vmem:[#allocation1 + $0x10] sm:$0xff pattern:$0x75316420]
  %v2185 = vld.sshfl [vmem:[#allocation1 + $0x18] sm:$0xff pattern:$0x75316420]
  %2186 = vrot.lane.b32.xlu0 %v2180, 1
  %v2187 = vpop.permute.xlu0 %2186
  %2188 = vrot.lane.b32.xlu0 %v2181, 1
  %v2189 = vpop.permute.xlu0 %2188
  %2190 = vrot.lane.b32.xlu0 %v2184, 1
  %v2191 = vpop.permute.xlu0 %2190
  %2192 = vrot.lane.b32.xlu0 %v2185, 1
  %v2193 = vpop.permute.xlu0 %2192
  %v2194 = vsel %vm413, %v2187, %v2189
  %v2195 = vsel %vm413, %v2191, %v2193
  %v2200 = vsel %vm413, %v2174, %v2187
  %v2201 = vsel %vm413, %v2176, %v2191
  %v2202 = vmul.f32 %v2200, %v423
  %v2203 = vmul.f32 %v2194, %v424
  %v2204 = vmul.f32 %v2201, %v423
  %v2205 = vmul.f32 %v2195, %v424
  %2206 = vset.pattern.permute.xlu0 12
  %2207 = vperm.xlu0 %2206, %v23
  %v2208 = vpop.permute.xlu0 %2207
  %v2210 = vperm.slane %v2202, 0
  %v2211 = vperm.slane %v2203, 0
  %v2212 = vperm.slane %v2204, 0
  %v2213 = vperm.slane %v2205, 0
  %v2214 = vmul.f32 %v2208, %v2210
  %v2215 = vmul.f32 %v2208, %v2211
  %v2216 = vmul.f32 %v2208, %v2212
  %v2217 = vmul.f32 %v2208, %v2213
  %v2218 = vadd.f32 %v2164, %v2214
  %v2219 = vadd.f32 %v2165, %v2215
  %v2220 = vadd.f32 %v2166, %v2216
  %v2221 = vadd.f32 %v2167, %v2217
  %2222 = vset.pattern.permute.xlu0 13
  %2223 = vperm.xlu0 %2222, %v23
  %v2224 = vpop.permute.xlu0 %2223
  %v2226 = vperm.slane %v2202, 1
  %v2227 = vperm.slane %v2203, 1
  %v2228 = vperm.slane %v2204, 1
  %v2229 = vperm.slane %v2205, 1
  %v2230 = vmul.f32 %v2224, %v2226
  %v2231 = vmul.f32 %v2224, %v2227
  %v2232 = vmul.f32 %v2224, %v2228
  %v2233 = vmul.f32 %v2224, %v2229
  %v2234 = vadd.f32 %v2218, %v2230
  %v2235 = vadd.f32 %v2219, %v2231
  %v2236 = vadd.f32 %v2220, %v2232
  %v2237 = vadd.f32 %v2221, %v2233
  %2238 = vset.pattern.permute.xlu0 14
  %2239 = vperm.xlu0 %2238, %v23
  %v2240 = vpop.permute.xlu0 %2239
  %v2242 = vperm.slane %v2202, 2
  %v2243 = vperm.slane %v2203, 2
  %v2244 = vperm.slane %v2204, 2
  %v2245 = vperm.slane %v2205, 2
  %v2246 = vmul.f32 %v2240, %v2242
  %v2247 = vmul.f32 %v2240, %v2243
  %v2248 = vmul.f32 %v2240, %v2244
  %v2249 = vmul.f32 %v2240, %v2245
  %v2250 = vadd.f32 %v2234, %v2246
  %v2251 = vadd.f32 %v2235, %v2247
  %v2252 = vadd.f32 %v2236, %v2248
  %v2253 = vadd.f32 %v2237, %v2249
  %2254 = vset.pattern.permute.xlu0 15
  %2255 = vperm.xlu0 %2254, %v23
  %v2256 = vpop.permute.xlu0 %2255
  %v2258 = vperm.slane %v2202, 3
  %v2259 = vperm.slane %v2203, 3
  %v2260 = vperm.slane %v2204, 3
  %v2261 = vperm.slane %v2205, 3
  %v2262 = vmul.f32 %v2256, %v2258
  %v2263 = vmul.f32 %v2256, %v2259
  %v2264 = vmul.f32 %v2256, %v2260
  %v2265 = vmul.f32 %v2256, %v2261
  %v2266 = vadd.f32 %v2250, %v2262
  %v2267 = vadd.f32 %v2251, %v2263
  %v2268 = vadd.f32 %v2252, %v2264
  %v2269 = vadd.f32 %v2253, %v2265
  %2270 = vset.pattern.permute.xlu0 16
  %2271 = vperm.xlu0 %2270, %v23
  %v2272 = vpop.permute.xlu0 %2271
  %v2274 = vperm.slane %v1861, 0
  %v2275 = vperm.slane %v1861, 4
  %v2276 = vperm.slane %v1862, 0
  %v2277 = vperm.slane %v1862, 4
  %v2282 = vperm.slane %v2274, 0
  %v2283 = vperm.slane %v2275, 0
  %v2284 = vperm.slane %v2276, 0
  %v2285 = vperm.slane %v2277, 0
  %v2286 = vmul.f32 %v2272, %v2282
  %v2287 = vmul.f32 %v2272, %v2283
  %v2288 = vmul.f32 %v2272, %v2284
  %v2289 = vmul.f32 %v2272, %v2285
  %v2290 = vadd.f32 %v2266, %v2286
  %v2291 = vadd.f32 %v2267, %v2287
  %v2292 = vadd.f32 %v2268, %v2288
  %v2293 = vadd.f32 %v2269, %v2289
  %2294 = vset.pattern.permute.xlu0 17
  %2295 = vperm.xlu0 %2294, %v23
  %v2296 = vpop.permute.xlu0 %2295
  %v2298 = vperm.slane %v1861, 1
  %v2299 = vperm.slane %v1861, 5
  %v2300 = vperm.slane %v1862, 1
  %v2301 = vperm.slane %v1862, 5
  %v2306 = vperm.slane %v2298, 1
  %v2307 = vperm.slane %v2299, 1
  %v2308 = vperm.slane %v2300, 1
  %v2309 = vperm.slane %v2301, 1
  %v2310 = vmul.f32 %v2296, %v2306
  %v2311 = vmul.f32 %v2296, %v2307
  %v2312 = vmul.f32 %v2296, %v2308
  %v2313 = vmul.f32 %v2296, %v2309
  %v2314 = vadd.f32 %v2290, %v2310
  %v2315 = vadd.f32 %v2291, %v2311
  %v2316 = vadd.f32 %v2292, %v2312
  %v2317 = vadd.f32 %v2293, %v2313
  %2318 = vset.pattern.permute.xlu0 18
  %2319 = vperm.xlu0 %2318, %v23
  %v2320 = vpop.permute.xlu0 %2319
  %v2322 = vperm.slane %v1861, 2
  %v2323 = vperm.slane %v1861, 6
  %v2324 = vperm.slane %v1862, 2
  %v2325 = vperm.slane %v1862, 6
  %v2330 = vperm.slane %v2322, 2
  %v2331 = vperm.slane %v2323, 2
  %v2332 = vperm.slane %v2324, 2
  %v2333 = vperm.slane %v2325, 2
  %v2334 = vmul.f32 %v2320, %v2330
  %v2335 = vmul.f32 %v2320, %v2331
  %v2336 = vmul.f32 %v2320, %v2332
  %v2337 = vmul.f32 %v2320, %v2333
  %v2338 = vadd.f32 %v2314, %v2334
  %v2339 = vadd.f32 %v2315, %v2335
  %v2340 = vadd.f32 %v2316, %v2336
  %v2341 = vadd.f32 %v2317, %v2337
  %2342 = vset.pattern.permute.xlu0 19
  %2343 = vperm.xlu0 %2342, %v23
  %v2344 = vpop.permute.xlu0 %2343
  %v2346 = vperm.slane %v1861, 3
  %v2347 = vperm.slane %v1861, 7
  %v2348 = vperm.slane %v1862, 3
  %v2349 = vperm.slane %v1862, 7
  %v2354 = vperm.slane %v2346, 3
  %v2355 = vperm.slane %v2347, 3
  %v2356 = vperm.slane %v2348, 3
  %v2357 = vperm.slane %v2349, 3
  %v2358 = vmul.f32 %v2344, %v2354
  %v2359 = vmul.f32 %v2344, %v2355
  %v2360 = vmul.f32 %v2344, %v2356
  %v2361 = vmul.f32 %v2344, %v2357
  %v2362 = vadd.f32 %v2338, %v2358
  %v2363 = vadd.f32 %v2339, %v2359
  %v2364 = vadd.f32 %v2340, %v2360
  %v2365 = vadd.f32 %v2341, %v2361
  %2366 = vst [vmem:[#allocation1] ss:$2 sm:$0xff] %v1861
  %v2367 = vld.sshfl [vmem:[#allocation1] sm:$0xff pattern:$0x75316420]
  %v2368 = vld.sshfl [vmem:[#allocation1 + $0x8] sm:$0xff pattern:$0x75316420]
  %s2369 = scalar_lea.vmem [#allocation1], 16
  %2370 = vst [vmem:[%s2369] ss:$2 sm:$0xff] %v1862
  %v2371 = vld.sshfl [vmem:[#allocation1 + $0x10] sm:$0xff pattern:$0x75316420]
  %v2372 = vld.sshfl [vmem:[#allocation1 + $0x18] sm:$0xff pattern:$0x75316420]
  %2373 = vrot.lane.b32.xlu0 %v2367, 127
  %v2374 = vpop.permute.xlu0 %2373
  %2375 = vrot.lane.b32.xlu0 %v2368, 127
  %v2376 = vpop.permute.xlu0 %2375
  %2377 = vrot.lane.b32.xlu0 %v2371, 127
  %v2378 = vpop.permute.xlu0 %2377
  %2379 = vrot.lane.b32.xlu0 %v2372, 127
  %v2380 = vpop.permute.xlu0 %2379
  %v2381 = vsel %vm606, %v2374, %v2376
  %v2382 = vsel %vm606, %v2378, %v2380
  %2387 = vst [vmem:[#allocation1] ss:$2 sm:$0xff] %v1861
  %v2388 = vld.sshfl [vmem:[#allocation1] sm:$0xff pattern:$0x75316420]
  %s2389 = scalar_lea.vmem [#allocation1], 16
  %2390 = vst [vmem:[%s2389] ss:$2 sm:$0xff] %v1862
  %v2391 = vld.sshfl [vmem:[#allocation1 + $0x10] sm:$0xff pattern:$0x75316420]
  %2392 = vrot.lane.b32.xlu0 %v2388, 127
  %v2393 = vpop.permute.xlu0 %2392
  %2394 = vrot.lane.b32.xlu0 %v2391, 127
  %v2395 = vpop.permute.xlu0 %2394
  %v2398 = vsel %vm606, %v2376, %v2393
  %v2399 = vsel %vm606, %v2380, %v2395
  %v2400 = vmul.f32 %v2381, %v627
  %v2401 = vmul.f32 %v2398, %v628
  %v2402 = vmul.f32 %v2382, %v627
  %v2403 = vmul.f32 %v2399, %v628
  %2404 = vset.pattern.permute.xlu0 20
  %2405 = vperm.xlu0 %2404, %v23
  %v2406 = vpop.permute.xlu0 %2405
  %v2408 = vperm.slane %v2400, 0
  %v2409 = vperm.slane %v2401, 0
  %v2410 = vperm.slane %v2402, 0
  %v2411 = vperm.slane %v2403, 0
  %v2412 = vmul.f32 %v2406, %v2408
  %v2413 = vmul.f32 %v2406, %v2409
  %v2414 = vmul.f32 %v2406, %v2410
  %v2415 = vmul.f32 %v2406, %v2411
  %v2416 = vadd.f32 %v2362, %v2412
  %v2417 = vadd.f32 %v2363, %v2413
  %v2418 = vadd.f32 %v2364, %v2414
  %v2419 = vadd.f32 %v2365, %v2415
  %2420 = vset.pattern.permute.xlu0 21
  %2421 = vperm.xlu0 %2420, %v23
  %v2422 = vpop.permute.xlu0 %2421
  %v2424 = vperm.slane %v2400, 1
  %v2425 = vperm.slane %v2401, 1
  %v2426 = vperm.slane %v2402, 1
  %v2427 = vperm.slane %v2403, 1
  %v2428 = vmul.f32 %v2422, %v2424
  %v2429 = vmul.f32 %v2422, %v2425
  %v2430 = vmul.f32 %v2422, %v2426
  %v2431 = vmul.f32 %v2422, %v2427
  %v2432 = vadd.f32 %v2416, %v2428
  %v2433 = vadd.f32 %v2417, %v2429
  %v2434 = vadd.f32 %v2418, %v2430
  %v2435 = vadd.f32 %v2419, %v2431
  %2436 = vset.pattern.permute.xlu0 22
  %2437 = vperm.xlu0 %2436, %v23
  %v2438 = vpop.permute.xlu0 %2437
  %v2440 = vperm.slane %v2400, 2
  %v2441 = vperm.slane %v2401, 2
  %v2442 = vperm.slane %v2402, 2
  %v2443 = vperm.slane %v2403, 2
  %v2444 = vmul.f32 %v2438, %v2440
  %v2445 = vmul.f32 %v2438, %v2441
  %v2446 = vmul.f32 %v2438, %v2442
  %v2447 = vmul.f32 %v2438, %v2443
  %v2448 = vadd.f32 %v2432, %v2444
  %v2449 = vadd.f32 %v2433, %v2445
  %v2450 = vadd.f32 %v2434, %v2446
  %v2451 = vadd.f32 %v2435, %v2447
  %2452 = vset.pattern.permute.xlu0 23
  %2453 = vperm.xlu0 %2452, %v23
  %v2454 = vpop.permute.xlu0 %2453
  %v2456 = vperm.slane %v2400, 3
  %v2457 = vperm.slane %v2401, 3
  %v2458 = vperm.slane %v2402, 3
  %v2459 = vperm.slane %v2403, 3
  %v2460 = vmul.f32 %v2454, %v2456
  %v2461 = vmul.f32 %v2454, %v2457
  %v2462 = vmul.f32 %v2454, %v2458
  %v2463 = vmul.f32 %v2454, %v2459
  %v2464 = vadd.f32 %v2448, %v2460
  %v2465 = vadd.f32 %v2449, %v2461
  %v2466 = vadd.f32 %v2450, %v2462
  %v2467 = vadd.f32 %v2451, %v2463
  %2468 = vst [vmem:[#allocation1] ss:$2 sm:$0xff] %v1861
  %v2469 = vld.sshfl [vmem:[#allocation1] sm:$0xff pattern:$0x75316420]
  %v2470 = vld.sshfl [vmem:[#allocation1 + $0x8] sm:$0xff pattern:$0x75316420]
  %s2471 = scalar_lea.vmem [#allocation1], 16
  %2472 = vst [vmem:[%s2471] ss:$2 sm:$0xff] %v1862
  %v2473 = vld.sshfl [vmem:[#allocation1 + $0x10] sm:$0xff pattern:$0x75316420]
  %v2474 = vld.sshfl [vmem:[#allocation1 + $0x18] sm:$0xff pattern:$0x75316420]
  %2475 = vrot.lane.b32.xlu0 %v2469, 113
  %v2476 = vpop.permute.xlu0 %2475
  %2477 = vrot.lane.b32.xlu0 %v2470, 113
  %v2478 = vpop.permute.xlu0 %2477
  %2479 = vrot.lane.b32.xlu0 %v2473, 113
  %v2480 = vpop.permute.xlu0 %2479
  %2481 = vrot.lane.b32.xlu0 %v2474, 113
  %v2482 = vpop.permute.xlu0 %2481
  %v2483 = vsel %vm714, %v2476, %v2478
  %v2484 = vsel %vm714, %v2480, %v2482
  %2489 = vst [vmem:[#allocation1] ss:$2 sm:$0xff] %v1861
  %v2490 = vld.sshfl [vmem:[#allocation1] sm:$0xff pattern:$0x75316420]
  %s2491 = scalar_lea.vmem [#allocation1], 16
  %2492 = vst [vmem:[%s2491] ss:$2 sm:$0xff] %v1862
  %v2493 = vld.sshfl [vmem:[#allocation1 + $0x10] sm:$0xff pattern:$0x75316420]
  %2494 = vrot.lane.b32.xlu0 %v2490, 113
  %v2495 = vpop.permute.xlu0 %2494
  %2496 = vrot.lane.b32.xlu0 %v2493, 113
  %v2497 = vpop.permute.xlu0 %2496
  %v2500 = vsel %vm714, %v2478, %v2495
  %v2501 = vsel %vm714, %v2482, %v2497
  %v2502 = vmul.f32 %v2483, %v735
  %v2503 = vmul.f32 %v2500, %v736
  %v2504 = vmul.f32 %v2484, %v735
  %v2505 = vmul.f32 %v2501, %v736
  %2506 = vset.pattern.permute.xlu0 24
  %2507 = vperm.xlu0 %2506, %v23
  %v2508 = vpop.permute.xlu0 %2507
  %v2510 = vperm.slane %v2502, 0
  %v2511 = vperm.slane %v2503, 0
  %v2512 = vperm.slane %v2504, 0
  %v2513 = vperm.slane %v2505, 0
  %v2514 = vmul.f32 %v2508, %v2510
  %v2515 = vmul.f32 %v2508, %v2511
  %v2516 = vmul.f32 %v2508, %v2512
  %v2517 = vmul.f32 %v2508, %v2513
  %v2518 = vadd.f32 %v2464, %v2514
  %v2519 = vadd.f32 %v2465, %v2515
  %v2520 = vadd.f32 %v2466, %v2516
  %v2521 = vadd.f32 %v2467, %v2517
  %2522 = vset.pattern.permute.xlu0 25
  %2523 = vperm.xlu0 %2522, %v23
  %v2524 = vpop.permute.xlu0 %2523
  %v2526 = vperm.slane %v2502, 1
  %v2527 = vperm.slane %v2503, 1
  %v2528 = vperm.slane %v2504, 1
  %v2529 = vperm.slane %v2505, 1
  %v2530 = vmul.f32 %v2524, %v2526
  %v2531 = vmul.f32 %v2524, %v2527
  %v2532 = vmul.f32 %v2524, %v2528
  %v2533 = vmul.f32 %v2524, %v2529
  %v2534 = vadd.f32 %v2518, %v2530
  %v2535 = vadd.f32 %v2519, %v2531
  %v2536 = vadd.f32 %v2520, %v2532
  %v2537 = vadd.f32 %v2521, %v2533
  %2538 = vset.pattern.permute.xlu0 26
  %2539 = vperm.xlu0 %2538, %v23
  %v2540 = vpop.permute.xlu0 %2539
  %v2542 = vperm.slane %v2502, 2
  %v2543 = vperm.slane %v2503, 2
  %v2544 = vperm.slane %v2504, 2
  %v2545 = vperm.slane %v2505, 2
  %v2546 = vmul.f32 %v2540, %v2542
  %v2547 = vmul.f32 %v2540, %v2543
  %v2548 = vmul.f32 %v2540, %v2544
  %v2549 = vmul.f32 %v2540, %v2545
  %v2550 = vadd.f32 %v2534, %v2546
  %v2551 = vadd.f32 %v2535, %v2547
  %v2552 = vadd.f32 %v2536, %v2548
  %v2553 = vadd.f32 %v2537, %v2549
  %2554 = vset.pattern.permute.xlu0 27
  %2555 = vperm.xlu0 %2554, %v23
  %v2556 = vpop.permute.xlu0 %2555
  %v2558 = vperm.slane %v2502, 3
  %v2559 = vperm.slane %v2503, 3
  %v2560 = vperm.slane %v2504, 3
  %v2561 = vperm.slane %v2505, 3
  %v2562 = vmul.f32 %v2556, %v2558
  %v2563 = vmul.f32 %v2556, %v2559
  %v2564 = vmul.f32 %v2556, %v2560
  %v2565 = vmul.f32 %v2556, %v2561
  %v2566 = vadd.f32 %v2550, %v2562
  %v2567 = vadd.f32 %v2551, %v2563
  %v2568 = vadd.f32 %v2552, %v2564
  %v2569 = vadd.f32 %v2553, %v2565
  %2570 = vst [vmem:[#allocation1] ss:$2 sm:$0xff] %v1861
  %v2571 = vld.sshfl [vmem:[#allocation1] sm:$0xff pattern:$0x75316420]
  %v2572 = vld.sshfl [vmem:[#allocation1 + $0x8] sm:$0xff pattern:$0x75316420]
  %s2573 = scalar_lea.vmem [#allocation1], 16
  %2574 = vst [vmem:[%s2573] ss:$2 sm:$0xff] %v1862
  %v2575 = vld.sshfl [vmem:[#allocation1 + $0x10] sm:$0xff pattern:$0x75316420]
  %v2576 = vld.sshfl [vmem:[#allocation1 + $0x18] sm:$0xff pattern:$0x75316420]
  %2577 = vrot.lane.b32.xlu0 %v2571, 112
  %v2578 = vpop.permute.xlu0 %2577
  %2579 = vrot.lane.b32.xlu0 %v2572, 112
  %v2580 = vpop.permute.xlu0 %2579
  %2581 = vrot.lane.b32.xlu0 %v2575, 112
  %v2582 = vpop.permute.xlu0 %2581
  %2583 = vrot.lane.b32.xlu0 %v2576, 112
  %v2584 = vpop.permute.xlu0 %2583
  %v2585 = vsel %vm822, %v2578, %v2580
  %v2586 = vsel %vm822, %v2582, %v2584
  %2591 = vst [vmem:[#allocation1] ss:$2 sm:$0xff] %v1861
  %v2592 = vld.sshfl [vmem:[#allocation1] sm:$0xff pattern:$0x75316420]
  %s2593 = scalar_lea.vmem [#allocation1], 16
  %2594 = vst [vmem:[%s2593] ss:$2 sm:$0xff] %v1862
  %v2595 = vld.sshfl [vmem:[#allocation1 + $0x10] sm:$0xff pattern:$0x75316420]
  %2596 = vrot.lane.b32.xlu0 %v2592, 112
  %v2597 = vpop.permute.xlu0 %2596
  %2598 = vrot.lane.b32.xlu0 %v2595, 112
  %v2599 = vpop.permute.xlu0 %2598
  %v2602 = vsel %vm822, %v2580, %v2597
  %v2603 = vsel %vm822, %v2584, %v2599
  %v2604 = vmul.f32 %v2585, %v843
  %v2605 = vmul.f32 %v2602, %v844
  %v2606 = vmul.f32 %v2586, %v843
  %v2607 = vmul.f32 %v2603, %v844
  %2608 = vset.pattern.permute.xlu0 28
  %2609 = vperm.xlu0 %2608, %v23
  %v2610 = vpop.permute.xlu0 %2609
  %v2612 = vperm.slane %v2604, 0
  %v2613 = vperm.slane %v2605, 0
  %v2614 = vperm.slane %v2606, 0
  %v2615 = vperm.slane %v2607, 0
  %v2616 = vmul.f32 %v2610, %v2612
  %v2617 = vmul.f32 %v2610, %v2613
  %v2618 = vmul.f32 %v2610, %v2614
  %v2619 = vmul.f32 %v2610, %v2615
  %v2620 = vadd.f32 %v2566, %v2616
  %v2621 = vadd.f32 %v2567, %v2617
  %v2622 = vadd.f32 %v2568, %v2618
  %v2623 = vadd.f32 %v2569, %v2619
  %2624 = vset.pattern.permute.xlu0 29
  %2625 = vperm.xlu0 %2624, %v23
  %v2626 = vpop.permute.xlu0 %2625
  %v2628 = vperm.slane %v2604, 1
  %v2629 = vperm.slane %v2605, 1
  %v2630 = vperm.slane %v2606, 1
  %v2631 = vperm.slane %v2607, 1
  %v2632 = vmul.f32 %v2626, %v2628
  %v2633 = vmul.f32 %v2626, %v2629
  %v2634 = vmul.f32 %v2626, %v2630
  %v2635 = vmul.f32 %v2626, %v2631
  %v2636 = vadd.f32 %v2620, %v2632
  %v2637 = vadd.f32 %v2621, %v2633
  %v2638 = vadd.f32 %v2622, %v2634
  %v2639 = vadd.f32 %v2623, %v2635
  %2640 = vset.pattern.permute.xlu0 30
  %2641 = vperm.xlu0 %2640, %v23
  %v2642 = vpop.permute.xlu0 %2641
  %v2644 = vperm.slane %v2604, 2
  %v2645 = vperm.slane %v2605, 2
  %v2646 = vperm.slane %v2606, 2
  %v2647 = vperm.slane %v2607, 2
  %v2648 = vmul.f32 %v2642, %v2644
  %v2649 = vmul.f32 %v2642, %v2645
  %v2650 = vmul.f32 %v2642, %v2646
  %v2651 = vmul.f32 %v2642, %v2647
  %v2652 = vadd.f32 %v2636, %v2648
  %v2653 = vadd.f32 %v2637, %v2649
  %v2654 = vadd.f32 %v2638, %v2650
  %v2655 = vadd.f32 %v2639, %v2651
  %2656 = vset.pattern.permute.xlu0 31
  %2657 = vperm.xlu0 %2656, %v23
  %v2658 = vpop.permute.xlu0 %2657
  %v2660 = vperm.slane %v2604, 3
  %v2661 = vperm.slane %v2605, 3
  %v2662 = vperm.slane %v2606, 3
  %v2663 = vperm.slane %v2607, 3
  %v2664 = vmul.f32 %v2658, %v2660
  %v2665 = vmul.f32 %v2658, %v2661
  %v2666 = vmul.f32 %v2658, %v2662
  %v2667 = vmul.f32 %v2658, %v2663
  %v2668 = vadd.f32 %v2652, %v2664
  %v2669 = vadd.f32 %v2653, %v2665
  %v2670 = vadd.f32 %v2654, %v2666
  %v2671 = vadd.f32 %v2655, %v2667
  %2672 = vst [vmem:[#allocation1] ss:$2 sm:$0xff] %v1861
  %v2673 = vld.sshfl [vmem:[#allocation1] sm:$0xff pattern:$0x75316420]
  %v2674 = vld.sshfl [vmem:[#allocation1 + $0x8] sm:$0xff pattern:$0x75316420]
  %s2675 = scalar_lea.vmem [#allocation1], 16
  %2676 = vst [vmem:[%s2675] ss:$2 sm:$0xff] %v1862
  %v2677 = vld.sshfl [vmem:[#allocation1 + $0x10] sm:$0xff pattern:$0x75316420]
  %v2678 = vld.sshfl [vmem:[#allocation1 + $0x18] sm:$0xff pattern:$0x75316420]
  %2679 = vrot.lane.b32.xlu0 %v2673, 111
  %v2680 = vpop.permute.xlu0 %2679
  %2681 = vrot.lane.b32.xlu0 %v2674, 111
  %v2682 = vpop.permute.xlu0 %2681
  %2683 = vrot.lane.b32.xlu0 %v2677, 111
  %v2684 = vpop.permute.xlu0 %2683
  %2685 = vrot.lane.b32.xlu0 %v2678, 111
  %v2686 = vpop.permute.xlu0 %2685
  %v2687 = vsel %vm930, %v2680, %v2682
  %v2688 = vsel %vm930, %v2684, %v2686
  %2693 = vst [vmem:[#allocation1] ss:$2 sm:$0xff] %v1861
  %v2694 = vld.sshfl [vmem:[#allocation1] sm:$0xff pattern:$0x75316420]
  %s2695 = scalar_lea.vmem [#allocation1], 16
  %2696 = vst [vmem:[%s2695] ss:$2 sm:$0xff] %v1862
  %v2697 = vld.sshfl [vmem:[#allocation1 + $0x10] sm:$0xff pattern:$0x75316420]
  %2698 = vrot.lane.b32.xlu0 %v2694, 111
  %v2699 = vpop.permute.xlu0 %2698
  %2700 = vrot.lane.b32.xlu0 %v2697, 111
  %v2701 = vpop.permute.xlu0 %2700
  %v2704 = vsel %vm930, %v2682, %v2699
  %v2705 = vsel %vm930, %v2686, %v2701
  %v2706 = vmul.f32 %v2687, %v951
  %v2707 = vmul.f32 %v2704, %v952
  %v2708 = vmul.f32 %v2688, %v951
  %v2709 = vmul.f32 %v2705, %v952
  %2710 = vset.pattern.permute.xlu0 32
  %2711 = vperm.xlu0 %2710, %v23
  %v2712 = vpop.permute.xlu0 %2711
  %v2714 = vperm.slane %v2706, 0
  %v2715 = vperm.slane %v2707, 0
  %v2716 = vperm.slane %v2708, 0
  %v2717 = vperm.slane %v2709, 0
  %v2718 = vmul.f32 %v2712, %v2714
  %v2719 = vmul.f32 %v2712, %v2715
  %v2720 = vmul.f32 %v2712, %v2716
  %v2721 = vmul.f32 %v2712, %v2717
  %v2722 = vadd.f32 %v2668, %v2718
  %v2723 = vadd.f32 %v2669, %v2719
  %v2724 = vadd.f32 %v2670, %v2720
  %v2725 = vadd.f32 %v2671, %v2721
  %2726 = vset.pattern.permute.xlu0 33
  %2727 = vperm.xlu0 %2726, %v23
  %v2728 = vpop.permute.xlu0 %2727
  %v2730 = vperm.slane %v2706, 1
  %v2731 = vperm.slane %v2707, 1
  %v2732 = vperm.slane %v2708, 1
  %v2733 = vperm.slane %v2709, 1
  %v2734 = vmul.f32 %v2728, %v2730
  %v2735 = vmul.f32 %v2728, %v2731
  %v2736 = vmul.f32 %v2728, %v2732
  %v2737 = vmul.f32 %v2728, %v2733
  %v2738 = vadd.f32 %v2722, %v2734
  %v2739 = vadd.f32 %v2723, %v2735
  %v2740 = vadd.f32 %v2724, %v2736
  %v2741 = vadd.f32 %v2725, %v2737
  %2742 = vset.pattern.permute.xlu0 34
  %2743 = vperm.xlu0 %2742, %v23
  %v2744 = vpop.permute.xlu0 %2743
  %v2746 = vperm.slane %v2706, 2
  %v2747 = vperm.slane %v2707, 2
  %v2748 = vperm.slane %v2708, 2
  %v2749 = vperm.slane %v2709, 2
  %v2750 = vmul.f32 %v2744, %v2746
  %v2751 = vmul.f32 %v2744, %v2747
  %v2752 = vmul.f32 %v2744, %v2748
  %v2753 = vmul.f32 %v2744, %v2749
  %v2754 = vadd.f32 %v2738, %v2750
  %v2755 = vadd.f32 %v2739, %v2751
  %v2756 = vadd.f32 %v2740, %v2752
  %v2757 = vadd.f32 %v2741, %v2753
  %2758 = vset.pattern.permute.xlu0 35
  %2759 = vperm.xlu0 %2758, %v23
  %v2760 = vpop.permute.xlu0 %2759
  %v2762 = vperm.slane %v2706, 3
  %v2763 = vperm.slane %v2707, 3
  %v2764 = vperm.slane %v2708, 3
  %v2765 = vperm.slane %v2709, 3
  %v2766 = vmul.f32 %v2760, %v2762
  %v2767 = vmul.f32 %v2760, %v2763
  %v2768 = vmul.f32 %v2760, %v2764
  %v2769 = vmul.f32 %v2760, %v2765
  %v2770 = vadd.f32 %v2754, %v2766
  %v2771 = vadd.f32 %v2755, %v2767
  %v2772 = vadd.f32 %v2756, %v2768
  %v2773 = vadd.f32 %v2757, %v2769
  %2775 = vset.pattern.permute.xlu0 0
  %2776 = vperm.xlu0 %2775, %v30
  %v2777 = vpop.permute.xlu0 %2776
  %v2779 = vadd.f32 %v2770, %v2777
  %v2780 = vadd.f32 %v2771, %v2777
  %v2781 = vadd.f32 %v2772, %v2777
  %v2782 = vadd.f32 %v2773, %v2777
  %v2783 = vmul.f32 %v2779, 0.1
  %v2784 = vmul.f32 %v2780, 0.1
  %v2785 = vmul.f32 %v2781, 0.1
  %v2786 = vmul.f32 %v2782, 0.1
  %v2787 = vmax.f32 %v2779, %v2783
  %v2788 = vmax.f32 %v2780, %v2784
  %v2789 = vmax.f32 %v2781, %v2785
  %v2790 = vmax.f32 %v2782, %v2786
  %2793 = vrot.lane.b32.xlu0 %v2788, 34
  %v2794 = vpop.permute.xlu0 %2793
  %2795 = vrot.lane.b32.xlu0 %v2790, 34
  %v2796 = vpop.permute.xlu0 %2795
  %2801 = vrot.lane.b32.xlu0 %v2787, 34
  %v2802 = vpop.permute.xlu0 %2801
  %2803 = vrot.lane.b32.xlu0 %v2789, 34
  %v2804 = vpop.permute.xlu0 %2803
  %v2805 = vsel %vm1054, %v2802, %v2794
  %v2806 = vsel %vm1054, %v2804, %v2796
  %v2811 = vsel %vm1054, %v2794, %v2802
  %v2812 = vsel %vm1054, %v2796, %v2804
  %v2813 = vmul.f32 %v2811, %v1064
  %v2814 = vmul.f32 %v2805, %v1065
  %v2815 = vmul.f32 %v2812, %v1064
  %v2816 = vmul.f32 %v2806, %v1065
  %2818 = vset.pattern.permute.xlu0 0
  %2819 = vperm.xlu0 %2818, %v25
  %v2820 = vpop.permute.xlu0 %2819
  %v2822 = vperm.slane %v2813, 0
  %v2823 = vperm.slane %v2814, 0
  %v2824 = vperm.slane %v2815, 0
  %v2825 = vperm.slane %v2816, 0
  %v2826 = vmul.f32 %v2820, %v2822
  %v2827 = vmul.f32 %v2820, %v2823
  %v2828 = vmul.f32 %v2820, %v2824
  %v2829 = vmul.f32 %v2820, %v2825
  %2830 = vset.pattern.permute.xlu0 1
  %2831 = vperm.xlu0 %2830, %v25
  %v2832 = vpop.permute.xlu0 %2831
  %v2834 = vperm.slane %v2813, 1
  %v2835 = vperm.slane %v2814, 1
  %v2836 = vperm.slane %v2815, 1
  %v2837 = vperm.slane %v2816, 1
  %v2838 = vmul.f32 %v2832, %v2834
  %v2839 = vmul.f32 %v2832, %v2835
  %v2840 = vmul.f32 %v2832, %v2836
  %v2841 = vmul.f32 %v2832, %v2837
  %v2842 = vadd.f32 %v2826, %v2838
  %v2843 = vadd.f32 %v2827, %v2839
  %v2844 = vadd.f32 %v2828, %v2840
  %v2845 = vadd.f32 %v2829, %v2841
  %2846 = vset.pattern.permute.xlu0 2
  %2847 = vperm.xlu0 %2846, %v25
  %v2848 = vpop.permute.xlu0 %2847
  %v2850 = vperm.slane %v2813, 2
  %v2851 = vperm.slane %v2814, 2
  %v2852 = vperm.slane %v2815, 2
  %v2853 = vperm.slane %v2816, 2
  %v2854 = vmul.f32 %v2848, %v2850
  %v2855 = vmul.f32 %v2848, %v2851
  %v2856 = vmul.f32 %v2848, %v2852
  %v2857 = vmul.f32 %v2848, %v2853
  %v2858 = vadd.f32 %v2842, %v2854
  %v2859 = vadd.f32 %v2843, %v2855
  %v2860 = vadd.f32 %v2844, %v2856
  %v2861 = vadd.f32 %v2845, %v2857
  %2862 = vset.pattern.permute.xlu0 3
  %2863 = vperm.xlu0 %2862, %v25
  %v2864 = vpop.permute.xlu0 %2863
  %v2866 = vperm.slane %v2813, 3
  %v2867 = vperm.slane %v2814, 3
  %v2868 = vperm.slane %v2815, 3
  %v2869 = vperm.slane %v2816, 3
  %v2870 = vmul.f32 %v2864, %v2866
  %v2871 = vmul.f32 %v2864, %v2867
  %v2872 = vmul.f32 %v2864, %v2868
  %v2873 = vmul.f32 %v2864, %v2869
  %v2874 = vadd.f32 %v2858, %v2870
  %v2875 = vadd.f32 %v2859, %v2871
  %v2876 = vadd.f32 %v2860, %v2872
  %v2877 = vadd.f32 %v2861, %v2873
  %2878 = vrot.lane.b32.xlu0 %v2788, 32
  %v2879 = vpop.permute.xlu0 %2878
  %2880 = vrot.lane.b32.xlu0 %v2790, 32
  %v2881 = vpop.permute.xlu0 %2880
  %2884 = vrot.lane.b32.xlu0 %v2787, 32
  %v2885 = vpop.permute.xlu0 %2884
  %2886 = vrot.lane.b32.xlu0 %v2789, 32
  %v2887 = vpop.permute.xlu0 %2886
  %v2888 = vsel %vm1143, %v2885, %v2879
  %v2889 = vsel %vm1143, %v2887, %v2881
  %v2894 = vsel %vm1143, %v2879, %v2885
  %v2895 = vsel %vm1143, %v2881, %v2887
  %v2896 = vmul.f32 %v2894, %v1153
  %v2897 = vmul.f32 %v2888, %v1154
  %v2898 = vmul.f32 %v2895, %v1153
  %v2899 = vmul.f32 %v2889, %v1154
  %2900 = vset.pattern.permute.xlu0 4
  %2901 = vperm.xlu0 %2900, %v25
  %v2902 = vpop.permute.xlu0 %2901
  %v2904 = vperm.slane %v2896, 0
  %v2905 = vperm.slane %v2897, 0
  %v2906 = vperm.slane %v2898, 0
  %v2907 = vperm.slane %v2899, 0
  %v2908 = vmul.f32 %v2902, %v2904
  %v2909 = vmul.f32 %v2902, %v2905
  %v2910 = vmul.f32 %v2902, %v2906
  %v2911 = vmul.f32 %v2902, %v2907
  %v2912 = vadd.f32 %v2874, %v2908
  %v2913 = vadd.f32 %v2875, %v2909
  %v2914 = vadd.f32 %v2876, %v2910
  %v2915 = vadd.f32 %v2877, %v2911
  %2916 = vset.pattern.permute.xlu0 5
  %2917 = vperm.xlu0 %2916, %v25
  %v2918 = vpop.permute.xlu0 %2917
  %v2920 = vperm.slane %v2896, 1
  %v2921 = vperm.slane %v2897, 1
  %v2922 = vperm.slane %v2898, 1
  %v2923 = vperm.slane %v2899, 1
  %v2924 = vmul.f32 %v2918, %v2920
  %v2925 = vmul.f32 %v2918, %v2921
  %v2926 = vmul.f32 %v2918, %v2922
  %v2927 = vmul.f32 %v2918, %v2923
  %v2928 = vadd.f32 %v2912, %v2924
  %v2929 = vadd.f32 %v2913, %v2925
  %v2930 = vadd.f32 %v2914, %v2926
  %v2931 = vadd.f32 %v2915, %v2927
  %2932 = vset.pattern.permute.xlu0 6
  %2933 = vperm.xlu0 %2932, %v25
  %v2934 = vpop.permute.xlu0 %2933
  %v2936 = vperm.slane %v2896, 2
  %v2937 = vperm.slane %v2897, 2
  %v2938 = vperm.slane %v2898, 2
  %v2939 = vperm.slane %v2899, 2
  %v2940 = vmul.f32 %v2934, %v2936
  %v2941 = vmul.f32 %v2934, %v2937
  %v2942 = vmul.f32 %v2934, %v2938
  %v2943 = vmul.f32 %v2934, %v2939
  %v2944 = vadd.f32 %v2928, %v2940
  %v2945 = vadd.f32 %v2929, %v2941
  %v2946 = vadd.f32 %v2930, %v2942
  %v2947 = vadd.f32 %v2931, %v2943
  %2948 = vset.pattern.permute.xlu0 7
  %2949 = vperm.xlu0 %2948, %v25
  %v2950 = vpop.permute.xlu0 %2949
  %v2952 = vperm.slane %v2896, 3
  %v2953 = vperm.slane %v2897, 3
  %v2954 = vperm.slane %v2898, 3
  %v2955 = vperm.slane %v2899, 3
  %v2956 = vmul.f32 %v2950, %v2952
  %v2957 = vmul.f32 %v2950, %v2953
  %v2958 = vmul.f32 %v2950, %v2954
  %v2959 = vmul.f32 %v2950, %v2955
  %v2960 = vadd.f32 %v2944, %v2956
  %v2961 = vadd.f32 %v2945, %v2957
  %v2962 = vadd.f32 %v2946, %v2958
  %v2963 = vadd.f32 %v2947, %v2959
  %2964 = vrot.lane.b32.xlu0 %v2788, 30
  %v2965 = vpop.permute.xlu0 %2964
  %2966 = vrot.lane.b32.xlu0 %v2790, 30
  %v2967 = vpop.permute.xlu0 %2966
  %2970 = vrot.lane.b32.xlu0 %v2787, 30
  %v2971 = vpop.permute.xlu0 %2970
  %2972 = vrot.lane.b32.xlu0 %v2789, 30
  %v2973 = vpop.permute.xlu0 %2972
  %v2974 = vsel %vm1235, %v2971, %v2965
  %v2975 = vsel %vm1235, %v2973, %v2967
  %v2980 = vsel %vm1235, %v2965, %v2971
  %v2981 = vsel %vm1235, %v2967, %v2973
  %v2982 = vmul.f32 %v2980, %v1245
  %v2983 = vmul.f32 %v2974, %v1246
  %v2984 = vmul.f32 %v2981, %v1245
  %v2985 = vmul.f32 %v2975, %v1246
  %2986 = vset.pattern.permute.xlu0 8
  %2987 = vperm.xlu0 %2986, %v25
  %v2988 = vpop.permute.xlu0 %2987
  %v2990 = vperm.slane %v2982, 0
  %v2991 = vperm.slane %v2983, 0
  %v2992 = vperm.slane %v2984, 0
  %v2993 = vperm.slane %v2985, 0
  %v2994 = vmul.f32 %v2988, %v2990
  %v2995 = vmul.f32 %v2988, %v2991
  %v2996 = vmul.f32 %v2988, %v2992
  %v2997 = vmul.f32 %v2988, %v2993
  %v2998 = vadd.f32 %v2960, %v2994
  %v2999 = vadd.f32 %v2961, %v2995
  %v3000 = vadd.f32 %v2962, %v2996
  %v3001 = vadd.f32 %v2963, %v2997
  %3002 = vset.pattern.permute.xlu0 9
  %3003 = vperm.xlu0 %3002, %v25
  %v3004 = vpop.permute.xlu0 %3003
  %v3006 = vperm.slane %v2982, 1
  %v3007 = vperm.slane %v2983, 1
  %v3008 = vperm.slane %v2984, 1
  %v3009 = vperm.slane %v2985, 1
  %v3010 = vmul.f32 %v3004, %v3006
  %v3011 = vmul.f32 %v3004, %v3007
  %v3012 = vmul.f32 %v3004, %v3008
  %v3013 = vmul.f32 %v3004, %v3009
  %v3014 = vadd.f32 %v2998, %v3010
  %v3015 = vadd.f32 %v2999, %v3011
  %v3016 = vadd.f32 %v3000, %v3012
  %v3017 = vadd.f32 %v3001, %v3013
  %3018 = vset.pattern.permute.xlu0 10
  %3019 = vperm.xlu0 %3018, %v25
  %v3020 = vpop.permute.xlu0 %3019
  %v3022 = vperm.slane %v2982, 2
  %v3023 = vperm.slane %v2983, 2
  %v3024 = vperm.slane %v2984, 2
  %v3025 = vperm.slane %v2985, 2
  %v3026 = vmul.f32 %v3020, %v3022
  %v3027 = vmul.f32 %v3020, %v3023
  %v3028 = vmul.f32 %v3020, %v3024
  %v3029 = vmul.f32 %v3020, %v3025
  %v3030 = vadd.f32 %v3014, %v3026
  %v3031 = vadd.f32 %v3015, %v3027
  %v3032 = vadd.f32 %v3016, %v3028
  %v3033 = vadd.f32 %v3017, %v3029
  %3034 = vset.pattern.permute.xlu0 11
  %3035 = vperm.xlu0 %3034, %v25
  %v3036 = vpop.permute.xlu0 %3035
  %v3038 = vperm.slane %v2982, 3
  %v3039 = vperm.slane %v2983, 3
  %v3040 = vperm.slane %v2984, 3
  %v3041 = vperm.slane %v2985, 3
  %v3042 = vmul.f32 %v3036, %v3038
  %v3043 = vmul.f32 %v3036, %v3039
  %v3044 = vmul.f32 %v3036, %v3040
  %v3045 = vmul.f32 %v3036, %v3041
  %v3046 = vadd.f32 %v3030, %v3042
  %v3047 = vadd.f32 %v3031, %v3043
  %v3048 = vadd.f32 %v3032, %v3044
  %v3049 = vadd.f32 %v3033, %v3045
  %3050 = vrot.lane.b32.xlu0 %v2788, 2
  %v3051 = vpop.permute.xlu0 %3050
  %3052 = vrot.lane.b32.xlu0 %v2790, 2
  %v3053 = vpop.permute.xlu0 %3052
  %3056 = vrot.lane.b32.xlu0 %v2787, 2
  %v3057 = vpop.permute.xlu0 %3056
  %3058 = vrot.lane.b32.xlu0 %v2789, 2
  %v3059 = vpop.permute.xlu0 %3058
  %v3060 = vsel %vm1327, %v3057, %v3051
  %v3061 = vsel %vm1327, %v3059, %v3053
  %v3066 = vsel %vm1327, %v3051, %v3057
  %v3067 = vsel %vm1327, %v3053, %v3059
  %v3068 = vmul.f32 %v3066, %v1337
  %v3069 = vmul.f32 %v3060, %v1338
  %v3070 = vmul.f32 %v3067, %v1337
  %v3071 = vmul.f32 %v3061, %v1338
  %3072 = vset.pattern.permute.xlu0 12
  %3073 = vperm.xlu0 %3072, %v25
  %v3074 = vpop.permute.xlu0 %3073
  %v3076 = vperm.slane %v3068, 0
  %v3077 = vperm.slane %v3069, 0
  %v3078 = vperm.slane %v3070, 0
  %v3079 = vperm.slane %v3071, 0
  %v3080 = vmul.f32 %v3074, %v3076
  %v3081 = vmul.f32 %v3074, %v3077
  %v3082 = vmul.f32 %v3074, %v3078
  %v3083 = vmul.f32 %v3074, %v3079
  %v3084 = vadd.f32 %v3046, %v3080
  %v3085 = vadd.f32 %v3047, %v3081
  %v3086 = vadd.f32 %v3048, %v3082
  %v3087 = vadd.f32 %v3049, %v3083
  %3088 = vset.pattern.permute.xlu0 13
  %3089 = vperm.xlu0 %3088, %v25
  %v3090 = vpop.permute.xlu0 %3089
  %v3092 = vperm.slane %v3068, 1
  %v3093 = vperm.slane %v3069, 1
  %v3094 = vperm.slane %v3070, 1
  %v3095 = vperm.slane %v3071, 1
  %v3096 = vmul.f32 %v3090, %v3092
  %v3097 = vmul.f32 %v3090, %v3093
  %v3098 = vmul.f32 %v3090, %v3094
  %v3099 = vmul.f32 %v3090, %v3095
  %v3100 = vadd.f32 %v3084, %v3096
  %v3101 = vadd.f32 %v3085, %v3097
  %v3102 = vadd.f32 %v3086, %v3098
  %v3103 = vadd.f32 %v3087, %v3099
  %3104 = vset.pattern.permute.xlu0 14
  %3105 = vperm.xlu0 %3104, %v25
  %v3106 = vpop.permute.xlu0 %3105
  %v3108 = vperm.slane %v3068, 2
  %v3109 = vperm.slane %v3069, 2
  %v3110 = vperm.slane %v3070, 2
  %v3111 = vperm.slane %v3071, 2
  %v3112 = vmul.f32 %v3106, %v3108
  %v3113 = vmul.f32 %v3106, %v3109
  %v3114 = vmul.f32 %v3106, %v3110
  %v3115 = vmul.f32 %v3106, %v3111
  %v3116 = vadd.f32 %v3100, %v3112
  %v3117 = vadd.f32 %v3101, %v3113
  %v3118 = vadd.f32 %v3102, %v3114
  %v3119 = vadd.f32 %v3103, %v3115
  %3120 = vset.pattern.permute.xlu0 15
  %3121 = vperm.xlu0 %3120, %v25
  %v3122 = vpop.permute.xlu0 %3121
  %v3124 = vperm.slane %v3068, 3
  %v3125 = vperm.slane %v3069, 3
  %v3126 = vperm.slane %v3070, 3
  %v3127 = vperm.slane %v3071, 3
  %v3128 = vmul.f32 %v3122, %v3124
  %v3129 = vmul.f32 %v3122, %v3125
  %v3130 = vmul.f32 %v3122, %v3126
  %v3131 = vmul.f32 %v3122, %v3127
  %v3132 = vadd.f32 %v3116, %v3128
  %v3133 = vadd.f32 %v3117, %v3129
  %v3134 = vadd.f32 %v3118, %v3130
  %v3135 = vadd.f32 %v3119, %v3131
  %3136 = vset.pattern.permute.xlu0 16
  %3137 = vperm.xlu0 %3136, %v25
  %v3138 = vpop.permute.xlu0 %3137
  %v3140 = vperm.slane %v2787, 0
  %v3141 = vperm.slane %v2788, 0
  %v3142 = vperm.slane %v2789, 0
  %v3143 = vperm.slane %v2790, 0
  %v3144 = vmul.f32 %v3138, %v3140
  %v3145 = vmul.f32 %v3138, %v3141
  %v3146 = vmul.f32 %v3138, %v3142
  %v3147 = vmul.f32 %v3138, %v3143
  %v3148 = vadd.f32 %v3132, %v3144
  %v3149 = vadd.f32 %v3133, %v3145
  %v3150 = vadd.f32 %v3134, %v3146
  %v3151 = vadd.f32 %v3135, %v3147
  %3152 = vset.pattern.permute.xlu0 17
  %3153 = vperm.xlu0 %3152, %v25
  %v3154 = vpop.permute.xlu0 %3153
  %v3156 = vperm.slane %v2787, 1
  %v3157 = vperm.slane %v2788, 1
  %v3158 = vperm.slane %v2789, 1
  %v3159 = vperm.slane %v2790, 1
  %v3160 = vmul.f32 %v3154, %v3156
  %v3161 = vmul.f32 %v3154, %v3157
  %v3162 = vmul.f32 %v3154, %v3158
  %v3163 = vmul.f32 %v3154, %v3159
  %v3164 = vadd.f32 %v3148, %v3160
  %v3165 = vadd.f32 %v3149, %v3161
  %v3166 = vadd.f32 %v3150, %v3162
  %v3167 = vadd.f32 %v3151, %v3163
  %3168 = vset.pattern.permute.xlu0 18
  %3169 = vperm.xlu0 %3168, %v25
  %v3170 = vpop.permute.xlu0 %3169
  %v3172 = vperm.slane %v2787, 2
  %v3173 = vperm.slane %v2788, 2
  %v3174 = vperm.slane %v2789, 2
  %v3175 = vperm.slane %v2790, 2
  %v3176 = vmul.f32 %v3170, %v3172
  %v3177 = vmul.f32 %v3170, %v3173
  %v3178 = vmul.f32 %v3170, %v3174
  %v3179 = vmul.f32 %v3170, %v3175
  %v3180 = vadd.f32 %v3164, %v3176
  %v3181 = vadd.f32 %v3165, %v3177
  %v3182 = vadd.f32 %v3166, %v3178
  %v3183 = vadd.f32 %v3167, %v3179
  %3184 = vset.pattern.permute.xlu0 19
  %3185 = vperm.xlu0 %3184, %v25
  %v3186 = vpop.permute.xlu0 %3185
  %v3188 = vperm.slane %v2787, 3
  %v3189 = vperm.slane %v2788, 3
  %v3190 = vperm.slane %v2789, 3
  %v3191 = vperm.slane %v2790, 3
  %v3192 = vmul.f32 %v3186, %v3188
  %v3193 = vmul.f32 %v3186, %v3189
  %v3194 = vmul.f32 %v3186, %v3190
  %v3195 = vmul.f32 %v3186, %v3191
  %v3196 = vadd.f32 %v3180, %v3192
  %v3197 = vadd.f32 %v3181, %v3193
  %v3198 = vadd.f32 %v3182, %v3194
  %v3199 = vadd.f32 %v3183, %v3195
  %3200 = vrot.lane.b32.xlu0 %v2787, 126
  %v3201 = vpop.permute.xlu0 %3200
  %3202 = vrot.lane.b32.xlu0 %v2788, 126
  %v3203 = vpop.permute.xlu0 %3202
  %3204 = vrot.lane.b32.xlu0 %v2789, 126
  %v3205 = vpop.permute.xlu0 %3204
  %3206 = vrot.lane.b32.xlu0 %v2790, 126
  %v3207 = vpop.permute.xlu0 %3206
  %v3208 = vsel %vm1481, %v3201, %v3203
  %v3209 = vsel %vm1481, %v3205, %v3207
  %v3216 = vsel %vm1481, %v3203, %v3201
  %v3217 = vsel %vm1481, %v3207, %v3205
  %v3218 = vmul.f32 %v3208, %v1493
  %v3219 = vmul.f32 %v3216, %v1494
  %v3220 = vmul.f32 %v3209, %v1493
  %v3221 = vmul.f32 %v3217, %v1494
  %3222 = vset.pattern.permute.xlu0 20
  %3223 = vperm.xlu0 %3222, %v25
  %v3224 = vpop.permute.xlu0 %3223
  %v3226 = vperm.slane %v3218, 0
  %v3227 = vperm.slane %v3219, 0
  %v3228 = vperm.slane %v3220, 0
  %v3229 = vperm.slane %v3221, 0
  %v3230 = vmul.f32 %v3224, %v3226
  %v3231 = vmul.f32 %v3224, %v3227
  %v3232 = vmul.f32 %v3224, %v3228
  %v3233 = vmul.f32 %v3224, %v3229
  %v3234 = vadd.f32 %v3196, %v3230
  %v3235 = vadd.f32 %v3197, %v3231
  %v3236 = vadd.f32 %v3198, %v3232
  %v3237 = vadd.f32 %v3199, %v3233
  %3238 = vset.pattern.permute.xlu0 21
  %3239 = vperm.xlu0 %3238, %v25
  %v3240 = vpop.permute.xlu0 %3239
  %v3242 = vperm.slane %v3218, 1
  %v3243 = vperm.slane %v3219, 1
  %v3244 = vperm.slane %v3220, 1
  %v3245 = vperm.slane %v3221, 1
  %v3246 = vmul.f32 %v3240, %v3242
  %v3247 = vmul.f32 %v3240, %v3243
  %v3248 = vmul.f32 %v3240, %v3244
  %v3249 = vmul.f32 %v3240, %v3245
  %v3250 = vadd.f32 %v3234, %v3246
  %v3251 = vadd.f32 %v3235, %v3247
  %v3252 = vadd.f32 %v3236, %v3248
  %v3253 = vadd.f32 %v3237, %v3249
  %3254 = vset.pattern.permute.xlu0 22
  %3255 = vperm.xlu0 %3254, %v25
  %v3256 = vpop.permute.xlu0 %3255
  %v3258 = vperm.slane %v3218, 2
  %v3259 = vperm.slane %v3219, 2
  %v3260 = vperm.slane %v3220, 2
  %v3261 = vperm.slane %v3221, 2
  %v3262 = vmul.f32 %v3256, %v3258
  %v3263 = vmul.f32 %v3256, %v3259
  %v3264 = vmul.f32 %v3256, %v3260
  %v3265 = vmul.f32 %v3256, %v3261
  %v3266 = vadd.f32 %v3250, %v3262
  %v3267 = vadd.f32 %v3251, %v3263
  %v3268 = vadd.f32 %v3252, %v3264
  %v3269 = vadd.f32 %v3253, %v3265
  %3270 = vset.pattern.permute.xlu0 23
  %3271 = vperm.xlu0 %3270, %v25
  %v3272 = vpop.permute.xlu0 %3271
  %v3274 = vperm.slane %v3218, 3
  %v3275 = vperm.slane %v3219, 3
  %v3276 = vperm.slane %v3220, 3
  %v3277 = vperm.slane %v3221, 3
  %v3278 = vmul.f32 %v3272, %v3274
  %v3279 = vmul.f32 %v3272, %v3275
  %v3280 = vmul.f32 %v3272, %v3276
  %v3281 = vmul.f32 %v3272, %v3277
  %v3282 = vadd.f32 %v3266, %v3278
  %v3283 = vadd.f32 %v3267, %v3279
  %v3284 = vadd.f32 %v3268, %v3280
  %v3285 = vadd.f32 %v3269, %v3281
  %3286 = vrot.lane.b32.xlu0 %v2787, 98
  %v3287 = vpop.permute.xlu0 %3286
  %3288 = vrot.lane.b32.xlu0 %v2788, 98
  %v3289 = vpop.permute.xlu0 %3288
  %3290 = vrot.lane.b32.xlu0 %v2789, 98
  %v3291 = vpop.permute.xlu0 %3290
  %3292 = vrot.lane.b32.xlu0 %v2790, 98
  %v3293 = vpop.permute.xlu0 %3292
  %v3294 = vsel %vm1573, %v3287, %v3289
  %v3295 = vsel %vm1573, %v3291, %v3293
  %v3302 = vsel %vm1573, %v3289, %v3287
  %v3303 = vsel %vm1573, %v3293, %v3291
  %v3304 = vmul.f32 %v3294, %v1585
  %v3305 = vmul.f32 %v3302, %v1586
  %v3306 = vmul.f32 %v3295, %v1585
  %v3307 = vmul.f32 %v3303, %v1586
  %3308 = vset.pattern.permute.xlu0 24
  %3309 = vperm.xlu0 %3308, %v25
  %v3310 = vpop.permute.xlu0 %3309
  %v3312 = vperm.slane %v3304, 0
  %v3313 = vperm.slane %v3305, 0
  %v3314 = vperm.slane %v3306, 0
  %v3315 = vperm.slane %v3307, 0
  %v3316 = vmul.f32 %v3310, %v3312
  %v3317 = vmul.f32 %v3310, %v3313
  %v3318 = vmul.f32 %v3310, %v3314
  %v3319 = vmul.f32 %v3310, %v3315
  %v3320 = vadd.f32 %v3282, %v3316
  %v3321 = vadd.f32 %v3283, %v3317
  %v3322 = vadd.f32 %v3284, %v3318
  %v3323 = vadd.f32 %v3285, %v3319
  %3324 = vset.pattern.permute.xlu0 25
  %3325 = vperm.xlu0 %3324, %v25
  %v3326 = vpop.permute.xlu0 %3325
  %v3328 = vperm.slane %v3304, 1
  %v3329 = vperm.slane %v3305, 1
  %v3330 = vperm.slane %v3306, 1
  %v3331 = vperm.slane %v3307, 1
  %v3332 = vmul.f32 %v3326, %v3328
  %v3333 = vmul.f32 %v3326, %v3329
  %v3334 = vmul.f32 %v3326, %v3330
  %v3335 = vmul.f32 %v3326, %v3331
  %v3336 = vadd.f32 %v3320, %v3332
  %v3337 = vadd.f32 %v3321, %v3333
  %v3338 = vadd.f32 %v3322, %v3334
  %v3339 = vadd.f32 %v3323, %v3335
  %3340 = vset.pattern.permute.xlu0 26
  %3341 = vperm.xlu0 %3340, %v25
  %v3342 = vpop.permute.xlu0 %3341
  %v3344 = vperm.slane %v3304, 2
  %v3345 = vperm.slane %v3305, 2
  %v3346 = vperm.slane %v3306, 2
  %v3347 = vperm.slane %v3307, 2
  %v3348 = vmul.f32 %v3342, %v3344
  %v3349 = vmul.f32 %v3342, %v3345
  %v3350 = vmul.f32 %v3342, %v3346
  %v3351 = vmul.f32 %v3342, %v3347
  %v3352 = vadd.f32 %v3336, %v3348
  %v3353 = vadd.f32 %v3337, %v3349
  %v3354 = vadd.f32 %v3338, %v3350
  %v3355 = vadd.f32 %v3339, %v3351
  %3356 = vset.pattern.permute.xlu0 27
  %3357 = vperm.xlu0 %3356, %v25
  %v3358 = vpop.permute.xlu0 %3357
  %v3360 = vperm.slane %v3304, 3
  %v3361 = vperm.slane %v3305, 3
  %v3362 = vperm.slane %v3306, 3
  %v3363 = vperm.slane %v3307, 3
  %v3364 = vmul.f32 %v3358, %v3360
  %v3365 = vmul.f32 %v3358, %v3361
  %v3366 = vmul.f32 %v3358, %v3362
  %v3367 = vmul.f32 %v3358, %v3363
  %v3368 = vadd.f32 %v3352, %v3364
  %v3369 = vadd.f32 %v3353, %v3365
  %v3370 = vadd.f32 %v3354, %v3366
  %v3371 = vadd.f32 %v3355, %v3367
  %3372 = vrot.lane.b32.xlu0 %v2787, 96
  %v3373 = vpop.permute.xlu0 %3372
  %3374 = vrot.lane.b32.xlu0 %v2788, 96
  %v3375 = vpop.permute.xlu0 %3374
  %3376 = vrot.lane.b32.xlu0 %v2789, 96
  %v3377 = vpop.permute.xlu0 %3376
  %3378 = vrot.lane.b32.xlu0 %v2790, 96
  %v3379 = vpop.permute.xlu0 %3378
  %v3380 = vsel %vm1665, %v3373, %v3375
  %v3381 = vsel %vm1665, %v3377, %v3379
  %v3388 = vsel %vm1665, %v3375, %v3373
  %v3389 = vsel %vm1665, %v3379, %v3377
  %v3390 = vmul.f32 %v3380, %v1677
  %v3391 = vmul.f32 %v3388, %v1678
  %v3392 = vmul.f32 %v3381, %v1677
  %v3393 = vmul.f32 %v3389, %v1678
  %3394 = vset.pattern.permute.xlu0 28
  %3395 = vperm.xlu0 %3394, %v25
  %v3396 = vpop.permute.xlu0 %3395
  %v3398 = vperm.slane %v3390, 0
  %v3399 = vperm.slane %v3391, 0
  %v3400 = vperm.slane %v3392, 0
  %v3401 = vperm.slane %v3393, 0
  %v3402 = vmul.f32 %v3396, %v3398
  %v3403 = vmul.f32 %v3396, %v3399
  %v3404 = vmul.f32 %v3396, %v3400
  %v3405 = vmul.f32 %v3396, %v3401
  %v3406 = vadd.f32 %v3368, %v3402
  %v3407 = vadd.f32 %v3369, %v3403
  %v3408 = vadd.f32 %v3370, %v3404
  %v3409 = vadd.f32 %v3371, %v3405
  %3410 = vset.pattern.permute.xlu0 29
  %3411 = vperm.xlu0 %3410, %v25
  %v3412 = vpop.permute.xlu0 %3411
  %v3414 = vperm.slane %v3390, 1
  %v3415 = vperm.slane %v3391, 1
  %v3416 = vperm.slane %v3392, 1
  %v3417 = vperm.slane %v3393, 1
  %v3418 = vmul.f32 %v3412, %v3414
  %v3419 = vmul.f32 %v3412, %v3415
  %v3420 = vmul.f32 %v3412, %v3416
  %v3421 = vmul.f32 %v3412, %v3417
  %v3422 = vadd.f32 %v3406, %v3418
  %v3423 = vadd.f32 %v3407, %v3419
  %v3424 = vadd.f32 %v3408, %v3420
  %v3425 = vadd.f32 %v3409, %v3421
  %3426 = vset.pattern.permute.xlu0 30
  %3427 = vperm.xlu0 %3426, %v25
  %v3428 = vpop.permute.xlu0 %3427
  %v3430 = vperm.slane %v3390, 2
  %v3431 = vperm.slane %v3391, 2
  %v3432 = vperm.slane %v3392, 2
  %v3433 = vperm.slane %v3393, 2
  %v3434 = vmul.f32 %v3428, %v3430
  %v3435 = vmul.f32 %v3428, %v3431
  %v3436 = vmul.f32 %v3428, %v3432
  %v3437 = vmul.f32 %v3428, %v3433
  %v3438 = vadd.f32 %v3422, %v3434
  %v3439 = vadd.f32 %v3423, %v3435
  %v3440 = vadd.f32 %v3424, %v3436
  %v3441 = vadd.f32 %v3425, %v3437
  %3442 = vset.pattern.permute.xlu0 31
  %3443 = vperm.xlu0 %3442, %v25
  %v3444 = vpop.permute.xlu0 %3443
  %v3446 = vperm.slane %v3390, 3
  %v3447 = vperm.slane %v3391, 3
  %v3448 = vperm.slane %v3392, 3
  %v3449 = vperm.slane %v3393, 3
  %v3450 = vmul.f32 %v3444, %v3446
  %v3451 = vmul.f32 %v3444, %v3447
  %v3452 = vmul.f32 %v3444, %v3448
  %v3453 = vmul.f32 %v3444, %v3449
  %v3454 = vadd.f32 %v3438, %v3450
  %v3455 = vadd.f32 %v3439, %v3451
  %v3456 = vadd.f32 %v3440, %v3452
  %v3457 = vadd.f32 %v3441, %v3453
  %3458 = vrot.lane.b32.xlu0 %v2787, 94
  %v3459 = vpop.permute.xlu0 %3458
  %3460 = vrot.lane.b32.xlu0 %v2788, 94
  %v3461 = vpop.permute.xlu0 %3460
  %3462 = vrot.lane.b32.xlu0 %v2789, 94
  %v3463 = vpop.permute.xlu0 %3462
  %3464 = vrot.lane.b32.xlu0 %v2790, 94
  %v3465 = vpop.permute.xlu0 %3464
  %v3466 = vsel %vm1757, %v3459, %v3461
  %v3467 = vsel %vm1757, %v3463, %v3465
  %v3474 = vsel %vm1757, %v3461, %v3459
  %v3475 = vsel %vm1757, %v3465, %v3463
  %v3476 = vmul.f32 %v3466, %v1769
  %v3477 = vmul.f32 %v3474, %v1770
  %v3478 = vmul.f32 %v3467, %v1769
  %v3479 = vmul.f32 %v3475, %v1770
  %3480 = vset.pattern.permute.xlu0 32
  %3481 = vperm.xlu0 %3480, %v25
  %v3482 = vpop.permute.xlu0 %3481
  %v3484 = vperm.slane %v3476, 0
  %v3485 = vperm.slane %v3477, 0
  %v3486 = vperm.slane %v3478, 0
  %v3487 = vperm.slane %v3479, 0
  %v3488 = vmul.f32 %v3482, %v3484
  %v3489 = vmul.f32 %v3482, %v3485
  %v3490 = vmul.f32 %v3482, %v3486
  %v3491 = vmul.f32 %v3482, %v3487
  %v3492 = vadd.f32 %v3454, %v3488
  %v3493 = vadd.f32 %v3455, %v3489
  %v3494 = vadd.f32 %v3456, %v3490
  %v3495 = vadd.f32 %v3457, %v3491
  %3496 = vset.pattern.permute.xlu0 33
  %3497 = vperm.xlu0 %3496, %v25
  %v3498 = vpop.permute.xlu0 %3497
  %v3500 = vperm.slane %v3476, 1
  %v3501 = vperm.slane %v3477, 1
  %v3502 = vperm.slane %v3478, 1
  %v3503 = vperm.slane %v3479, 1
  %v3504 = vmul.f32 %v3498, %v3500
  %v3505 = vmul.f32 %v3498, %v3501
  %v3506 = vmul.f32 %v3498, %v3502
  %v3507 = vmul.f32 %v3498, %v3503
  %v3508 = vadd.f32 %v3492, %v3504
  %v3509 = vadd.f32 %v3493, %v3505
  %v3510 = vadd.f32 %v3494, %v3506
  %v3511 = vadd.f32 %v3495, %v3507
  %3512 = vset.pattern.permute.xlu0 34
  %3513 = vperm.xlu0 %3512, %v25
  %v3514 = vpop.permute.xlu0 %3513
  %v3516 = vperm.slane %v3476, 2
  %v3517 = vperm.slane %v3477, 2
  %v3518 = vperm.slane %v3478, 2
  %v3519 = vperm.slane %v3479, 2
  %v3520 = vmul.f32 %v3514, %v3516
  %v3521 = vmul.f32 %v3514, %v3517
  %v3522 = vmul.f32 %v3514, %v3518
  %v3523 = vmul.f32 %v3514, %v3519
  %v3524 = vadd.f32 %v3508, %v3520
  %v3525 = vadd.f32 %v3509, %v3521
  %v3526 = vadd.f32 %v3510, %v3522
  %v3527 = vadd.f32 %v3511, %v3523
  %3528 = vset.pattern.permute.xlu0 35
  %3529 = vperm.xlu0 %3528, %v25
  %v3530 = vpop.permute.xlu0 %3529
  %v3532 = vperm.slane %v3476, 3
  %v3533 = vperm.slane %v3477, 3
  %v3534 = vperm.slane %v3478, 3
  %v3535 = vperm.slane %v3479, 3
  %v3536 = vmul.f32 %v3530, %v3532
  %v3537 = vmul.f32 %v3530, %v3533
  %v3538 = vmul.f32 %v3530, %v3534
  %v3539 = vmul.f32 %v3530, %v3535
  %v3540 = vadd.f32 %v3524, %v3536
  %v3541 = vadd.f32 %v3525, %v3537
  %v3542 = vadd.f32 %v3526, %v3538
  %v3543 = vadd.f32 %v3527, %v3539
  %3545 = vset.pattern.permute.xlu0 0
  %3546 = vperm.xlu0 %3545, %v32
  %v3547 = vpop.permute.xlu0 %3546
  %v3549 = vadd.f32 %v3540, %v3547
  %v3550 = vadd.f32 %v3541, %v3547
  %v3551 = vadd.f32 %v3542, %v3547
  %v3552 = vadd.f32 %v3543, %v3547
  %v3557 = vrot.slane %v3550, 4
  %v3558 = vrot.slane %v3552, 4
  %v3559 = vsel %vm1856, %v3549, %v3557
  %v3560 = vsel %vm1856, %v3551, %v3558
  %v3563 = vadd.f32 %v1861, %v3559
  %v3564 = vadd.f32 %v1862, %v3560
  %v3565 = vadd.f32 %v3563, %v17
  %v3566 = vadd.f32 %v3564, %v18
  %3567 = vst [vmem:[%s4] sm:$0xff] %v3565
  %3568 = vst [vmem:[%s4 + $0x8] sm:$0xff] %v3566
  // Predicated region
  $region18: #{resnet_block_forward.1} parent=0 // pred_check
    _
  $region19: #{resnet_block_forward.1} parent=0 // pred_check_branch
    %3570 = sbr.rel (0) target = $region21
  $region20: #{resnet_block_forward.1} parent=0 // pred_region
    _
  $region21: #{resnet_block_forward.1} parent=0 // pred_fallthru
    _
  // Predicated region
  $region22: #{resnet_block_forward.1} parent=0 // pred_check
    _
  $region23: #{resnet_block_forward.1} parent=0 // pred_check_branch
    %3572 = sbr.rel (0) target = $region25
  $region24: #{resnet_block_forward.1} parent=0 // pred_region
    _
  $region25: #{resnet_block_forward.1} parent=0 // pred_fallthru
    _

</llo_original>
